<compile_context>
chip_gen: v7x
topology: tpu7x:2x2x1
jax: 0.10.0
libtpu: 0.0.40
codegen_flags: <defaults>
</compile_context>

<pallas_src>
import functools
import math

import jax
import jax.numpy as jnp
import numpy as np
from jax import lax
from jax.experimental import pallas as pl
from jax.experimental.pallas import tpu as pltpu

LN_EPS = 1e-5      # nn.LayerNorm default eps
NEG_BIG = -1e9     # key-padding bias; exp() underflows to exactly 0 in f32


def _layer_norm(x, gamma, beta):
    """LayerNorm over the last (embed) axis, PyTorch semantics (biased var)."""
    mu = jnp.mean(x, axis=-1, keepdims=True)
    xc = x - mu
    var = jnp.mean(xc * xc, axis=-1, keepdims=True)
    return xc * lax.rsqrt(var + LN_EPS) * gamma + beta   # rsqrt -> EUP slot


def _depthwise_conv_rolled(x, edge_ok, w_ref, b_ref):
    """'Same'-length depthwise conv over the sequence axis of an (L, C) slab.

    out[r, c] = b[c] + sum_k w[k, c] * x[r + k - pad, c]   (zero outside [0, L))

    Each tap is a static pltpu.roll (XLU slot, otherwise idle) with a
    precomputed edge mask selecting in-range rows.  pltpu.roll requires a
    non-negative shift, so offset s uses the cyclic-equivalent shift (-s) % L.
    """
    K = w_ref.shape[0]
    pad = (K - 1) // 2
    n_rows = x.shape[0]
    acc = None
    for k in range(K):                      # static unroll over taps (K small)
        s = k - pad                         # tap k reads x[r + s]
        if s == 0:
            term = x * w_ref[k:k + 1, :]
        else:
            rolled = pltpu.roll(x, shift=(-s) % n_rows, axis=0)  # rolled[r] = x[(r+s)%L]
            term = jnp.where(edge_ok[s], rolled, 0.0) * w_ref[k:k + 1, :]
        acc = term if acc is None else acc + term
    return acc + b_ref[...]


def fft_block_kernel(x_ref, kmask_ref, rmask_ref,
                     wqkv_ref, bqkv_ref, wo_ref, bo_ref,
                     ln1_g_ref, ln1_b_ref,
                     dw1_ref, dwb1_ref, pw1_ref, pwb1_ref,
                     dw2_ref, dwb2_ref, pw2_ref, pwb2_ref,
                     ln2_g_ref, ln2_b_ref,
                     out_ref, *, num_heads, compute_dtype):
    L, E = x_ref.shape
    H = num_heads
    Dh = E // H
    cdt = compute_dtype
    approx = jnp.dtype(cdt) == jnp.dtype(jnp.bfloat16)   # approx recip only in bf16 path

    x2 = x_ref[...]                                      # (L, E) f32
    neg_bias = kmask_ref[...] * NEG_BIG                  # (1, L) key-padding bias (f32)
    padded_row = rmask_ref[...] > 0.5                    # (L, 1) True at padded rows

    # ---- Multi-head self-attention (eval mode: dropout = identity) ----------
    # Fused q|k|v in-projection; columns were pre-permuted head-major in the
    # wrapper so head h owns the contiguous lane window [h*3Dh, (h+1)*3Dh).
    qkv = jnp.dot(x2.astype(cdt), wqkv_ref[...],
                  preferred_element_type=jnp.float32) + bqkv_ref[...]   # (L, 3E) f32
    scale = 1.0 / math.sqrt(Dh)

    # TODO(synk): at production H/L run this as lax.fori_loop (or a grid axis)
    # writing into a (L, E) ctx scratch so only one head's (L, L) scores is live.
    ctx_heads = []
    for h in range(H):                                   # static unroll, H is small
        base = h * 3 * Dh
        qh = qkv[:, base:base + Dh].astype(cdt)
        kh = qkv[:, base + Dh:base + 2 * Dh].astype(cdt)
        vh = qkv[:, base + 2 * Dh:base + 3 * Dh].astype(cdt)

        # scores / softmax stay f32; the -1e9 bias is added to the f32 MXU result.
        scores = lax.dot_general(qh, kh, (((1,), (1,)), ((), ())),
                                 preferred_element_type=jnp.float32) * scale + neg_bias
        m = jnp.max(scores, axis=-1, keepdims=True)
        p = jnp.exp(scores - m)
        inv_den = pl.reciprocal(jnp.sum(p, axis=-1, keepdims=True), approx=approx)
        attn = p * inv_den
        ctx_heads.append(jnp.dot(attn.astype(cdt), vh,
                                 preferred_element_type=jnp.float32))   # (L, Dh)

    # Single full-contraction output projection: (L, E) @ (E, E) on the MXU.
    ctx = jnp.concatenate(ctx_heads, axis=-1).astype(cdt)               # (L, E)
    attn_out = jnp.dot(ctx, wo_ref[...],
                       preferred_element_type=jnp.float32) + bo_ref[...]

    # ---- residual + LayerNorm + masked_fill ----------------------------------
    normed = _layer_norm(x2 + attn_out, ln1_g_ref[...], ln1_b_ref[...])
    masked = jnp.where(padded_row, 0.0, normed)

    # ---- PositionwiseFeedForward: SepConv -> ReLU -> SepConv -> +res -> LN ---
    # Edge masks depend only on the source offset -> compute once, share between
    # both depthwise convs.
    l_ids = lax.broadcasted_iota(jnp.int32, (L, 1), 0)
    offsets = set()
    for K in (dw1_ref.shape[0], dw2_ref.shape[0]):
        pad = (K - 1) // 2
        offsets |= {k - pad for k in range(K) if k != pad}
    edge_ok = {s: (l_ids >= -s) & (l_ids < L - s) for s in offsets}

    h1 = _depthwise_conv_rolled(masked, edge_ok, dw1_ref, dwb1_ref)      # (L, E)  f32
    h1 = jnp.dot(h1.astype(cdt), pw1_ref[...],
                 preferred_element_type=jnp.float32) + pwb1_ref[...]     # (L, Hid)
    h1 = jnp.maximum(h1, 0.0)                                            # ReLU

    h2 = _depthwise_conv_rolled(h1, edge_ok, dw2_ref, dwb2_ref)          # (L, Hid) f32
    h2 = jnp.dot(h2.astype(cdt), pw2_ref[...],
                 preferred_element_type=jnp.float32) + pwb2_ref[...]     # (L, E)

    out = _layer_norm(h2 + masked, ln2_g_ref[...], ln2_b_ref[...])
    out_ref[...] = jnp.where(padded_row, 0.0, out)


def fft_block_forward(x, padding_mask, params, num_heads, *,
                      compute_dtype=jnp.bfloat16):
    """x: (B, L, E) f32; padding_mask: (B, L) bool (True = padded position)."""
    B, L, E = x.shape
    assert E % num_heads == 0
    Dh = E // num_heads
    (wqkv_t, bqkv, wo_t, bo, ln1_g, ln1_b,
     dw1, dwb1, pw1_t, pwb1, dw2, dwb2, pw2_t, pwb2, ln2_g, ln2_b) = params
    assert dw1.shape[0] % 2 == 1 and dw2.shape[0] % 2 == 1, \
        "odd kernel sizes assumed ('same'-length convs)"

    # Head-major permutation of the fused q|k|v columns: head h gets the
    # contiguous window [q_h | k_h | v_h] so the kernel does one slice per head.
    perm = np.concatenate([
        np.concatenate([j * E + np.arange(h * Dh, (h + 1) * Dh) for j in range(3)])
        for h in range(num_heads)])
    wqkv_hm = jnp.asarray(wqkv_t)[:, perm].astype(compute_dtype)   # matmul operand
    bqkv_hm = jnp.asarray(bqkv)[:, perm]                           # bias stays f32

    # Matmul weight operands in compute_dtype (bf16 on the MXU); biases, LN
    # params and depthwise weights stay f32 (element-wise / VPU path).
    wo_c = wo_t.astype(compute_dtype)
    pw1_c = pw1_t.astype(compute_dtype)
    pw2_c = pw2_t.astype(compute_dtype)

    # Two layouts of the padding mask so the kernel never transposes it:
    #   (B, 1, L) -> lanes   = key axis of the attention scores
    #   (B, L, 1) -> sublane = rows of the (L, .) activation slab
    key_mask = padding_mask.astype(jnp.float32)[:, None, :]
    row_mask = padding_mask.astype(jnp.float32)[:, :, None]

    kernel = functools.partial(fft_block_kernel, num_heads=num_heads,
                               compute_dtype=compute_dtype)

    # Constant-index weights: fetched once across the grid and single-buffered
    # (double-buffering an operand whose block never changes only wastes VMEM).
    def wspec(a):
        nd = a.ndim
        return pl.BlockSpec(a.shape, lambda b: (0,) * nd,
                            pipeline_mode=pl.Buffered(1))

    # TODO(synk): for production L (~1k) add a sequence-tile grid axis (conv
    # halo via overlapping index_map, flash-style KV loop for attention) so the
    # live set fits v7x's 64 MiB VMEM and the per-core grid pipelines DMAs.
    return pl.pallas_call(
        kernel,
        out_shape=jax.ShapeDtypeStruct((B, L, E), jnp.float32),
        grid_spec=pltpu.PrefetchScalarGridSpec(
            num_scalar_prefetch=0,
            grid=(B,),                       # one sequence per step, even length -> both v7x TCs
            in_specs=[
                pl.BlockSpec((None, L, E), lambda b: (b, 0, 0)),   # x        -> (L, E)
                pl.BlockSpec((None, 1, L), lambda b: (b, 0, 0)),   # key mask -> (1, L)
                pl.BlockSpec((None, L, 1), lambda b: (b, 0, 0)),   # row mask -> (L, 1)
                wspec(wqkv_hm), wspec(bqkv_hm),                    # fused in-proj
                wspec(wo_c), wspec(bo),                            # out-proj
                wspec(ln1_g), wspec(ln1_b),                        # LayerNorm 1
                wspec(dw1), wspec(dwb1), wspec(pw1_c), wspec(pwb1),  # SepConv 1
                wspec(dw2), wspec(dwb2), wspec(pw2_c), wspec(pwb2),  # SepConv 2
                wspec(ln2_g), wspec(ln2_b),                        # LayerNorm 2
            ],
            out_specs=pl.BlockSpec((None, L, E), lambda b: (b, 0, 0)),
        ),
        compiler_params=pltpu.CompilerParams(
            dimension_semantics=("parallel",),
            vmem_limit_bytes=64 * 1024 * 1024,
        ),
    )(x, key_mask, row_mask,
      wqkv_hm, bqkv_hm, wo_c, bo, ln1_g, ln1_b,
      dw1, dwb1, pw1_c, pwb1, dw2, dwb2, pw2_c, pwb2, ln2_g, ln2_b)


def reference_forward(x, padding_mask, params, num_heads):
    """Pure-JAX reference reproducing the PyTorch FFTBlock forward (eval mode)."""
    (wqkv_t, bqkv, wo_t, bo, ln1_g, ln1_b,
     dw1, dwb1, pw1_t, pwb1, dw2, dwb2, pw2_t, pwb2, ln2_g, ln2_b) = params
    B, L, E = x.shape
    H = num_heads
    Dh = E // H
    mask3 = padding_mask[:, :, None]

    def layer_norm(t, g, b):
        mu = jnp.mean(t, axis=-1, keepdims=True)
        tc = t - mu
        var = jnp.mean(tc * tc, axis=-1, keepdims=True)
        return tc / jnp.sqrt(var + LN_EPS) * g + b

    qkv = x @ wqkv_t + bqkv                                     # (B, L, 3E)
    q, k, v = jnp.split(qkv, 3, axis=-1)
    heads = lambda t: t.reshape(B, L, H, Dh).transpose(0, 2, 1, 3)
    qh, kh, vh = heads(q), heads(k), heads(v)
    scores = jnp.einsum('bhqd,bhkd->bhqk', qh, kh) * (1.0 / math.sqrt(Dh))
    scores = scores + (padding_mask.astype(jnp.float32) * NEG_BIG)[:, None, None, :]
    attn = jax.nn.softmax(scores, axis=-1)
    ctx = jnp.einsum('bhqk,bhkd->bhqd', attn, vh).transpose(0, 2, 1, 3).reshape(B, L, E)
    attn_out = ctx @ wo_t + bo

    normed = layer_norm(x + attn_out, ln1_g, ln1_b)
    masked = jnp.where(mask3, 0.0, normed)

    def depthwise(t, w, b):            # t (B,L,C), w (K,C), b (1,C)
        K = w.shape[0]
        P = (K - 1) // 2
        tp = jnp.pad(t, ((0, 0), (P, P), (0, 0)))
        acc = jnp.zeros_like(t)
        for kk in range(K):
            acc = acc + tp[:, kk:kk + L, :] * w[kk][None, None, :]
        return acc + b

    h = depthwise(masked, dw1, dwb1) @ pw1_t + pwb1
    h = jnp.maximum(h, 0.0)
    g = depthwise(h, dw2, dwb2) @ pw2_t + pwb2
    out = layer_norm(g + masked, ln2_g, ln2_b)
    return jnp.where(mask3, 0.0, out)


if __name__ == "__main__":
    B, L, E = 2, 16, 32
    NUM_HEADS = 4
    HID = 64
    K1, K2 = 3, 3    # odd SepConv kernel sizes -> 'same' output length

    key = jax.random.PRNGKey(0)
    ks = jax.random.split(key, 20)
    s = 0.1

    x = jax.random.normal(ks[0], (B, L, E), dtype=jnp.float32)
    # batch 0: fully valid; batch 1: last 5 positions padded.
    padding_mask = jnp.zeros((B, L), dtype=bool).at[1, L - 5:].set(True)

    params = (
        s * jax.random.normal(ks[1], (E, 3 * E), dtype=jnp.float32),    # in_proj W^T (q|k|v)
        s * jax.random.normal(ks[2], (1, 3 * E), dtype=jnp.float32),    # in_proj bias
        s * jax.random.normal(ks[3], (E, E), dtype=jnp.float32),        # out_proj W^T
        s * jax.random.normal(ks[4], (1, E), dtype=jnp.float32),        # out_proj bias
        1.0 + s * jax.random.normal(ks[5], (1, E), dtype=jnp.float32),  # LN1 gamma
        s * jax.random.normal(ks[6], (1, E), dtype=jnp.float32),        # LN1 beta
        s * jax.random.normal(ks[7], (K1, E), dtype=jnp.float32),       # sepconv1 depthwise w[k, c]
        s * jax.random.normal(ks[8], (1, E), dtype=jnp.float32),        # sepconv1 depthwise bias
        s * jax.random.normal(ks[9], (E, HID), dtype=jnp.float32),      # sepconv1 pointwise W^T
        s * jax.random.normal(ks[10], (1, HID), dtype=jnp.float32),     # sepconv1 pointwise bias
        s * jax.random.normal(ks[11], (K2, HID), dtype=jnp.float32),    # sepconv2 depthwise w[k, c]
        s * jax.random.normal(ks[12], (1, HID), dtype=jnp.float32),     # sepconv2 depthwise bias
        s * jax.random.normal(ks[13], (HID, E), dtype=jnp.float32),     # sepconv2 pointwise W^T
        s * jax.random.normal(ks[14], (1, E), dtype=jnp.float32),       # sepconv2 pointwise bias
        1.0 + s * jax.random.normal(ks[15], (1, E), dtype=jnp.float32), # LN2 gamma
        s * jax.random.normal(ks[16], (1, E), dtype=jnp.float32),       # LN2 beta
    )

    with jax.default_matmul_precision("highest"):
        ref = reference_forward(x, padding_mask, params, NUM_HEADS)
    ref = np.asarray(jax.block_until_ready(ref))

    # Strict f32 compute path: tight check against the f32 reference.
    out_f32 = jax.block_until_ready(
        fft_block_forward(x, padding_mask, params, NUM_HEADS,
                          compute_dtype=jnp.float32))
    np.testing.assert_allclose(np.asarray(out_f32), ref, rtol=2e-3, atol=2e-3)

    # bf16 matmul-operand path (recommended production config): looser tolerance.
    out_bf16 = jax.block_until_ready(
        fft_block_forward(x, padding_mask, params, NUM_HEADS,
                          compute_dtype=jnp.bfloat16))
    np.testing.assert_allclose(np.asarray(out_bf16), ref, rtol=5e-2, atol=5e-2)

    print("KERNEL_OK")
</pallas_src>

<mosaic_0001>
module attributes {stable_mosaic.version = 11 : i64} {
  func.func @fft_block_kernel(%arg0: i32, %arg1: memref<1x16x32xf32, #tpu.memory_space<vmem>>, %arg2: memref<1x1x16xf32, #tpu.memory_space<vmem>>, %arg3: memref<1x16x1xf32, #tpu.memory_space<vmem>>, %arg4: memref<32x96xf32, #tpu.memory_space<vmem>>, %arg5: memref<1x96xf32, #tpu.memory_space<vmem>>, %arg6: memref<32x32xf32, #tpu.memory_space<vmem>>, %arg7: memref<1x32xf32, #tpu.memory_space<vmem>>, %arg8: memref<1x32xf32, #tpu.memory_space<vmem>>, %arg9: memref<1x32xf32, #tpu.memory_space<vmem>>, %arg10: memref<3x32xf32, #tpu.memory_space<vmem>>, %arg11: memref<1x32xf32, #tpu.memory_space<vmem>>, %arg12: memref<32x64xf32, #tpu.memory_space<vmem>>, %arg13: memref<1x64xf32, #tpu.memory_space<vmem>>, %arg14: memref<3x64xf32, #tpu.memory_space<vmem>>, %arg15: memref<1x64xf32, #tpu.memory_space<vmem>>, %arg16: memref<64x32xf32, #tpu.memory_space<vmem>>, %arg17: memref<1x32xf32, #tpu.memory_space<vmem>>, %arg18: memref<1x32xf32, #tpu.memory_space<vmem>>, %arg19: memref<1x32xf32, #tpu.memory_space<vmem>>, %arg20: memref<1x16x32xf32, #tpu.memory_space<vmem>>) attributes {dimension_semantics = [#tpu.dimension_semantics<parallel>], iteration_bounds = array<i64: 2>, scalar_prefetch = 0 : i64, scratch_operands = 0 : i64, tpu.core_type = #tpu.core_type<tc>, window_params = [{transform_indices = @transform_0, window_bounds = array<i64: 1, 16, 32>}, {transform_indices = @transform_1, window_bounds = array<i64: 1, 1, 16>}, {transform_indices = @transform_2, window_bounds = array<i64: 1, 16, 1>}, {pipeline_mode = #tpu.pipeline_mode<synchronous>, transform_indices = @transform_3, window_bounds = array<i64: 32, 96>}, {pipeline_mode = #tpu.pipeline_mode<synchronous>, transform_indices = @transform_4, window_bounds = array<i64: 1, 96>}, {pipeline_mode = #tpu.pipeline_mode<synchronous>, transform_indices = @transform_5, window_bounds = array<i64: 32, 32>}, {pipeline_mode = #tpu.pipeline_mode<synchronous>, transform_indices = @transform_6, window_bounds = array<i64: 1, 32>}, {pipeline_mode = #tpu.pipeline_mode<synchronous>, transform_indices = @transform_7, window_bounds = array<i64: 1, 32>}, {pipeline_mode = #tpu.pipeline_mode<synchronous>, transform_indices = @transform_8, window_bounds = array<i64: 1, 32>}, {pipeline_mode = #tpu.pipeline_mode<synchronous>, transform_indices = @transform_9, window_bounds = array<i64: 3, 32>}, {pipeline_mode = #tpu.pipeline_mode<synchronous>, transform_indices = @transform_10, window_bounds = array<i64: 1, 32>}, {pipeline_mode = #tpu.pipeline_mode<synchronous>, transform_indices = @transform_11, window_bounds = array<i64: 32, 64>}, {pipeline_mode = #tpu.pipeline_mode<synchronous>, transform_indices = @transform_12, window_bounds = array<i64: 1, 64>}, {pipeline_mode = #tpu.pipeline_mode<synchronous>, transform_indices = @transform_13, window_bounds = array<i64: 3, 64>}, {pipeline_mode = #tpu.pipeline_mode<synchronous>, transform_indices = @transform_14, window_bounds = array<i64: 1, 64>}, {pipeline_mode = #tpu.pipeline_mode<synchronous>, transform_indices = @transform_15, window_bounds = array<i64: 64, 32>}, {pipeline_mode = #tpu.pipeline_mode<synchronous>, transform_indices = @transform_16, window_bounds = array<i64: 1, 32>}, {pipeline_mode = #tpu.pipeline_mode<synchronous>, transform_indices = @transform_17, window_bounds = array<i64: 1, 32>}, {pipeline_mode = #tpu.pipeline_mode<synchronous>, transform_indices = @transform_18, window_bounds = array<i64: 1, 32>}, {transform_indices = @transform_19, window_bounds = array<i64: 1, 16, 32>}]} {
    %c0 = arith.constant 0 : index
    %c0_0 = arith.constant 0 : index
    %c0_1 = arith.constant 0 : index
    %0 = vector.load %arg1[%c0, %c0_0, %c0_1] : memref<1x16x32xf32, #tpu.memory_space<vmem>>, vector<1x16x32xf32>
    %1 = vector.shape_cast %0 : vector<1x16x32xf32> to vector<16x32xf32>
    %c0_2 = arith.constant 0 : index
    %c0_3 = arith.constant 0 : index
    %c0_4 = arith.constant 0 : index
    %2 = vector.load %arg2[%c0_2, %c0_3, %c0_4] : memref<1x1x16xf32, #tpu.memory_space<vmem>>, vector<1x1x16xf32>
    %3 = vector.shape_cast %2 : vector<1x1x16xf32> to vector<1x16xf32>
    %cst = arith.constant -1.000000e+09 : f32
    %4 = vector.broadcast %cst : f32 to vector<1x16xf32>
    %5 = arith.mulf %3, %4 : vector<1x16xf32>
    %c0_5 = arith.constant 0 : index
    %c0_6 = arith.constant 0 : index
    %c0_7 = arith.constant 0 : index
    %6 = vector.load %arg3[%c0_5, %c0_6, %c0_7] : memref<1x16x1xf32, #tpu.memory_space<vmem>>, vector<1x16x1xf32>
    %7 = vector.shape_cast %6 : vector<1x16x1xf32> to vector<16x1xf32>
    %cst_8 = arith.constant 5.000000e-01 : f32
    %8 = vector.broadcast %cst_8 : f32 to vector<16x1xf32>
    %9 = arith.cmpf ogt, %7, %8 : vector<16x1xf32>
    %c0_9 = arith.constant 0 : index
    %c0_10 = arith.constant 0 : index
    %10 = vector.load %arg4[%c0_9, %c0_10] : memref<32x96xf32, #tpu.memory_space<vmem>>, vector<32x96xf32>
    %cst_11 = arith.constant dense<0.000000e+00> : vector<16x96xf32>
    %11 = tpu.matmul %1, %10, %cst_11 {dimension_numbers = #tpu.dot_dimension_numbers<[1], [0], [0], [1], [0, 0, 1, 1], [], []>} : vector<16x32xf32>, vector<32x96xf32>, vector<16x96xf32> -> vector<16x96xf32>
    %c0_12 = arith.constant 0 : index
    %c0_13 = arith.constant 0 : index
    %12 = vector.load %arg5[%c0_12, %c0_13] : memref<1x96xf32, #tpu.memory_space<vmem>>, vector<1x96xf32>
    %13 = vector.broadcast %12 : vector<1x96xf32> to vector<16x96xf32>
    %14 = arith.addf %11, %13 : vector<16x96xf32>
    %15 = vector.extract_strided_slice %14 {offsets = [0, 0], sizes = [16, 8], strides = [1, 1]} : vector<16x96xf32> to vector<16x8xf32>
    %16 = vector.extract_strided_slice %14 {offsets = [0, 8], sizes = [16, 8], strides = [1, 1]} : vector<16x96xf32> to vector<16x8xf32>
    %17 = vector.extract_strided_slice %14 {offsets = [0, 16], sizes = [16, 8], strides = [1, 1]} : vector<16x96xf32> to vector<16x8xf32>
    %cst_14 = arith.constant dense<0.000000e+00> : vector<16x16xf32>
    %18 = tpu.matmul %15, %16, %cst_14 {dimension_numbers = #tpu.dot_dimension_numbers<[1], [1], [0], [0], [0, 0, 1, 0], [], []>} : vector<16x8xf32>, vector<16x8xf32>, vector<16x16xf32> -> vector<16x16xf32>
    %cst_15 = arith.constant 0.353553385 : f32
    %19 = vector.broadcast %cst_15 : f32 to vector<16x16xf32>
    %20 = arith.mulf %18, %19 : vector<16x16xf32>
    %21 = vector.broadcast %5 : vector<1x16xf32> to vector<16x16xf32>
    %22 = arith.addf %20, %21 : vector<16x16xf32>
    %cst_16 = arith.constant dense<0xFF800000> : vector<16xf32>
    %23 = vector.multi_reduction <maximumf>, %22, %cst_16 [1] : vector<16x16xf32> to vector<16xf32>
    %24 = vector.shape_cast %23 : vector<16xf32> to vector<16x1xf32>
    %25 = vector.broadcast %24 : vector<16x1xf32> to vector<16x16xf32>
    %26 = arith.subf %22, %25 : vector<16x16xf32>
    %27 = math.exp %26 : vector<16x16xf32>
    %cst_17 = arith.constant dense<0.000000e+00> : vector<16xf32>
    %28 = vector.multi_reduction <add>, %27, %cst_17 [1] : vector<16x16xf32> to vector<16xf32>
    %29 = vector.shape_cast %28 : vector<16xf32> to vector<16x1xf32>
    %30 = tpu.reciprocal %29 : vector<16x1xf32> -> vector<16x1xf32>
    %31 = vector.broadcast %30 : vector<16x1xf32> to vector<16x16xf32>
    %32 = arith.mulf %27, %31 : vector<16x16xf32>
    %cst_18 = arith.constant dense<0.000000e+00> : vector<16x8xf32>
    %33 = tpu.matmul %32, %17, %cst_18 {dimension_numbers = #tpu.dot_dimension_numbers<[1], [0], [0], [1], [0, 0, 1, 1], [], []>} : vector<16x16xf32>, vector<16x8xf32>, vector<16x8xf32> -> vector<16x8xf32>
    %34 = vector.extract_strided_slice %14 {offsets = [0, 24], sizes = [16, 8], strides = [1, 1]} : vector<16x96xf32> to vector<16x8xf32>
    %35 = vector.extract_strided_slice %14 {offsets = [0, 32], sizes = [16, 8], strides = [1, 1]} : vector<16x96xf32> to vector<16x8xf32>
    %36 = vector.extract_strided_slice %14 {offsets = [0, 40], sizes = [16, 8], strides = [1, 1]} : vector<16x96xf32> to vector<16x8xf32>
    %cst_19 = arith.constant dense<0.000000e+00> : vector<16x16xf32>
    %37 = tpu.matmul %34, %35, %cst_19 {dimension_numbers = #tpu.dot_dimension_numbers<[1], [1], [0], [0], [0, 0, 1, 0], [], []>} : vector<16x8xf32>, vector<16x8xf32>, vector<16x16xf32> -> vector<16x16xf32>
    %cst_20 = arith.constant 0.353553385 : f32
    %38 = vector.broadcast %cst_20 : f32 to vector<16x16xf32>
    %39 = arith.mulf %37, %38 : vector<16x16xf32>
    %40 = vector.broadcast %5 : vector<1x16xf32> to vector<16x16xf32>
    %41 = arith.addf %39, %40 : vector<16x16xf32>
    %cst_21 = arith.constant dense<0xFF800000> : vector<16xf32>
    %42 = vector.multi_reduction <maximumf>, %41, %cst_21 [1] : vector<16x16xf32> to vector<16xf32>
    %43 = vector.shape_cast %42 : vector<16xf32> to vector<16x1xf32>
    %44 = vector.broadcast %43 : vector<16x1xf32> to vector<16x16xf32>
    %45 = arith.subf %41, %44 : vector<16x16xf32>
    %46 = math.exp %45 : vector<16x16xf32>
    %cst_22 = arith.constant dense<0.000000e+00> : vector<16xf32>
    %47 = vector.multi_reduction <add>, %46, %cst_22 [1] : vector<16x16xf32> to vector<16xf32>
    %48 = vector.shape_cast %47 : vector<16xf32> to vector<16x1xf32>
    %49 = tpu.reciprocal %48 : vector<16x1xf32> -> vector<16x1xf32>
    %50 = vector.broadcast %49 : vector<16x1xf32> to vector<16x16xf32>
    %51 = arith.mulf %46, %50 : vector<16x16xf32>
    %cst_23 = arith.constant dense<0.000000e+00> : vector<16x8xf32>
    %52 = tpu.matmul %51, %36, %cst_23 {dimension_numbers = #tpu.dot_dimension_numbers<[1], [0], [0], [1], [0, 0, 1, 1], [], []>} : vector<16x16xf32>, vector<16x8xf32>, vector<16x8xf32> -> vector<16x8xf32>
    %53 = vector.extract_strided_slice %14 {offsets = [0, 48], sizes = [16, 8], strides = [1, 1]} : vector<16x96xf32> to vector<16x8xf32>
    %54 = vector.extract_strided_slice %14 {offsets = [0, 56], sizes = [16, 8], strides = [1, 1]} : vector<16x96xf32> to vector<16x8xf32>
    %55 = vector.extract_strided_slice %14 {offsets = [0, 64], sizes = [16, 8], strides = [1, 1]} : vector<16x96xf32> to vector<16x8xf32>
    %cst_24 = arith.constant dense<0.000000e+00> : vector<16x16xf32>
    %56 = tpu.matmul %53, %54, %cst_24 {dimension_numbers = #tpu.dot_dimension_numbers<[1], [1], [0], [0], [0, 0, 1, 0], [], []>} : vector<16x8xf32>, vector<16x8xf32>, vector<16x16xf32> -> vector<16x16xf32>
    %cst_25 = arith.constant 0.353553385 : f32
    %57 = vector.broadcast %cst_25 : f32 to vector<16x16xf32>
    %58 = arith.mulf %56, %57 : vector<16x16xf32>
    %59 = vector.broadcast %5 : vector<1x16xf32> to vector<16x16xf32>
    %60 = arith.addf %58, %59 : vector<16x16xf32>
    %cst_26 = arith.constant dense<0xFF800000> : vector<16xf32>
    %61 = vector.multi_reduction <maximumf>, %60, %cst_26 [1] : vector<16x16xf32> to vector<16xf32>
    %62 = vector.shape_cast %61 : vector<16xf32> to vector<16x1xf32>
    %63 = vector.broadcast %62 : vector<16x1xf32> to vector<16x16xf32>
    %64 = arith.subf %60, %63 : vector<16x16xf32>
    %65 = math.exp %64 : vector<16x16xf32>
    %cst_27 = arith.constant dense<0.000000e+00> : vector<16xf32>
    %66 = vector.multi_reduction <add>, %65, %cst_27 [1] : vector<16x16xf32> to vector<16xf32>
    %67 = vector.shape_cast %66 : vector<16xf32> to vector<16x1xf32>
    %68 = tpu.reciprocal %67 : vector<16x1xf32> -> vector<16x1xf32>
    %69 = vector.broadcast %68 : vector<16x1xf32> to vector<16x16xf32>
    %70 = arith.mulf %65, %69 : vector<16x16xf32>
    %cst_28 = arith.constant dense<0.000000e+00> : vector<16x8xf32>
    %71 = tpu.matmul %70, %55, %cst_28 {dimension_numbers = #tpu.dot_dimension_numbers<[1], [0], [0], [1], [0, 0, 1, 1], [], []>} : vector<16x16xf32>, vector<16x8xf32>, vector<16x8xf32> -> vector<16x8xf32>
    %72 = vector.extract_strided_slice %14 {offsets = [0, 72], sizes = [16, 8], strides = [1, 1]} : vector<16x96xf32> to vector<16x8xf32>
    %73 = vector.extract_strided_slice %14 {offsets = [0, 80], sizes = [16, 8], strides = [1, 1]} : vector<16x96xf32> to vector<16x8xf32>
    %74 = vector.extract_strided_slice %14 {offsets = [0, 88], sizes = [16, 8], strides = [1, 1]} : vector<16x96xf32> to vector<16x8xf32>
    %cst_29 = arith.constant dense<0.000000e+00> : vector<16x16xf32>
    %75 = tpu.matmul %72, %73, %cst_29 {dimension_numbers = #tpu.dot_dimension_numbers<[1], [1], [0], [0], [0, 0, 1, 0], [], []>} : vector<16x8xf32>, vector<16x8xf32>, vector<16x16xf32> -> vector<16x16xf32>
    %cst_30 = arith.constant 0.353553385 : f32
    %76 = vector.broadcast %cst_30 : f32 to vector<16x16xf32>
    %77 = arith.mulf %75, %76 : vector<16x16xf32>
    %78 = vector.broadcast %5 : vector<1x16xf32> to vector<16x16xf32>
    %79 = arith.addf %77, %78 : vector<16x16xf32>
    %cst_31 = arith.constant dense<0xFF800000> : vector<16xf32>
    %80 = vector.multi_reduction <maximumf>, %79, %cst_31 [1] : vector<16x16xf32> to vector<16xf32>
    %81 = vector.shape_cast %80 : vector<16xf32> to vector<16x1xf32>
    %82 = vector.broadcast %81 : vector<16x1xf32> to vector<16x16xf32>
    %83 = arith.subf %79, %82 : vector<16x16xf32>
    %84 = math.exp %83 : vector<16x16xf32>
    %cst_32 = arith.constant dense<0.000000e+00> : vector<16xf32>
    %85 = vector.multi_reduction <add>, %84, %cst_32 [1] : vector<16x16xf32> to vector<16xf32>
    %86 = vector.shape_cast %85 : vector<16xf32> to vector<16x1xf32>
    %87 = tpu.reciprocal %86 : vector<16x1xf32> -> vector<16x1xf32>
    %88 = vector.broadcast %87 : vector<16x1xf32> to vector<16x16xf32>
    %89 = arith.mulf %84, %88 : vector<16x16xf32>
    %cst_33 = arith.constant dense<0.000000e+00> : vector<16x8xf32>
    %90 = tpu.matmul %89, %74, %cst_33 {dimension_numbers = #tpu.dot_dimension_numbers<[1], [0], [0], [1], [0, 0, 1, 1], [], []>} : vector<16x16xf32>, vector<16x8xf32>, vector<16x8xf32> -> vector<16x8xf32>
    %91 = tpu.concatenate %33, %52, %71, %90 in 1 : vector<16x8xf32>, vector<16x8xf32>, vector<16x8xf32>, vector<16x8xf32> -> vector<16x32xf32>
    %c0_34 = arith.constant 0 : index
    %c0_35 = arith.constant 0 : index
    %92 = vector.load %arg6[%c0_34, %c0_35] : memref<32x32xf32, #tpu.memory_space<vmem>>, vector<32x32xf32>
    %cst_36 = arith.constant dense<0.000000e+00> : vector<16x32xf32>
    %93 = tpu.matmul %91, %92, %cst_36 {dimension_numbers = #tpu.dot_dimension_numbers<[1], [0], [0], [1], [0, 0, 1, 1], [], []>} : vector<16x32xf32>, vector<32x32xf32>, vector<16x32xf32> -> vector<16x32xf32>
    %c0_37 = arith.constant 0 : index
    %c0_38 = arith.constant 0 : index
    %94 = vector.load %arg7[%c0_37, %c0_38] : memref<1x32xf32, #tpu.memory_space<vmem>>, vector<1x32xf32>
    %95 = vector.broadcast %94 : vector<1x32xf32> to vector<16x32xf32>
    %96 = arith.addf %93, %95 : vector<16x32xf32>
    %97 = arith.addf %1, %96 : vector<16x32xf32>
    %c0_39 = arith.constant 0 : index
    %c0_40 = arith.constant 0 : index
    %98 = vector.load %arg8[%c0_39, %c0_40] : memref<1x32xf32, #tpu.memory_space<vmem>>, vector<1x32xf32>
    %c0_41 = arith.constant 0 : index
    %c0_42 = arith.constant 0 : index
    %99 = vector.load %arg9[%c0_41, %c0_42] : memref<1x32xf32, #tpu.memory_space<vmem>>, vector<1x32xf32>
    %cst_43 = arith.constant dense<0.000000e+00> : vector<16xf32>
    %100 = vector.multi_reduction <add>, %97, %cst_43 [1] : vector<16x32xf32> to vector<16xf32>
    %101 = vector.shape_cast %100 : vector<16xf32> to vector<16x1xf32>
    %cst_44 = arith.constant 3.200000e+01 : f32
    %102 = vector.broadcast %cst_44 : f32 to vector<16x1xf32>
    %103 = arith.divf %101, %102 : vector<16x1xf32>
    %104 = vector.broadcast %103 : vector<16x1xf32> to vector<16x32xf32>
    %105 = arith.subf %97, %104 : vector<16x32xf32>
    %106 = arith.mulf %105, %105 : vector<16x32xf32>
    %cst_45 = arith.constant dense<0.000000e+00> : vector<16xf32>
    %107 = vector.multi_reduction <add>, %106, %cst_45 [1] : vector<16x32xf32> to vector<16xf32>
    %108 = vector.shape_cast %107 : vector<16xf32> to vector<16x1xf32>
    %cst_46 = arith.constant 3.200000e+01 : f32
    %109 = vector.broadcast %cst_46 : f32 to vector<16x1xf32>
    %110 = arith.divf %108, %109 : vector<16x1xf32>
    %cst_47 = arith.constant 9.99999974E-6 : f32
    %111 = vector.broadcast %cst_47 : f32 to vector<16x1xf32>
    %112 = arith.addf %110, %111 : vector<16x1xf32>
    %113 = math.rsqrt %112 : vector<16x1xf32>
    %114 = vector.broadcast %113 : vector<16x1xf32> to vector<16x32xf32>
    %115 = arith.mulf %105, %114 : vector<16x32xf32>
    %116 = vector.broadcast %98 : vector<1x32xf32> to vector<16x32xf32>
    %117 = arith.mulf %115, %116 : vector<16x32xf32>
    %118 = vector.broadcast %99 : vector<1x32xf32> to vector<16x32xf32>
    %119 = arith.addf %117, %118 : vector<16x32xf32>
    %cst_48 = arith.constant 0.000000e+00 : f32
    %120 = vector.shape_cast %9 : vector<16x1xi1> to vector<16x1xi1>
    %121 = vector.broadcast %120 : vector<16x1xi1> to vector<16x32xi1>
    %122 = vector.broadcast %cst_48 : f32 to vector<16x32xf32>
    %123 = arith.select %121, %122, %119 : vector<16x32xi1>, vector<16x32xf32>
    %124 = tpu.iota {dimensions = array<i32: 0>} : vector<16x1xi32>
    %c-1_i32 = arith.constant -1 : i32
    %125 = vector.broadcast %c-1_i32 : i32 to vector<16x1xi32>
    %126 = arith.cmpi sge, %124, %125 : vector<16x1xi32>
    %c15_i32 = arith.constant 15 : i32
    %127 = vector.broadcast %c15_i32 : i32 to vector<16x1xi32>
    %128 = arith.cmpi slt, %124, %127 : vector<16x1xi32>
    %129 = arith.andi %126, %128 : vector<16x1xi1>
    %c1_i32 = arith.constant 1 : i32
    %130 = vector.broadcast %c1_i32 : i32 to vector<16x1xi32>
    %131 = arith.cmpi sge, %124, %130 : vector<16x1xi32>
    %c17_i32 = arith.constant 17 : i32
    %132 = vector.broadcast %c17_i32 : i32 to vector<16x1xi32>
    %133 = arith.cmpi slt, %124, %132 : vector<16x1xi32>
    %134 = arith.andi %131, %133 : vector<16x1xi1>
    %c1_i32_49 = arith.constant 1 : i32
    %135 = tpu.dynamic_rotate %123 by %c1_i32_49 dim 0 : vector<16x32xf32>, i32 -> vector<16x32xf32>
    %cst_50 = arith.constant 0.000000e+00 : f32
    %136 = vector.shape_cast %134 : vector<16x1xi1> to vector<16x1xi1>
    %137 = vector.broadcast %136 : vector<16x1xi1> to vector<16x32xi1>
    %138 = vector.broadcast %cst_50 : f32 to vector<16x32xf32>
    %139 = arith.select %137, %135, %138 : vector<16x32xi1>, vector<16x32xf32>
    %c0_51 = arith.constant 0 : index
    %c0_52 = arith.constant 0 : index
    %140 = vector.load %arg10[%c0_51, %c0_52] : memref<3x32xf32, #tpu.memory_space<vmem>>, vector<1x32xf32>
    %141 = vector.broadcast %140 : vector<1x32xf32> to vector<16x32xf32>
    %142 = arith.mulf %139, %141 : vector<16x32xf32>
    %c1 = arith.constant 1 : index
    %c0_53 = arith.constant 0 : index
    %143 = vector.load %arg10[%c1, %c0_53] : memref<3x32xf32, #tpu.memory_space<vmem>>, vector<1x32xf32>
    %144 = vector.broadcast %143 : vector<1x32xf32> to vector<16x32xf32>
    %145 = arith.mulf %123, %144 : vector<16x32xf32>
    %146 = arith.addf %142, %145 : vector<16x32xf32>
    %c15_i32_54 = arith.constant 15 : i32
    %147 = tpu.dynamic_rotate %123 by %c15_i32_54 dim 0 : vector<16x32xf32>, i32 -> vector<16x32xf32>
    %cst_55 = arith.constant 0.000000e+00 : f32
    %148 = vector.shape_cast %129 : vector<16x1xi1> to vector<16x1xi1>
    %149 = vector.broadcast %148 : vector<16x1xi1> to vector<16x32xi1>
    %150 = vector.broadcast %cst_55 : f32 to vector<16x32xf32>
    %151 = arith.select %149, %147, %150 : vector<16x32xi1>, vector<16x32xf32>
    %c2 = arith.constant 2 : index
    %c0_56 = arith.constant 0 : index
    %152 = vector.load %arg10[%c2, %c0_56] : memref<3x32xf32, #tpu.memory_space<vmem>>, vector<1x32xf32>
    %153 = vector.broadcast %152 : vector<1x32xf32> to vector<16x32xf32>
    %154 = arith.mulf %151, %153 : vector<16x32xf32>
    %155 = arith.addf %146, %154 : vector<16x32xf32>
    %c0_57 = arith.constant 0 : index
    %c0_58 = arith.constant 0 : index
    %156 = vector.load %arg11[%c0_57, %c0_58] : memref<1x32xf32, #tpu.memory_space<vmem>>, vector<1x32xf32>
    %157 = vector.broadcast %156 : vector<1x32xf32> to vector<16x32xf32>
    %158 = arith.addf %155, %157 : vector<16x32xf32>
    %c0_59 = arith.constant 0 : index
    %c0_60 = arith.constant 0 : index
    %159 = vector.load %arg12[%c0_59, %c0_60] : memref<32x64xf32, #tpu.memory_space<vmem>>, vector<32x64xf32>
    %cst_61 = arith.constant dense<0.000000e+00> : vector<16x64xf32>
    %160 = tpu.matmul %158, %159, %cst_61 {dimension_numbers = #tpu.dot_dimension_numbers<[1], [0], [0], [1], [0, 0, 1, 1], [], []>} : vector<16x32xf32>, vector<32x64xf32>, vector<16x64xf32> -> vector<16x64xf32>
    %c0_62 = arith.constant 0 : index
    %c0_63 = arith.constant 0 : index
    %161 = vector.load %arg13[%c0_62, %c0_63] : memref<1x64xf32, #tpu.memory_space<vmem>>, vector<1x64xf32>
    %162 = vector.broadcast %161 : vector<1x64xf32> to vector<16x64xf32>
    %163 = arith.addf %160, %162 : vector<16x64xf32>
    %cst_64 = arith.constant 0.000000e+00 : f32
    %164 = vector.broadcast %cst_64 : f32 to vector<16x64xf32>
    %165 = arith.maximumf %163, %164 : vector<16x64xf32>
    %c1_i32_65 = arith.constant 1 : i32
    %166 = tpu.dynamic_rotate %165 by %c1_i32_65 dim 0 : vector<16x64xf32>, i32 -> vector<16x64xf32>
    %cst_66 = arith.constant 0.000000e+00 : f32
    %167 = vector.shape_cast %134 : vector<16x1xi1> to vector<16x1xi1>
    %168 = vector.broadcast %167 : vector<16x1xi1> to vector<16x64xi1>
    %169 = vector.broadcast %cst_66 : f32 to vector<16x64xf32>
    %170 = arith.select %168, %166, %169 : vector<16x64xi1>, vector<16x64xf32>
    %c0_67 = arith.constant 0 : index
    %c0_68 = arith.constant 0 : index
    %171 = vector.load %arg14[%c0_67, %c0_68] : memref<3x64xf32, #tpu.memory_space<vmem>>, vector<1x64xf32>
    %172 = vector.broadcast %171 : vector<1x64xf32> to vector<16x64xf32>
    %173 = arith.mulf %170, %172 : vector<16x64xf32>
    %c1_69 = arith.constant 1 : index
    %c0_70 = arith.constant 0 : index
    %174 = vector.load %arg14[%c1_69, %c0_70] : memref<3x64xf32, #tpu.memory_space<vmem>>, vector<1x64xf32>
    %175 = vector.broadcast %174 : vector<1x64xf32> to vector<16x64xf32>
    %176 = arith.mulf %165, %175 : vector<16x64xf32>
    %177 = arith.addf %173, %176 : vector<16x64xf32>
    %c15_i32_71 = arith.constant 15 : i32
    %178 = tpu.dynamic_rotate %165 by %c15_i32_71 dim 0 : vector<16x64xf32>, i32 -> vector<16x64xf32>
    %cst_72 = arith.constant 0.000000e+00 : f32
    %179 = vector.shape_cast %129 : vector<16x1xi1> to vector<16x1xi1>
    %180 = vector.broadcast %179 : vector<16x1xi1> to vector<16x64xi1>
    %181 = vector.broadcast %cst_72 : f32 to vector<16x64xf32>
    %182 = arith.select %180, %178, %181 : vector<16x64xi1>, vector<16x64xf32>
    %c2_73 = arith.constant 2 : index
    %c0_74 = arith.constant 0 : index
    %183 = vector.load %arg14[%c2_73, %c0_74] : memref<3x64xf32, #tpu.memory_space<vmem>>, vector<1x64xf32>
    %184 = vector.broadcast %183 : vector<1x64xf32> to vector<16x64xf32>
    %185 = arith.mulf %182, %184 : vector<16x64xf32>
    %186 = arith.addf %177, %185 : vector<16x64xf32>
    %c0_75 = arith.constant 0 : index
    %c0_76 = arith.constant 0 : index
    %187 = vector.load %arg15[%c0_75, %c0_76] : memref<1x64xf32, #tpu.memory_space<vmem>>, vector<1x64xf32>
    %188 = vector.broadcast %187 : vector<1x64xf32> to vector<16x64xf32>
    %189 = arith.addf %186, %188 : vector<16x64xf32>
    %c0_77 = arith.constant 0 : index
    %c0_78 = arith.constant 0 : index
    %190 = vector.load %arg16[%c0_77, %c0_78] : memref<64x32xf32, #tpu.memory_space<vmem>>, vector<64x32xf32>
    %cst_79 = arith.constant dense<0.000000e+00> : vector<16x32xf32>
    %191 = tpu.matmul %189, %190, %cst_79 {dimension_numbers = #tpu.dot_dimension_numbers<[1], [0], [0], [1], [0, 0, 1, 1], [], []>} : vector<16x64xf32>, vector<64x32xf32>, vector<16x32xf32> -> vector<16x32xf32>
    %c0_80 = arith.constant 0 : index
    %c0_81 = arith.constant 0 : index
    %192 = vector.load %arg17[%c0_80, %c0_81] : memref<1x32xf32, #tpu.memory_space<vmem>>, vector<1x32xf32>
    %193 = vector.broadcast %192 : vector<1x32xf32> to vector<16x32xf32>
    %194 = arith.addf %191, %193 : vector<16x32xf32>
    %195 = arith.addf %194, %123 : vector<16x32xf32>
    %c0_82 = arith.constant 0 : index
    %c0_83 = arith.constant 0 : index
    %196 = vector.load %arg18[%c0_82, %c0_83] : memref<1x32xf32, #tpu.memory_space<vmem>>, vector<1x32xf32>
    %c0_84 = arith.constant 0 : index
    %c0_85 = arith.constant 0 : index
    %197 = vector.load %arg19[%c0_84, %c0_85] : memref<1x32xf32, #tpu.memory_space<vmem>>, vector<1x32xf32>
    %cst_86 = arith.constant dense<0.000000e+00> : vector<16xf32>
    %198 = vector.multi_reduction <add>, %195, %cst_86 [1] : vector<16x32xf32> to vector<16xf32>
    %199 = vector.shape_cast %198 : vector<16xf32> to vector<16x1xf32>
    %cst_87 = arith.constant 3.200000e+01 : f32
    %200 = vector.broadcast %cst_87 : f32 to vector<16x1xf32>
    %201 = arith.divf %199, %200 : vector<16x1xf32>
    %202 = vector.broadcast %201 : vector<16x1xf32> to vector<16x32xf32>
    %203 = arith.subf %195, %202 : vector<16x32xf32>
    %204 = arith.mulf %203, %203 : vector<16x32xf32>
    %cst_88 = arith.constant dense<0.000000e+00> : vector<16xf32>
    %205 = vector.multi_reduction <add>, %204, %cst_88 [1] : vector<16x32xf32> to vector<16xf32>
    %206 = vector.shape_cast %205 : vector<16xf32> to vector<16x1xf32>
    %cst_89 = arith.constant 3.200000e+01 : f32
    %207 = vector.broadcast %cst_89 : f32 to vector<16x1xf32>
    %208 = arith.divf %206, %207 : vector<16x1xf32>
    %cst_90 = arith.constant 9.99999974E-6 : f32
    %209 = vector.broadcast %cst_90 : f32 to vector<16x1xf32>
    %210 = arith.addf %208, %209 : vector<16x1xf32>
    %211 = math.rsqrt %210 : vector<16x1xf32>
    %212 = vector.broadcast %211 : vector<16x1xf32> to vector<16x32xf32>
    %213 = arith.mulf %203, %212 : vector<16x32xf32>
    %214 = vector.broadcast %196 : vector<1x32xf32> to vector<16x32xf32>
    %215 = arith.mulf %213, %214 : vector<16x32xf32>
    %216 = vector.broadcast %197 : vector<1x32xf32> to vector<16x32xf32>
    %217 = arith.addf %215, %216 : vector<16x32xf32>
    %cst_91 = arith.constant 0.000000e+00 : f32
    %218 = vector.shape_cast %9 : vector<16x1xi1> to vector<16x1xi1>
    %219 = vector.broadcast %218 : vector<16x1xi1> to vector<16x32xi1>
    %220 = vector.broadcast %cst_91 : f32 to vector<16x32xf32>
    %221 = arith.select %219, %220, %217 : vector<16x32xi1>, vector<16x32xf32>
    %c0_92 = arith.constant 0 : index
    %c0_93 = arith.constant 0 : index
    %c0_94 = arith.constant 0 : index
    %222 = vector.load %arg20[%c0_92, %c0_93, %c0_94] : memref<1x16x32xf32, #tpu.memory_space<vmem>>, vector<1x16x32xf32>
    %223 = vector.shape_cast %222 : vector<1x16x32xf32> to vector<16x32xf32>
    %224 = vector.shape_cast %221 : vector<16x32xf32> to vector<1x16x32xf32>
    tpu.vector_store %arg20[%c0_92, %c0_93, %c0_94], %224 {strides = array<i32>} : memref<1x16x32xf32, #tpu.memory_space<vmem>>, vector<1x16x32xf32>,
    return
  }
  func.func @transform_0(%arg0: i32) -> (i32, i32, i32) {
    %c0_i32 = arith.constant 0 : i32
    %c0_i32_0 = arith.constant 0 : i32
    %c0_i32_1 = arith.constant 0 : i32
    return %arg0, %c0_i32, %c0_i32_0 : i32, i32, i32
  }
  func.func @transform_1(%arg0: i32) -> (i32, i32, i32) {
    %c0_i32 = arith.constant 0 : i32
    %c0_i32_0 = arith.constant 0 : i32
    %c0_i32_1 = arith.constant 0 : i32
    return %arg0, %c0_i32, %c0_i32_0 : i32, i32, i32
  }
  func.func @transform_2(%arg0: i32) -> (i32, i32, i32) {
    %c0_i32 = arith.constant 0 : i32
    %c0_i32_0 = arith.constant 0 : i32
    %c0_i32_1 = arith.constant 0 : i32
    return %arg0, %c0_i32, %c0_i32_0 : i32, i32, i32
  }
  func.func @transform_3(%arg0: i32) -> (i32, i32) {
    %c0_i32 = arith.constant 0 : i32
    %c0_i32_0 = arith.constant 0 : i32
    %c0_i32_1 = arith.constant 0 : i32
    return %c0_i32, %c0_i32_0 : i32, i32
  }
  func.func @transform_4(%arg0: i32) -> (i32, i32) {
    %c0_i32 = arith.constant 0 : i32
    %c0_i32_0 = arith.constant 0 : i32
    %c0_i32_1 = arith.constant 0 : i32
    return %c0_i32, %c0_i32_0 : i32, i32
  }
  func.func @transform_5(%arg0: i32) -> (i32, i32) {
    %c0_i32 = arith.constant 0 : i32
    %c0_i32_0 = arith.constant 0 : i32
    %c0_i32_1 = arith.constant 0 : i32
    return %c0_i32, %c0_i32_0 : i32, i32
  }
  func.func @transform_6(%arg0: i32) -> (i32, i32) {
    %c0_i32 = arith.constant 0 : i32
    %c0_i32_0 = arith.constant 0 : i32
    %c0_i32_1 = arith.constant 0 : i32
    return %c0_i32, %c0_i32_0 : i32, i32
  }
  func.func @transform_7(%arg0: i32) -> (i32, i32) {
    %c0_i32 = arith.constant 0 : i32
    %c0_i32_0 = arith.constant 0 : i32
    %c0_i32_1 = arith.constant 0 : i32
    return %c0_i32, %c0_i32_0 : i32, i32
  }
  func.func @transform_8(%arg0: i32) -> (i32, i32) {
    %c0_i32 = arith.constant 0 : i32
    %c0_i32_0 = arith.constant 0 : i32
    %c0_i32_1 = arith.constant 0 : i32
    return %c0_i32, %c0_i32_0 : i32, i32
  }
  func.func @transform_9(%arg0: i32) -> (i32, i32) {
    %c0_i32 = arith.constant 0 : i32
    %c0_i32_0 = arith.constant 0 : i32
    %c0_i32_1 = arith.constant 0 : i32
    return %c0_i32, %c0_i32_0 : i32, i32
  }
  func.func @transform_10(%arg0: i32) -> (i32, i32) {
    %c0_i32 = arith.constant 0 : i32
    %c0_i32_0 = arith.constant 0 : i32
    %c0_i32_1 = arith.constant 0 : i32
    return %c0_i32, %c0_i32_0 : i32, i32
  }
  func.func @transform_11(%arg0: i32) -> (i32, i32) {
    %c0_i32 = arith.constant 0 : i32
    %c0_i32_0 = arith.constant 0 : i32
    %c0_i32_1 = arith.constant 0 : i32
    return %c0_i32, %c0_i32_0 : i32, i32
  }
  func.func @transform_12(%arg0: i32) -> (i32, i32) {
    %c0_i32 = arith.constant 0 : i32
    %c0_i32_0 = arith.constant 0 : i32
    %c0_i32_1 = arith.constant 0 : i32
    return %c0_i32, %c0_i32_0 : i32, i32
  }
  func.func @transform_13(%arg0: i32) -> (i32, i32) {
    %c0_i32 = arith.constant 0 : i32
    %c0_i32_0 = arith.constant 0 : i32
    %c0_i32_1 = arith.constant 0 : i32
    return %c0_i32, %c0_i32_0 : i32, i32
  }
  func.func @transform_14(%arg0: i32) -> (i32, i32) {
    %c0_i32 = arith.constant 0 : i32
    %c0_i32_0 = arith.constant 0 : i32
    %c0_i32_1 = arith.constant 0 : i32
    return %c0_i32, %c0_i32_0 : i32, i32
  }
  func.func @transform_15(%arg0: i32) -> (i32, i32) {
    %c0_i32 = arith.constant 0 : i32
    %c0_i32_0 = arith.constant 0 : i32
    %c0_i32_1 = arith.constant 0 : i32
    return %c0_i32, %c0_i32_0 : i32, i32
  }
  func.func @transform_16(%arg0: i32) -> (i32, i32) {
    %c0_i32 = arith.constant 0 : i32
    %c0_i32_0 = arith.constant 0 : i32
    %c0_i32_1 = arith.constant 0 : i32
    return %c0_i32, %c0_i32_0 : i32, i32
  }
  func.func @transform_17(%arg0: i32) -> (i32, i32) {
    %c0_i32 = arith.constant 0 : i32
    %c0_i32_0 = arith.constant 0 : i32
    %c0_i32_1 = arith.constant 0 : i32
    return %c0_i32, %c0_i32_0 : i32, i32
  }
  func.func @transform_18(%arg0: i32) -> (i32, i32) {
    %c0_i32 = arith.constant 0 : i32
    %c0_i32_0 = arith.constant 0 : i32
    %c0_i32_1 = arith.constant 0 : i32
    return %c0_i32, %c0_i32_0 : i32, i32
  }
  func.func @transform_19(%arg0: i32) -> (i32, i32, i32) {
    %c0_i32 = arith.constant 0 : i32
    %c0_i32_0 = arith.constant 0 : i32
    %c0_i32_1 = arith.constant 0 : i32
    return %arg0, %c0_i32, %c0_i32_0 : i32, i32, i32
  }
}

</mosaic_0001>

<llo_original>
// kernel: tpu_custom_call.1
$region0: #{tpu_custom_call.1}
  #allocation0 [shape = 'u32[]', space=smem, size = 0x4, offset = 0x4, fixed_abs, tag = 'smem constant byte address 0x4 - core index']
  #allocation1 [shape = 'u32[144,128]{1,0:T(1,128)}', space=vmem, size = 0x12000, scoped, tag = 'internal scratch']
  %s0 = inlined_call_operand.hbm [shape: f32[2,16,32], index: 0, kind: input, shape index: {}]
  %s1 = inlined_call_operand.hbm [shape: f32[2,1,16], index: 1, kind: input, shape index: {}]
  %s2 = inlined_call_operand.hbm [shape: f32[2,16,1], index: 2, kind: input, shape index: {}]
  %s3 = inlined_call_operand.hbm [shape: f32[32,96], index: 3, kind: input, shape index: {}]
  %s4 = inlined_call_operand.hbm [shape: f32[1,96], index: 4, kind: input, shape index: {}]
  %s5 = inlined_call_operand.hbm [shape: f32[32,32], index: 5, kind: input, shape index: {}]
  %s6 = inlined_call_operand.hbm [shape: f32[1,32], index: 6, kind: input, shape index: {}]
  %s7 = inlined_call_operand.hbm [shape: f32[1,32], index: 7, kind: input, shape index: {}]
  %s8 = inlined_call_operand.hbm [shape: f32[1,32], index: 8, kind: input, shape index: {}]
  %s9 = inlined_call_operand.hbm [shape: f32[3,32], index: 9, kind: input, shape index: {}]
  %s10 = inlined_call_operand.hbm [shape: f32[1,32], index: 10, kind: input, shape index: {}]
  %s11 = inlined_call_operand.hbm [shape: f32[32,64], index: 11, kind: input, shape index: {}]
  %s12 = inlined_call_operand.hbm [shape: f32[1,64], index: 12, kind: input, shape index: {}]
  %s13 = inlined_call_operand.hbm [shape: f32[3,64], index: 13, kind: input, shape index: {}]
  %s14 = inlined_call_operand.hbm [shape: f32[1,64], index: 14, kind: input, shape index: {}]
  %s15 = inlined_call_operand.hbm [shape: f32[64,32], index: 15, kind: input, shape index: {}]
  %s16 = inlined_call_operand.hbm [shape: f32[1,32], index: 16, kind: input, shape index: {}]
  %s17 = inlined_call_operand.hbm [shape: f32[1,32], index: 17, kind: input, shape index: {}]
  %s18 = inlined_call_operand.hbm [shape: f32[1,32], index: 18, kind: input, shape index: {}]
  %s19 = inlined_call_operand.hbm [shape: f32[2,16,32], index: 19, kind: output, shape index: {}]
  %s20 = sld [smem:[#allocation0]]
  $region185: #{tpu_custom_call.1} parent=0
    _
  %s22 = ssub.s32 1, %s20
  %s23 = scalar_select 0, %s22, %s20
  $region1: #{tpu_custom_call.1} parent=0
    #allocation2 [shape = 'u8[16384]{0}', space=vmem, size = 0x4000, scoped, tag = 'input window, operand 0']
    #allocation3 [shape = 's32[2]{0}', space=sflag, size = 0x8, scoped, tag = 'scoped memory for tpu_custom_call.1']
    #allocation4 [shape = 's32[2]{0}', space=sflag, size = 0x8, scoped, tag = 'scoped memory for tpu_custom_call.1']
    #allocation5 [shape = 'u8[1024]{0}', space=vmem, size = 0x400, scoped, tag = 'input window, operand 1']
    #allocation6 [shape = 's32[2]{0}', space=sflag, size = 0x8, scoped, tag = 'scoped memory for tpu_custom_call.1']
    #allocation7 [shape = 'u8[16384]{0}', space=vmem, size = 0x4000, scoped, tag = 'input window, operand 2']
    #allocation8 [shape = 'u8[16384]{0}', space=vmem, size = 0x4000, scoped, tag = 'input window, operand 3, single buffered']
    #allocation9 [shape = 's32[1]{0}', space=sflag, size = 0x4, scoped, tag = 'scoped memory for tpu_custom_call.1']
    #allocation10 [shape = 'u8[512]{0}', space=vmem, size = 0x400, scoped, tag = 'input window, operand 4, single buffered']
    #allocation11 [shape = 'u8[16384]{0}', space=vmem, size = 0x4000, scoped, tag = 'input window, operand 5, single buffered']
    #allocation12 [shape = 's32[1]{0}', space=sflag, size = 0x4, scoped, tag = 'scoped memory for tpu_custom_call.1']
    #allocation13 [shape = 'u8[512]{0}', space=vmem, size = 0x400, scoped, tag = 'input window, operand 6, single buffered']
    #allocation14 [shape = 'u8[512]{0}', space=vmem, size = 0x400, scoped, tag = 'input window, operand 7, single buffered']
    #allocation15 [shape = 's32[1]{0}', space=sflag, size = 0x4, scoped, tag = 'scoped memory for tpu_custom_call.1']
    #allocation16 [shape = 'u8[512]{0}', space=vmem, size = 0x400, scoped, tag = 'input window, operand 8, single buffered']
    #allocation17 [shape = 'u8[2048]{0}', space=vmem, size = 0x800, scoped, tag = 'input window, operand 9, single buffered']
    #allocation18 [shape = 's32[1]{0}', space=sflag, size = 0x4, scoped, tag = 'scoped memory for tpu_custom_call.1']
    #allocation19 [shape = 'u8[512]{0}', space=vmem, size = 0x400, scoped, tag = 'input window, operand 10, single buffered']
    #allocation20 [shape = 'u8[16384]{0}', space=vmem, size = 0x4000, scoped, tag = 'input window, operand 11, single buffered']
    #allocation21 [shape = 's32[1]{0}', space=sflag, size = 0x4, scoped, tag = 'scoped memory for tpu_custom_call.1']
    #allocation22 [shape = 'u8[512]{0}', space=vmem, size = 0x400, scoped, tag = 'input window, operand 12, single buffered']
    #allocation23 [shape = 'u8[2048]{0}', space=vmem, size = 0x800, scoped, tag = 'input window, operand 13, single buffered']
    #allocation24 [shape = 's32[1]{0}', space=sflag, size = 0x4, scoped, tag = 'scoped memory for tpu_custom_call.1']
    #allocation25 [shape = 'u8[512]{0}', space=vmem, size = 0x400, scoped, tag = 'input window, operand 14, single buffered']
    #allocation26 [shape = 'u8[32768]{0}', space=vmem, size = 0x8000, scoped, tag = 'input window, operand 15, single buffered']
    #allocation27 [shape = 's32[1]{0}', space=sflag, size = 0x4, scoped, tag = 'scoped memory for tpu_custom_call.1']
    #allocation28 [shape = 'u8[512]{0}', space=vmem, size = 0x400, scoped, tag = 'input window, operand 16, single buffered']
    #allocation29 [shape = 'u8[512]{0}', space=vmem, size = 0x400, scoped, tag = 'input window, operand 17, single buffered']
    #allocation30 [shape = 's32[1]{0}', space=sflag, size = 0x4, scoped, tag = 'scoped memory for tpu_custom_call.1']
    #allocation31 [shape = 'u8[512]{0}', space=vmem, size = 0x400, scoped, tag = 'input window, operand 18, single buffered']
    #allocation32 [shape = 'u8[16384]{0}', space=vmem, size = 0x4000, scoped, tag = 'output window, operand 0']
    %24 = vsyncpa [#allocation3], 0
    %s25 = scalar_lea.sflag [#allocation3], 1
    %26 = vsyncpa %s25, 0
    %27 = vsyncpa [#allocation6], 0
    %s28 = scalar_lea.sflag [#allocation6], 1
    %29 = vsyncpa %s28, 0
    %30 = vsyncpa [#allocation9], 0
    %31 = vsyncpa [#allocation12], 0
    %32 = vsyncpa [#allocation15], 0
    %33 = vsyncpa [#allocation18], 0
    %34 = vsyncpa [#allocation21], 0
    %35 = vsyncpa [#allocation24], 0
    %36 = vsyncpa [#allocation27], 0
    %37 = vsyncpa [#allocation30], 0
    %38 = vsyncpa [#allocation4], 0
    %s39 = scalar_lea.sflag [#allocation4], 1
    %40 = vsyncpa %s39, 0
    loop: start=0, step=1, limit=4
    $region2: #{tpu_custom_call.1} parent=1 // loop_pre_header
      _
    $region3: #{tpu_custom_call.1} parent=1 // loop_header
      %s42 = sphi 0, %s46
      %p43 = scmp.ge.s32.totalorder %s42, 4
      %s52 = sphi 0, %s54
      %s55 = sphi 0, %s52
      %s56 = sphi 0, %s55
      %s72 = sphi 0, %s56
      %s78 = sphi 0, %s80
      %s81 = sphi 0, %s78
      %s82 = sphi 0, %s81
      %s98 = sphi 0, %s82
      %s104 = sphi 0, %s106
      %s107 = sphi 0, %s104
      %s108 = sphi 0, %s107
      %s124 = sphi 0, %s108
      %s128 = sphi 0, %s128
      %s130 = sphi 0, %s128
      %s131 = sphi 0, %s130
      %s145 = sphi 0, %s131
      %s149 = sphi 0, %s149
      %s151 = sphi 0, %s149
      %s152 = sphi 0, %s151
      %s166 = sphi 0, %s152
      %s170 = sphi 0, %s170
      %s172 = sphi 0, %s170
      %s173 = sphi 0, %s172
      %s187 = sphi 0, %s173
      %s191 = sphi 0, %s191
      %s193 = sphi 0, %s191
      %s194 = sphi 0, %s193
      %s208 = sphi 0, %s194
      %s212 = sphi 0, %s212
      %s214 = sphi 0, %s212
      %s215 = sphi 0, %s214
      %s229 = sphi 0, %s215
      %s233 = sphi 0, %s233
      %s235 = sphi 0, %s233
      %s236 = sphi 0, %s235
      %s250 = sphi 0, %s236
      %s254 = sphi 0, %s254
      %s256 = sphi 0, %s254
      %s257 = sphi 0, %s256
      %s271 = sphi 0, %s257
      %s275 = sphi 0, %s275
      %s277 = sphi 0, %s275
      %s278 = sphi 0, %s277
      %s292 = sphi 0, %s278
      %s296 = sphi 0, %s296
      %s298 = sphi 0, %s296
      %s299 = sphi 0, %s298
      %s313 = sphi 0, %s299
      %s317 = sphi 0, %s317
      %s319 = sphi 0, %s317
      %s320 = sphi 0, %s319
      %s334 = sphi 0, %s320
      %s338 = sphi 0, %s338
      %s340 = sphi 0, %s338
      %s341 = sphi 0, %s340
      %s355 = sphi 0, %s341
      %s359 = sphi 0, %s359
      %s361 = sphi 0, %s359
      %s362 = sphi 0, %s361
      %s376 = sphi 0, %s362
      %s380 = sphi 0, %s380
      %s382 = sphi 0, %s380
      %s383 = sphi 0, %s382
      %s397 = sphi 0, %s383
      %s401 = sphi 0, %s401
      %s403 = sphi 0, %s401
      %s404 = sphi 0, %s403
      %s418 = sphi 0, %s404
      %s422 = sphi 0, %s422
      %s424 = sphi 0, %s422
      %s425 = sphi 0, %s424
      %s439 = sphi 0, %s425
      %s443 = sphi 0, %s443
      %s445 = sphi 0, %s443
      %s446 = sphi 0, %s445
      %s460 = sphi 0, %s446
      %s466 = sphi 0, %s468
      %s469 = sphi 0, %s466
      %s470 = sphi 0, %s469
      %s486 = sphi 0, %s470
    $region4: #{tpu_custom_call.1} parent=1 // loop_header_branch
      %45 = sbr.rel (%p43) target = $region8
    $region5: #{tpu_custom_call.1} parent=1 // loop_body
      %s47 = ssub.s32 %s42, 1
      %s48 = ssub.s32 %s42, 2
      %s49 = sadd.s32 %s42, 1
      %s50 = ssub.s32 %s42, %s49
      %p51 = scmp.eq.s32.totalorder %s50, 0
      %s53 = sadd.s32 %s52, 1
      %s54 = scalar_select %p51, %s52, %s53
      %p57 = pneg %p51
      %p58 = scmp.eq.s32.totalorder %s42, 1
      %p59 = por %p57, %p58
      %p60 = scmp.ne.s32.totalorder %s52, %s55
      %p61 = scmp.eq.s32.totalorder %s42, 0
      %p62 = por %p60, %p61
      %p63 = scmp.ne.s32.totalorder %s52, %s55
      %p64 = scmp.eq.s32.totalorder %s47, 1
      %p65 = por %p63, %p64
      %p66 = scmp.ne.s32.totalorder %s55, %s56
      %p67 = scmp.eq.s32.totalorder %s47, 0
      %p68 = por %p66, %p67
      %p69 = scmp.ne.s32.totalorder %s55, %s56
      %p70 = scmp.eq.s32.totalorder %s48, 1
      %p71 = por %p69, %p70
      %p73 = scmp.ne.s32.totalorder %s56, %s72
      %p74 = scmp.eq.s32.totalorder %s48, 0
      %p75 = por %p73, %p74
      %s76 = ssub.s32 %s42, %s49
      %p77 = scmp.eq.s32.totalorder %s76, 0
      %s79 = sadd.s32 %s78, 1
      %s80 = scalar_select %p77, %s78, %s79
      %p83 = pneg %p77
      %p84 = scmp.eq.s32.totalorder %s42, 1
      %p85 = por %p83, %p84
      %p86 = scmp.ne.s32.totalorder %s78, %s81
      %p87 = scmp.eq.s32.totalorder %s42, 0
      %p88 = por %p86, %p87
      %p89 = scmp.ne.s32.totalorder %s78, %s81
      %p90 = scmp.eq.s32.totalorder %s47, 1
      %p91 = por %p89, %p90
      %p92 = scmp.ne.s32.totalorder %s81, %s82
      %p93 = scmp.eq.s32.totalorder %s47, 0
      %p94 = por %p92, %p93
      %p95 = scmp.ne.s32.totalorder %s81, %s82
      %p96 = scmp.eq.s32.totalorder %s48, 1
      %p97 = por %p95, %p96
      %p99 = scmp.ne.s32.totalorder %s82, %s98
      %p100 = scmp.eq.s32.totalorder %s48, 0
      %p101 = por %p99, %p100
      %s102 = ssub.s32 %s42, %s49
      %p103 = scmp.eq.s32.totalorder %s102, 0
      %s105 = sadd.s32 %s104, 1
      %s106 = scalar_select %p103, %s104, %s105
      %p109 = pneg %p103
      %p110 = scmp.eq.s32.totalorder %s42, 1
      %p111 = por %p109, %p110
      %p112 = scmp.ne.s32.totalorder %s104, %s107
      %p113 = scmp.eq.s32.totalorder %s42, 0
      %p114 = por %p112, %p113
      %p115 = scmp.ne.s32.totalorder %s104, %s107
      %p116 = scmp.eq.s32.totalorder %s47, 1
      %p117 = por %p115, %p116
      %p118 = scmp.ne.s32.totalorder %s107, %s108
      %p119 = scmp.eq.s32.totalorder %s47, 0
      %p120 = por %p118, %p119
      %p121 = scmp.ne.s32.totalorder %s107, %s108
      %p122 = scmp.eq.s32.totalorder %s48, 1
      %p123 = por %p121, %p122
      %p125 = scmp.ne.s32.totalorder %s108, %s124
      %p126 = scmp.eq.s32.totalorder %s48, 0
      %p127 = por %p125, %p126
      %s129 = sadd.s32 %s128, 1
      %p132 = scmp.eq.s32.totalorder %s42, 1
      %p133 = scmp.ne.s32.totalorder %s128, %s130
      %p134 = scmp.eq.s32.totalorder %s42, 0
      %p135 = por %p133, %p134
      %p136 = scmp.ne.s32.totalorder %s128, %s130
      %p137 = scmp.eq.s32.totalorder %s47, 1
      %p138 = por %p136, %p137
      %p139 = scmp.ne.s32.totalorder %s130, %s131
      %p140 = scmp.eq.s32.totalorder %s47, 0
      %p141 = por %p139, %p140
      %p142 = scmp.ne.s32.totalorder %s130, %s131
      %p143 = scmp.eq.s32.totalorder %s48, 1
      %p144 = por %p142, %p143
      %p146 = scmp.ne.s32.totalorder %s131, %s145
      %p147 = scmp.eq.s32.totalorder %s48, 0
      %p148 = por %p146, %p147
      %s150 = sadd.s32 %s149, 1
      %p153 = scmp.eq.s32.totalorder %s42, 1
      %p154 = scmp.ne.s32.totalorder %s149, %s151
      %p155 = scmp.eq.s32.totalorder %s42, 0
      %p156 = por %p154, %p155
      %p157 = scmp.ne.s32.totalorder %s149, %s151
      %p158 = scmp.eq.s32.totalorder %s47, 1
      %p159 = por %p157, %p158
      %p160 = scmp.ne.s32.totalorder %s151, %s152
      %p161 = scmp.eq.s32.totalorder %s47, 0
      %p162 = por %p160, %p161
      %p163 = scmp.ne.s32.totalorder %s151, %s152
      %p164 = scmp.eq.s32.totalorder %s48, 1
      %p165 = por %p163, %p164
      %p167 = scmp.ne.s32.totalorder %s152, %s166
      %p168 = scmp.eq.s32.totalorder %s48, 0
      %p169 = por %p167, %p168
      %s171 = sadd.s32 %s170, 1
      %p174 = scmp.eq.s32.totalorder %s42, 1
      %p175 = scmp.ne.s32.totalorder %s170, %s172
      %p176 = scmp.eq.s32.totalorder %s42, 0
      %p177 = por %p175, %p176
      %p178 = scmp.ne.s32.totalorder %s170, %s172
      %p179 = scmp.eq.s32.totalorder %s47, 1
      %p180 = por %p178, %p179
      %p181 = scmp.ne.s32.totalorder %s172, %s173
      %p182 = scmp.eq.s32.totalorder %s47, 0
      %p183 = por %p181, %p182
      %p184 = scmp.ne.s32.totalorder %s172, %s173
      %p185 = scmp.eq.s32.totalorder %s48, 1
      %p186 = por %p184, %p185
      %p188 = scmp.ne.s32.totalorder %s173, %s187
      %p189 = scmp.eq.s32.totalorder %s48, 0
      %p190 = por %p188, %p189
      %s192 = sadd.s32 %s191, 1
      %p195 = scmp.eq.s32.totalorder %s42, 1
      %p196 = scmp.ne.s32.totalorder %s191, %s193
      %p197 = scmp.eq.s32.totalorder %s42, 0
      %p198 = por %p196, %p197
      %p199 = scmp.ne.s32.totalorder %s191, %s193
      %p200 = scmp.eq.s32.totalorder %s47, 1
      %p201 = por %p199, %p200
      %p202 = scmp.ne.s32.totalorder %s193, %s194
      %p203 = scmp.eq.s32.totalorder %s47, 0
      %p204 = por %p202, %p203
      %p205 = scmp.ne.s32.totalorder %s193, %s194
      %p206 = scmp.eq.s32.totalorder %s48, 1
      %p207 = por %p205, %p206
      %p209 = scmp.ne.s32.totalorder %s194, %s208
      %p210 = scmp.eq.s32.totalorder %s48, 0
      %p211 = por %p209, %p210
      %s213 = sadd.s32 %s212, 1
      %p216 = scmp.eq.s32.totalorder %s42, 1
      %p217 = scmp.ne.s32.totalorder %s212, %s214
      %p218 = scmp.eq.s32.totalorder %s42, 0
      %p219 = por %p217, %p218
      %p220 = scmp.ne.s32.totalorder %s212, %s214
      %p221 = scmp.eq.s32.totalorder %s47, 1
      %p222 = por %p220, %p221
      %p223 = scmp.ne.s32.totalorder %s214, %s215
      %p224 = scmp.eq.s32.totalorder %s47, 0
      %p225 = por %p223, %p224
      %p226 = scmp.ne.s32.totalorder %s214, %s215
      %p227 = scmp.eq.s32.totalorder %s48, 1
      %p228 = por %p226, %p227
      %p230 = scmp.ne.s32.totalorder %s215, %s229
      %p231 = scmp.eq.s32.totalorder %s48, 0
      %p232 = por %p230, %p231
      %s234 = sadd.s32 %s233, 1
      %p237 = scmp.eq.s32.totalorder %s42, 1
      %p238 = scmp.ne.s32.totalorder %s233, %s235
      %p239 = scmp.eq.s32.totalorder %s42, 0
      %p240 = por %p238, %p239
      %p241 = scmp.ne.s32.totalorder %s233, %s235
      %p242 = scmp.eq.s32.totalorder %s47, 1
      %p243 = por %p241, %p242
      %p244 = scmp.ne.s32.totalorder %s235, %s236
      %p245 = scmp.eq.s32.totalorder %s47, 0
      %p246 = por %p244, %p245
      %p247 = scmp.ne.s32.totalorder %s235, %s236
      %p248 = scmp.eq.s32.totalorder %s48, 1
      %p249 = por %p247, %p248
      %p251 = scmp.ne.s32.totalorder %s236, %s250
      %p252 = scmp.eq.s32.totalorder %s48, 0
      %p253 = por %p251, %p252
      %s255 = sadd.s32 %s254, 1
      %p258 = scmp.eq.s32.totalorder %s42, 1
      %p259 = scmp.ne.s32.totalorder %s254, %s256
      %p260 = scmp.eq.s32.totalorder %s42, 0
      %p261 = por %p259, %p260
      %p262 = scmp.ne.s32.totalorder %s254, %s256
      %p263 = scmp.eq.s32.totalorder %s47, 1
      %p264 = por %p262, %p263
      %p265 = scmp.ne.s32.totalorder %s256, %s257
      %p266 = scmp.eq.s32.totalorder %s47, 0
      %p267 = por %p265, %p266
      %p268 = scmp.ne.s32.totalorder %s256, %s257
      %p269 = scmp.eq.s32.totalorder %s48, 1
      %p270 = por %p268, %p269
      %p272 = scmp.ne.s32.totalorder %s257, %s271
      %p273 = scmp.eq.s32.totalorder %s48, 0
      %p274 = por %p272, %p273
      %s276 = sadd.s32 %s275, 1
      %p279 = scmp.eq.s32.totalorder %s42, 1
      %p280 = scmp.ne.s32.totalorder %s275, %s277
      %p281 = scmp.eq.s32.totalorder %s42, 0
      %p282 = por %p280, %p281
      %p283 = scmp.ne.s32.totalorder %s275, %s277
      %p284 = scmp.eq.s32.totalorder %s47, 1
      %p285 = por %p283, %p284
      %p286 = scmp.ne.s32.totalorder %s277, %s278
      %p287 = scmp.eq.s32.totalorder %s47, 0
      %p288 = por %p286, %p287
      %p289 = scmp.ne.s32.totalorder %s277, %s278
      %p290 = scmp.eq.s32.totalorder %s48, 1
      %p291 = por %p289, %p290
      %p293 = scmp.ne.s32.totalorder %s278, %s292
      %p294 = scmp.eq.s32.totalorder %s48, 0
      %p295 = por %p293, %p294
      %s297 = sadd.s32 %s296, 1
      %p300 = scmp.eq.s32.totalorder %s42, 1
      %p301 = scmp.ne.s32.totalorder %s296, %s298
      %p302 = scmp.eq.s32.totalorder %s42, 0
      %p303 = por %p301, %p302
      %p304 = scmp.ne.s32.totalorder %s296, %s298
      %p305 = scmp.eq.s32.totalorder %s47, 1
      %p306 = por %p304, %p305
      %p307 = scmp.ne.s32.totalorder %s298, %s299
      %p308 = scmp.eq.s32.totalorder %s47, 0
      %p309 = por %p307, %p308
      %p310 = scmp.ne.s32.totalorder %s298, %s299
      %p311 = scmp.eq.s32.totalorder %s48, 1
      %p312 = por %p310, %p311
      %p314 = scmp.ne.s32.totalorder %s299, %s313
      %p315 = scmp.eq.s32.totalorder %s48, 0
      %p316 = por %p314, %p315
      %s318 = sadd.s32 %s317, 1
      %p321 = scmp.eq.s32.totalorder %s42, 1
      %p322 = scmp.ne.s32.totalorder %s317, %s319
      %p323 = scmp.eq.s32.totalorder %s42, 0
      %p324 = por %p322, %p323
      %p325 = scmp.ne.s32.totalorder %s317, %s319
      %p326 = scmp.eq.s32.totalorder %s47, 1
      %p327 = por %p325, %p326
      %p328 = scmp.ne.s32.totalorder %s319, %s320
      %p329 = scmp.eq.s32.totalorder %s47, 0
      %p330 = por %p328, %p329
      %p331 = scmp.ne.s32.totalorder %s319, %s320
      %p332 = scmp.eq.s32.totalorder %s48, 1
      %p333 = por %p331, %p332
      %p335 = scmp.ne.s32.totalorder %s320, %s334
      %p336 = scmp.eq.s32.totalorder %s48, 0
      %p337 = por %p335, %p336
      %s339 = sadd.s32 %s338, 1
      %p342 = scmp.eq.s32.totalorder %s42, 1
      %p343 = scmp.ne.s32.totalorder %s338, %s340
      %p344 = scmp.eq.s32.totalorder %s42, 0
      %p345 = por %p343, %p344
      %p346 = scmp.ne.s32.totalorder %s338, %s340
      %p347 = scmp.eq.s32.totalorder %s47, 1
      %p348 = por %p346, %p347
      %p349 = scmp.ne.s32.totalorder %s340, %s341
      %p350 = scmp.eq.s32.totalorder %s47, 0
      %p351 = por %p349, %p350
      %p352 = scmp.ne.s32.totalorder %s340, %s341
      %p353 = scmp.eq.s32.totalorder %s48, 1
      %p354 = por %p352, %p353
      %p356 = scmp.ne.s32.totalorder %s341, %s355
      %p357 = scmp.eq.s32.totalorder %s48, 0
      %p358 = por %p356, %p357
      %s360 = sadd.s32 %s359, 1
      %p363 = scmp.eq.s32.totalorder %s42, 1
      %p364 = scmp.ne.s32.totalorder %s359, %s361
      %p365 = scmp.eq.s32.totalorder %s42, 0
      %p366 = por %p364, %p365
      %p367 = scmp.ne.s32.totalorder %s359, %s361
      %p368 = scmp.eq.s32.totalorder %s47, 1
      %p369 = por %p367, %p368
      %p370 = scmp.ne.s32.totalorder %s361, %s362
      %p371 = scmp.eq.s32.totalorder %s47, 0
      %p372 = por %p370, %p371
      %p373 = scmp.ne.s32.totalorder %s361, %s362
      %p374 = scmp.eq.s32.totalorder %s48, 1
      %p375 = por %p373, %p374
      %p377 = scmp.ne.s32.totalorder %s362, %s376
      %p378 = scmp.eq.s32.totalorder %s48, 0
      %p379 = por %p377, %p378
      %s381 = sadd.s32 %s380, 1
      %p384 = scmp.eq.s32.totalorder %s42, 1
      %p385 = scmp.ne.s32.totalorder %s380, %s382
      %p386 = scmp.eq.s32.totalorder %s42, 0
      %p387 = por %p385, %p386
      %p388 = scmp.ne.s32.totalorder %s380, %s382
      %p389 = scmp.eq.s32.totalorder %s47, 1
      %p390 = por %p388, %p389
      %p391 = scmp.ne.s32.totalorder %s382, %s383
      %p392 = scmp.eq.s32.totalorder %s47, 0
      %p393 = por %p391, %p392
      %p394 = scmp.ne.s32.totalorder %s382, %s383
      %p395 = scmp.eq.s32.totalorder %s48, 1
      %p396 = por %p394, %p395
      %p398 = scmp.ne.s32.totalorder %s383, %s397
      %p399 = scmp.eq.s32.totalorder %s48, 0
      %p400 = por %p398, %p399
      %s402 = sadd.s32 %s401, 1
      %p405 = scmp.eq.s32.totalorder %s42, 1
      %p406 = scmp.ne.s32.totalorder %s401, %s403
      %p407 = scmp.eq.s32.totalorder %s42, 0
      %p408 = por %p406, %p407
      %p409 = scmp.ne.s32.totalorder %s401, %s403
      %p410 = scmp.eq.s32.totalorder %s47, 1
      %p411 = por %p409, %p410
      %p412 = scmp.ne.s32.totalorder %s403, %s404
      %p413 = scmp.eq.s32.totalorder %s47, 0
      %p414 = por %p412, %p413
      %p415 = scmp.ne.s32.totalorder %s403, %s404
      %p416 = scmp.eq.s32.totalorder %s48, 1
      %p417 = por %p415, %p416
      %p419 = scmp.ne.s32.totalorder %s404, %s418
      %p420 = scmp.eq.s32.totalorder %s48, 0
      %p421 = por %p419, %p420
      %s423 = sadd.s32 %s422, 1
      %p426 = scmp.eq.s32.totalorder %s42, 1
      %p427 = scmp.ne.s32.totalorder %s422, %s424
      %p428 = scmp.eq.s32.totalorder %s42, 0
      %p429 = por %p427, %p428
      %p430 = scmp.ne.s32.totalorder %s422, %s424
      %p431 = scmp.eq.s32.totalorder %s47, 1
      %p432 = por %p430, %p431
      %p433 = scmp.ne.s32.totalorder %s424, %s425
      %p434 = scmp.eq.s32.totalorder %s47, 0
      %p435 = por %p433, %p434
      %p436 = scmp.ne.s32.totalorder %s424, %s425
      %p437 = scmp.eq.s32.totalorder %s48, 1
      %p438 = por %p436, %p437
      %p440 = scmp.ne.s32.totalorder %s425, %s439
      %p441 = scmp.eq.s32.totalorder %s48, 0
      %p442 = por %p440, %p441
      %s444 = sadd.s32 %s443, 1
      %p447 = scmp.eq.s32.totalorder %s42, 1
      %p448 = scmp.ne.s32.totalorder %s443, %s445
      %p449 = scmp.eq.s32.totalorder %s42, 0
      %p450 = por %p448, %p449
      %p451 = scmp.ne.s32.totalorder %s443, %s445
      %p452 = scmp.eq.s32.totalorder %s47, 1
      %p453 = por %p451, %p452
      %p454 = scmp.ne.s32.totalorder %s445, %s446
      %p455 = scmp.eq.s32.totalorder %s47, 0
      %p456 = por %p454, %p455
      %p457 = scmp.ne.s32.totalorder %s445, %s446
      %p458 = scmp.eq.s32.totalorder %s48, 1
      %p459 = por %p457, %p458
      %p461 = scmp.ne.s32.totalorder %s446, %s460
      %p462 = scmp.eq.s32.totalorder %s48, 0
      %p463 = por %p461, %p462
      %s464 = ssub.s32 %s42, %s49
      %p465 = scmp.eq.s32.totalorder %s464, 0
      %s467 = sadd.s32 %s466, 1
      %s468 = scalar_select %p465, %s466, %s467
      %p471 = pneg %p465
      %p472 = scmp.eq.s32.totalorder %s42, 1
      %p473 = por %p471, %p472
      %p474 = scmp.ne.s32.totalorder %s466, %s469
      %p475 = scmp.eq.s32.totalorder %s42, 0
      %p476 = por %p474, %p475
      %p477 = scmp.ne.s32.totalorder %s466, %s469
      %p478 = scmp.eq.s32.totalorder %s47, 1
      %p479 = por %p477, %p478
      %p480 = scmp.ne.s32.totalorder %s469, %s470
      %p481 = scmp.eq.s32.totalorder %s47, 0
      %p482 = por %p480, %p481
      %p483 = scmp.ne.s32.totalorder %s469, %s470
      %p484 = scmp.eq.s32.totalorder %s48, 1
      %p485 = por %p483, %p484
      %p487 = scmp.ne.s32.totalorder %s470, %s486
      %p488 = scmp.eq.s32.totalorder %s48, 0
      %p489 = por %p487, %p488
      %p490 = scmp.le.s32.totalorder 1, %s42
      %p491 = scmp.lt.s32.totalorder %s42, 3
      %p492 = pnand %p490, %p491
      %p493 = pneg %p492
      // Predicated region
      $region9: #{tpu_custom_call.1} parent=5 // pred_check
        _
      $region10: #{tpu_custom_call.1} parent=5 // pred_check_branch
        %495 = sbr.rel (%p492) target = $region12
      $region11: #{tpu_custom_call.1} parent=5 // pred_region
        %s496 = ssub.s32 %s42, 1
        // Predicated region
        $region13: #{tpu_custom_call.1} parent=11 // pred_check
          %p497 = pneg %p141
        $region14: #{tpu_custom_call.1} parent=11 // pred_check_branch
          %499 = sbr.rel (%p497) target = $region16
        $region15: #{tpu_custom_call.1} parent=11 // pred_region
          %s501 = ssub.s32 512, 512
          %502 = vsyncadd [#allocation9], %s501
          %s503 = sshll.u32 [#allocation8], 4
          %s504 = int_to_ptr.vmem [resolvable:$true] %s503
          %509 = dma.hbm_to_vmem [thread:$0]  %s3, 512, %s504, [#allocation9], 128, 128, 8
        $region16: #{tpu_custom_call.1} parent=11 // pred_fallthru
          _
        // Predicated region
        $region17: #{tpu_custom_call.1} parent=11 // pred_check
          %p510 = pneg %p162
        $region18: #{tpu_custom_call.1} parent=11 // pred_check_branch
          %512 = sbr.rel (%p510) target = $region20
        $region19: #{tpu_custom_call.1} parent=11 // pred_region
          %s514 = ssub.s32 16, 16
          %515 = vsyncadd [#allocation9], %s514
          %s517 = sshll.u32 [#allocation10], 4
          %s518 = int_to_ptr.vmem [resolvable:$true] %s517
          %520 = dma.hbm_to_vmem [thread:$0]  %s4, 16, %s518, [#allocation9]
        $region20: #{tpu_custom_call.1} parent=11 // pred_fallthru
          _
        // Predicated region
        $region21: #{tpu_custom_call.1} parent=11 // pred_check
          %p521 = pneg %p183
        $region22: #{tpu_custom_call.1} parent=11 // pred_check_branch
          %523 = sbr.rel (%p521) target = $region24
        $region23: #{tpu_custom_call.1} parent=11 // pred_region
          %s525 = ssub.s32 512, 512
          %526 = vsyncadd [#allocation12], %s525
          %s527 = sshll.u32 [#allocation11], 4
          %s528 = int_to_ptr.vmem [resolvable:$true] %s527
          %533 = dma.hbm_to_vmem [thread:$0]  %s5, 512, %s528, [#allocation12], 128, 128, 8
        $region24: #{tpu_custom_call.1} parent=11 // pred_fallthru
          _
        // Predicated region
        $region25: #{tpu_custom_call.1} parent=11 // pred_check
          %p534 = pneg %p204
        $region26: #{tpu_custom_call.1} parent=11 // pred_check_branch
          %536 = sbr.rel (%p534) target = $region28
        $region27: #{tpu_custom_call.1} parent=11 // pred_region
          %s538 = ssub.s32 16, 16
          %539 = vsyncadd [#allocation12], %s538
          %s541 = sshll.u32 [#allocation13], 4
          %s542 = int_to_ptr.vmem [resolvable:$true] %s541
          %544 = dma.hbm_to_vmem [thread:$0]  %s6, 16, %s542, [#allocation12]
        $region28: #{tpu_custom_call.1} parent=11 // pred_fallthru
          _
        // Predicated region
        $region29: #{tpu_custom_call.1} parent=11 // pred_check
          %p545 = pneg %p225
        $region30: #{tpu_custom_call.1} parent=11 // pred_check_branch
          %547 = sbr.rel (%p545) target = $region32
        $region31: #{tpu_custom_call.1} parent=11 // pred_region
          %s549 = ssub.s32 16, 16
          %550 = vsyncadd [#allocation15], %s549
          %s552 = sshll.u32 [#allocation14], 4
          %s553 = int_to_ptr.vmem [resolvable:$true] %s552
          %555 = dma.hbm_to_vmem [thread:$0]  %s7, 16, %s553, [#allocation15]
        $region32: #{tpu_custom_call.1} parent=11 // pred_fallthru
          _
        // Predicated region
        $region33: #{tpu_custom_call.1} parent=11 // pred_check
          %p556 = pneg %p246
        $region34: #{tpu_custom_call.1} parent=11 // pred_check_branch
          %558 = sbr.rel (%p556) target = $region36
        $region35: #{tpu_custom_call.1} parent=11 // pred_region
          %s560 = ssub.s32 16, 16
          %561 = vsyncadd [#allocation15], %s560
          %s563 = sshll.u32 [#allocation16], 4
          %s564 = int_to_ptr.vmem [resolvable:$true] %s563
          %566 = dma.hbm_to_vmem [thread:$0]  %s8, 16, %s564, [#allocation15]
        $region36: #{tpu_custom_call.1} parent=11 // pred_fallthru
          _
        // Predicated region
        $region37: #{tpu_custom_call.1} parent=11 // pred_check
          %p567 = pneg %p267
        $region38: #{tpu_custom_call.1} parent=11 // pred_check_branch
          %569 = sbr.rel (%p567) target = $region40
        $region39: #{tpu_custom_call.1} parent=11 // pred_region
          %s571 = ssub.s32 64, 64
          %572 = vsyncadd [#allocation18], %s571
          %s574 = sshll.u32 [#allocation17], 4
          %s575 = int_to_ptr.vmem [resolvable:$true] %s574
          %577 = dma.hbm_to_vmem [thread:$0]  %s9, 64, %s575, [#allocation18]
        $region40: #{tpu_custom_call.1} parent=11 // pred_fallthru
          _
        // Predicated region
        $region41: #{tpu_custom_call.1} parent=11 // pred_check
          %p578 = pneg %p288
        $region42: #{tpu_custom_call.1} parent=11 // pred_check_branch
          %580 = sbr.rel (%p578) target = $region44
        $region43: #{tpu_custom_call.1} parent=11 // pred_region
          %s582 = ssub.s32 16, 16
          %583 = vsyncadd [#allocation18], %s582
          %s585 = sshll.u32 [#allocation19], 4
          %s586 = int_to_ptr.vmem [resolvable:$true] %s585
          %588 = dma.hbm_to_vmem [thread:$0]  %s10, 16, %s586, [#allocation18]
        $region44: #{tpu_custom_call.1} parent=11 // pred_fallthru
          _
        // Predicated region
        $region45: #{tpu_custom_call.1} parent=11 // pred_check
          %p589 = pneg %p309
        $region46: #{tpu_custom_call.1} parent=11 // pred_check_branch
          %591 = sbr.rel (%p589) target = $region48
        $region47: #{tpu_custom_call.1} parent=11 // pred_region
          %s593 = ssub.s32 512, 512
          %594 = vsyncadd [#allocation21], %s593
          %s595 = sshll.u32 [#allocation20], 4
          %s596 = int_to_ptr.vmem [resolvable:$true] %s595
          %601 = dma.hbm_to_vmem [thread:$0]  %s11, 512, %s596, [#allocation21], 128, 128, 8
        $region48: #{tpu_custom_call.1} parent=11 // pred_fallthru
          _
        // Predicated region
        $region49: #{tpu_custom_call.1} parent=11 // pred_check
          %p602 = pneg %p330
        $region50: #{tpu_custom_call.1} parent=11 // pred_check_branch
          %604 = sbr.rel (%p602) target = $region52
        $region51: #{tpu_custom_call.1} parent=11 // pred_region
          %s606 = ssub.s32 16, 16
          %607 = vsyncadd [#allocation21], %s606
          %s609 = sshll.u32 [#allocation22], 4
          %s610 = int_to_ptr.vmem [resolvable:$true] %s609
          %612 = dma.hbm_to_vmem [thread:$0]  %s12, 16, %s610, [#allocation21]
        $region52: #{tpu_custom_call.1} parent=11 // pred_fallthru
          _
        // Predicated region
        $region53: #{tpu_custom_call.1} parent=11 // pred_check
          %p613 = pneg %p351
        $region54: #{tpu_custom_call.1} parent=11 // pred_check_branch
          %615 = sbr.rel (%p613) target = $region56
        $region55: #{tpu_custom_call.1} parent=11 // pred_region
          %s617 = ssub.s32 64, 64
          %618 = vsyncadd [#allocation24], %s617
          %s620 = sshll.u32 [#allocation23], 4
          %s621 = int_to_ptr.vmem [resolvable:$true] %s620
          %623 = dma.hbm_to_vmem [thread:$0]  %s13, 64, %s621, [#allocation24]
        $region56: #{tpu_custom_call.1} parent=11 // pred_fallthru
          _
        // Predicated region
        $region57: #{tpu_custom_call.1} parent=11 // pred_check
          %p624 = pneg %p372
        $region58: #{tpu_custom_call.1} parent=11 // pred_check_branch
          %626 = sbr.rel (%p624) target = $region60
        $region59: #{tpu_custom_call.1} parent=11 // pred_region
          %s628 = ssub.s32 16, 16
          %629 = vsyncadd [#allocation24], %s628
          %s631 = sshll.u32 [#allocation25], 4
          %s632 = int_to_ptr.vmem [resolvable:$true] %s631
          %634 = dma.hbm_to_vmem [thread:$0]  %s14, 16, %s632, [#allocation24]
        $region60: #{tpu_custom_call.1} parent=11 // pred_fallthru
          _
        // Predicated region
        $region61: #{tpu_custom_call.1} parent=11 // pred_check
          %p635 = pneg %p393
        $region62: #{tpu_custom_call.1} parent=11 // pred_check_branch
          %637 = sbr.rel (%p635) target = $region64
        $region63: #{tpu_custom_call.1} parent=11 // pred_region
          %s639 = ssub.s32 1024, 1024
          %640 = vsyncadd [#allocation27], %s639
          %s641 = sshll.u32 [#allocation26], 4
          %s642 = int_to_ptr.vmem [resolvable:$true] %s641
          %647 = dma.hbm_to_vmem [thread:$0]  %s15, 1024, %s642, [#allocation27], 128, 128, 8
        $region64: #{tpu_custom_call.1} parent=11 // pred_fallthru
          _
        // Predicated region
        $region65: #{tpu_custom_call.1} parent=11 // pred_check
          %p648 = pneg %p414
        $region66: #{tpu_custom_call.1} parent=11 // pred_check_branch
          %650 = sbr.rel (%p648) target = $region68
        $region67: #{tpu_custom_call.1} parent=11 // pred_region
          %s652 = ssub.s32 16, 16
          %653 = vsyncadd [#allocation27], %s652
          %s655 = sshll.u32 [#allocation28], 4
          %s656 = int_to_ptr.vmem [resolvable:$true] %s655
          %658 = dma.hbm_to_vmem [thread:$0]  %s16, 16, %s656, [#allocation27]
        $region68: #{tpu_custom_call.1} parent=11 // pred_fallthru
          _
        // Predicated region
        $region69: #{tpu_custom_call.1} parent=11 // pred_check
          %p659 = pneg %p435
        $region70: #{tpu_custom_call.1} parent=11 // pred_check_branch
          %661 = sbr.rel (%p659) target = $region72
        $region71: #{tpu_custom_call.1} parent=11 // pred_region
          %s663 = ssub.s32 16, 16
          %664 = vsyncadd [#allocation30], %s663
          %s666 = sshll.u32 [#allocation29], 4
          %s667 = int_to_ptr.vmem [resolvable:$true] %s666
          %669 = dma.hbm_to_vmem [thread:$0]  %s17, 16, %s667, [#allocation30]
        $region72: #{tpu_custom_call.1} parent=11 // pred_fallthru
          _
        // Predicated region
        $region73: #{tpu_custom_call.1} parent=11 // pred_check
          %p670 = pneg %p456
        $region74: #{tpu_custom_call.1} parent=11 // pred_check_branch
          %672 = sbr.rel (%p670) target = $region76
        $region75: #{tpu_custom_call.1} parent=11 // pred_region
          %s674 = ssub.s32 16, 16
          %675 = vsyncadd [#allocation30], %s674
          %s677 = sshll.u32 [#allocation31], 4
          %s678 = int_to_ptr.vmem [resolvable:$true] %s677
          %680 = dma.hbm_to_vmem [thread:$0]  %s18, 16, %s678, [#allocation30]
        $region76: #{tpu_custom_call.1} parent=11 // pred_fallthru
          _
      $region12: #{tpu_custom_call.1} parent=5 // pred_fallthru
        _
      %p681 = scmp.lt.s32.totalorder %s42, 2
      // Predicated region
      $region77: #{tpu_custom_call.1} parent=5 // pred_check
        %p682 = pneg %p681
      $region78: #{tpu_custom_call.1} parent=5 // pred_check_branch
        %684 = sbr.rel (%p682) target = $region80
      $region79: #{tpu_custom_call.1} parent=5 // pred_region
        // Predicated region
        $region81: #{tpu_custom_call.1} parent=79 // pred_check
          %p685 = pneg %p62
        $region82: #{tpu_custom_call.1} parent=79 // pred_check_branch
          %687 = sbr.rel (%p685) target = $region84
        $region83: #{tpu_custom_call.1} parent=79 // pred_region
          %s688 = sand.u32 %s52, 1
          %s689 = scalar_lea.sflag [#allocation3], %s688
          %s690 = sand.u32 %s52, 1
          %s691 = smul.addr %s690, 16
          %s692 = scalar_lea.vmem [#allocation2], %s691
          %s694 = ssub.s32 256, 256
          %695 = vsyncadd %s689, %s694
          %s696 = smul.addr %s42, 2
          %s697 = smul.addr %s696, 128
          %s698 = scalar_lea.hbm %s0, %s697
          %s699 = sshll.u32 %s692, 4
          %s700 = int_to_ptr.vmem [resolvable:$true] %s699
          %705 = dma.hbm_to_vmem [thread:$0]  %s698, 256, %s700, %s689, 128, 128, 8
        $region84: #{tpu_custom_call.1} parent=79 // pred_fallthru
          _
        // Predicated region
        $region85: #{tpu_custom_call.1} parent=79 // pred_check
          %p706 = pneg %p88
        $region86: #{tpu_custom_call.1} parent=79 // pred_check_branch
          %708 = sbr.rel (%p706) target = $region88
        $region87: #{tpu_custom_call.1} parent=79 // pred_region
          %s709 = sand.u32 %s42, 1
          %s710 = scalar_lea.sflag [#allocation6], %s709
          %s711 = sand.u32 %s78, 1
          %s712 = scalar_lea.vmem [#allocation5], %s711
          %s714 = ssub.s32 16, 16
          %715 = vsyncadd %s710, %s714
          %s716 = smul.addr %s42, 16
          %s717 = scalar_lea.hbm %s1, %s716
          %s719 = sshll.u32 %s712, 4
          %s720 = int_to_ptr.vmem [resolvable:$true] %s719
          %722 = dma.hbm_to_vmem [thread:$0]  %s717, 16, %s720, %s710
        $region88: #{tpu_custom_call.1} parent=79 // pred_fallthru
          _
        // Predicated region
        $region89: #{tpu_custom_call.1} parent=79 // pred_check
          %p723 = pneg %p114
        $region90: #{tpu_custom_call.1} parent=79 // pred_check_branch
          %725 = sbr.rel (%p723) target = $region92
        $region91: #{tpu_custom_call.1} parent=79 // pred_region
          %s726 = sand.u32 %s42, 1
          %s727 = scalar_lea.sflag [#allocation6], %s726
          %s728 = sand.u32 %s104, 1
          %s729 = smul.addr %s728, 16
          %s730 = scalar_lea.vmem [#allocation7], %s729
          %s732 = ssub.s32 256, 256
          %733 = vsyncadd %s727, %s732
          %s734 = smul.addr %s42, 2
          %s735 = smul.addr %s734, 128
          %s736 = scalar_lea.hbm %s2, %s735
          %s737 = sshll.u32 %s730, 4
          %s738 = int_to_ptr.vmem [resolvable:$true] %s737
          %743 = dma.hbm_to_vmem [thread:$0]  %s736, 256, %s738, %s727, 128, 128, 8
        $region92: #{tpu_custom_call.1} parent=79 // pred_fallthru
          _
      $region80: #{tpu_custom_call.1} parent=5 // pred_fallthru
        _
      %p744 = scmp.le.s32.totalorder 1, %s42
      %p745 = scmp.lt.s32.totalorder %s42, 3
      %p746 = pnand %p744, %p745
      %p747 = pneg %p746
      // Predicated region
      $region93: #{tpu_custom_call.1} parent=5 // pred_check
        _
      $region94: #{tpu_custom_call.1} parent=5 // pred_check_branch
        %749 = sbr.rel (%p746) target = $region96
      $region95: #{tpu_custom_call.1} parent=5 // pred_region
        %s750 = ssub.s32 %s42, 1
        %s751 = sand.u32 %s55, 1
        %s752 = scalar_lea.sflag [#allocation3], %s751
        %s753 = sand.u32 %s55, 1
        %s754 = smul.addr %s753, 16
        %s755 = scalar_lea.vmem [#allocation2], %s754
        // Predicated region
        $region97: #{tpu_custom_call.1} parent=95 // pred_check
          %p756 = pneg %p68
        $region98: #{tpu_custom_call.1} parent=95 // pred_check_branch
          %758 = sbr.rel (%p756) target = $region100
        $region99: #{tpu_custom_call.1} parent=95 // pred_region
          %759 = dma.done %s752, 256
        $region100: #{tpu_custom_call.1} parent=95 // pred_fallthru
          _
        %s760 = sand.u32 %s47, 1
        %s761 = scalar_lea.sflag [#allocation6], %s760
        %s762 = sand.u32 %s81, 1
        %s763 = scalar_lea.vmem [#allocation5], %s762
        // Predicated region
        $region101: #{tpu_custom_call.1} parent=95 // pred_check
          %p764 = pneg %p94
        $region102: #{tpu_custom_call.1} parent=95 // pred_check_branch
          %766 = sbr.rel (%p764) target = $region104
        $region103: #{tpu_custom_call.1} parent=95 // pred_region
          %767 = dma.done %s761, 16
        $region104: #{tpu_custom_call.1} parent=95 // pred_fallthru
          _
        %s768 = sand.u32 %s47, 1
        %s769 = scalar_lea.sflag [#allocation6], %s768
        %s770 = sand.u32 %s107, 1
        %s771 = smul.addr %s770, 16
        %s772 = scalar_lea.vmem [#allocation7], %s771
        // Predicated region
        $region105: #{tpu_custom_call.1} parent=95 // pred_check
          %p773 = pneg %p120
        $region106: #{tpu_custom_call.1} parent=95 // pred_check_branch
          %775 = sbr.rel (%p773) target = $region108
        $region107: #{tpu_custom_call.1} parent=95 // pred_region
          %776 = dma.done %s769, 256
        $region108: #{tpu_custom_call.1} parent=95 // pred_fallthru
          _
        // Predicated region
        $region109: #{tpu_custom_call.1} parent=95 // pred_check
          %p777 = pneg %p141
        $region110: #{tpu_custom_call.1} parent=95 // pred_check_branch
          %779 = sbr.rel (%p777) target = $region112
        $region111: #{tpu_custom_call.1} parent=95 // pred_region
          %780 = dma.done [#allocation9], 512
        $region112: #{tpu_custom_call.1} parent=95 // pred_fallthru
          _
        // Predicated region
        $region113: #{tpu_custom_call.1} parent=95 // pred_check
          %p781 = pneg %p162
        $region114: #{tpu_custom_call.1} parent=95 // pred_check_branch
          %783 = sbr.rel (%p781) target = $region116
        $region115: #{tpu_custom_call.1} parent=95 // pred_region
          %784 = dma.done [#allocation9], 16
        $region116: #{tpu_custom_call.1} parent=95 // pred_fallthru
          _
        // Predicated region
        $region117: #{tpu_custom_call.1} parent=95 // pred_check
          %p785 = pneg %p183
        $region118: #{tpu_custom_call.1} parent=95 // pred_check_branch
          %787 = sbr.rel (%p785) target = $region120
        $region119: #{tpu_custom_call.1} parent=95 // pred_region
          %788 = dma.done [#allocation12], 512
        $region120: #{tpu_custom_call.1} parent=95 // pred_fallthru
          _
        // Predicated region
        $region121: #{tpu_custom_call.1} parent=95 // pred_check
          %p789 = pneg %p204
        $region122: #{tpu_custom_call.1} parent=95 // pred_check_branch
          %791 = sbr.rel (%p789) target = $region124
        $region123: #{tpu_custom_call.1} parent=95 // pred_region
          %792 = dma.done [#allocation12], 16
        $region124: #{tpu_custom_call.1} parent=95 // pred_fallthru
          _
        // Predicated region
        $region125: #{tpu_custom_call.1} parent=95 // pred_check
          %p793 = pneg %p225
        $region126: #{tpu_custom_call.1} parent=95 // pred_check_branch
          %795 = sbr.rel (%p793) target = $region128
        $region127: #{tpu_custom_call.1} parent=95 // pred_region
          %796 = dma.done [#allocation15], 16
        $region128: #{tpu_custom_call.1} parent=95 // pred_fallthru
          _
        // Predicated region
        $region129: #{tpu_custom_call.1} parent=95 // pred_check
          %p797 = pneg %p246
        $region130: #{tpu_custom_call.1} parent=95 // pred_check_branch
          %799 = sbr.rel (%p797) target = $region132
        $region131: #{tpu_custom_call.1} parent=95 // pred_region
          %800 = dma.done [#allocation15], 16
        $region132: #{tpu_custom_call.1} parent=95 // pred_fallthru
          _
        // Predicated region
        $region133: #{tpu_custom_call.1} parent=95 // pred_check
          %p801 = pneg %p267
        $region134: #{tpu_custom_call.1} parent=95 // pred_check_branch
          %803 = sbr.rel (%p801) target = $region136
        $region135: #{tpu_custom_call.1} parent=95 // pred_region
          %804 = dma.done [#allocation18], 64
        $region136: #{tpu_custom_call.1} parent=95 // pred_fallthru
          _
        // Predicated region
        $region137: #{tpu_custom_call.1} parent=95 // pred_check
          %p805 = pneg %p288
        $region138: #{tpu_custom_call.1} parent=95 // pred_check_branch
          %807 = sbr.rel (%p805) target = $region140
        $region139: #{tpu_custom_call.1} parent=95 // pred_region
          %808 = dma.done [#allocation18], 16
        $region140: #{tpu_custom_call.1} parent=95 // pred_fallthru
          _
        // Predicated region
        $region141: #{tpu_custom_call.1} parent=95 // pred_check
          %p809 = pneg %p309
        $region142: #{tpu_custom_call.1} parent=95 // pred_check_branch
          %811 = sbr.rel (%p809) target = $region144
        $region143: #{tpu_custom_call.1} parent=95 // pred_region
          %812 = dma.done [#allocation21], 512
        $region144: #{tpu_custom_call.1} parent=95 // pred_fallthru
          _
        // Predicated region
        $region145: #{tpu_custom_call.1} parent=95 // pred_check
          %p813 = pneg %p330
        $region146: #{tpu_custom_call.1} parent=95 // pred_check_branch
          %815 = sbr.rel (%p813) target = $region148
        $region147: #{tpu_custom_call.1} parent=95 // pred_region
          %816 = dma.done [#allocation21], 16
        $region148: #{tpu_custom_call.1} parent=95 // pred_fallthru
          _
        // Predicated region
        $region149: #{tpu_custom_call.1} parent=95 // pred_check
          %p817 = pneg %p351
        $region150: #{tpu_custom_call.1} parent=95 // pred_check_branch
          %819 = sbr.rel (%p817) target = $region152
        $region151: #{tpu_custom_call.1} parent=95 // pred_region
          %820 = dma.done [#allocation24], 64
        $region152: #{tpu_custom_call.1} parent=95 // pred_fallthru
          _
        // Predicated region
        $region153: #{tpu_custom_call.1} parent=95 // pred_check
          %p821 = pneg %p372
        $region154: #{tpu_custom_call.1} parent=95 // pred_check_branch
          %823 = sbr.rel (%p821) target = $region156
        $region155: #{tpu_custom_call.1} parent=95 // pred_region
          %824 = dma.done [#allocation24], 16
        $region156: #{tpu_custom_call.1} parent=95 // pred_fallthru
          _
        // Predicated region
        $region157: #{tpu_custom_call.1} parent=95 // pred_check
          %p825 = pneg %p393
        $region158: #{tpu_custom_call.1} parent=95 // pred_check_branch
          %827 = sbr.rel (%p825) target = $region160
        $region159: #{tpu_custom_call.1} parent=95 // pred_region
          %828 = dma.done [#allocation27], 1024
        $region160: #{tpu_custom_call.1} parent=95 // pred_fallthru
          _
        // Predicated region
        $region161: #{tpu_custom_call.1} parent=95 // pred_check
          %p829 = pneg %p414
        $region162: #{tpu_custom_call.1} parent=95 // pred_check_branch
          %831 = sbr.rel (%p829) target = $region164
        $region163: #{tpu_custom_call.1} parent=95 // pred_region
          %832 = dma.done [#allocation27], 16
        $region164: #{tpu_custom_call.1} parent=95 // pred_fallthru
          _
        // Predicated region
        $region165: #{tpu_custom_call.1} parent=95 // pred_check
          %p833 = pneg %p435
        $region166: #{tpu_custom_call.1} parent=95 // pred_check_branch
          %835 = sbr.rel (%p833) target = $region168
        $region167: #{tpu_custom_call.1} parent=95 // pred_region
          %836 = dma.done [#allocation30], 16
        $region168: #{tpu_custom_call.1} parent=95 // pred_fallthru
          _
        // Predicated region
        $region169: #{tpu_custom_call.1} parent=95 // pred_check
          %p837 = pneg %p456
        $region170: #{tpu_custom_call.1} parent=95 // pred_check_branch
          %839 = sbr.rel (%p837) target = $region172
        $region171: #{tpu_custom_call.1} parent=95 // pred_region
          %840 = dma.done [#allocation30], 16
        $region172: #{tpu_custom_call.1} parent=95 // pred_fallthru
          _
        %s841 = sand.u32 %s55, 1
        %s842 = scalar_lea.sflag [#allocation3], %s841
        %s843 = sand.u32 %s55, 1
        %s844 = smul.addr %s843, 16
        %s845 = scalar_lea.vmem [#allocation2], %s844
        %p846 = pneg %p68
        %p847 = pneg %p65
        %s848 = sand.u32 %s47, 1
        %s849 = scalar_lea.sflag [#allocation6], %s848
        %s850 = sand.u32 %s81, 1
        %s851 = scalar_lea.vmem [#allocation5], %s850
        %p852 = pneg %p94
        %p853 = pneg %p91
        %s854 = sand.u32 %s47, 1
        %s855 = scalar_lea.sflag [#allocation6], %s854
        %s856 = sand.u32 %s107, 1
        %s857 = smul.addr %s856, 16
        %s858 = scalar_lea.vmem [#allocation7], %s857
        %p859 = pneg %p120
        %p860 = pneg %p117
        %p861 = pneg %p141
        %p862 = pneg %p138
        %p863 = pneg %p162
        %p864 = pneg %p159
        %p865 = pneg %p183
        %p866 = pneg %p180
        %p867 = pneg %p204
        %p868 = pneg %p201
        %p869 = pneg %p225
        %p870 = pneg %p222
        %p871 = pneg %p246
        %p872 = pneg %p243
        %p873 = pneg %p267
        %p874 = pneg %p264
        %p875 = pneg %p288
        %p876 = pneg %p285
        %p877 = pneg %p309
        %p878 = pneg %p306
        %p879 = pneg %p330
        %p880 = pneg %p327
        %p881 = pneg %p351
        %p882 = pneg %p348
        %p883 = pneg %p372
        %p884 = pneg %p369
        %p885 = pneg %p393
        %p886 = pneg %p390
        %p887 = pneg %p414
        %p888 = pneg %p411
        %p889 = pneg %p435
        %p890 = pneg %p432
        %p891 = pneg %p456
        %p892 = pneg %p453
        %p893 = pneg %p482
        %p894 = pneg %p479
        %s895 = sand.u32 %s469, 1
        %s896 = scalar_lea.sflag [#allocation4], %s895
        %s897 = sand.u32 %s469, 1
        %s898 = smul.addr %s897, 16
        %s899 = scalar_lea.vmem [#allocation32], %s898
        %v900 = vld [vmem:[%s755] sm:$0xff]
        %v901 = vld [vmem:[%s755 + $0x8] sm:$0xff]
        %v902 = vld [vmem:[%s763] sm:$0x1]
        %v903 = vmul.f32 %v902, -1e+09
        %v904 = vld [vmem:[%s772] sm:$0xff]
        %v905 = vld [vmem:[%s772 + $0x8] sm:$0xff]
        %vm906 = vcmp.gt.f32.partialorder %v904, 0.5
        %vm907 = vcmp.gt.f32.partialorder %v905, 0.5
        %v908 = vld [vmem:[#allocation8] sm:$0xff]
        %v909 = vld [vmem:[#allocation8 + $0x8] sm:$0xff]
        %v910 = vld [vmem:[#allocation8 + $0x10] sm:$0xff]
        %v911 = vld [vmem:[#allocation8 + $0x18] sm:$0xff]
        %v912 = vld [vmem:[#allocation10] sm:$0x1]
        %v914 = vlaneseq
        %v915 = vshrl.u32 %v914, 7
        %v916 = vsub.s32 0, %v915
        %v917 = vrot.slane %v912, %v916
        %vm919 = vcmask 261120
        %v921 = vsel %vm919, %v900, 0
        %v924 = vsel %vm919, %v901, 0
        %926 = vmatprep.subr.mxu0 0.0
        %927 = vmatpush1.msra.mxu0 %v908
        %928 = vmatprep.subr.mxu0 0.0
        %929 = vmatpush1.msra.mxu0 %v909
        %930 = vmatprep.subr.mxu0 0.0
        %931 = vmatpush1.msra.mxu0 %v910
        %932 = vmatprep.subr.mxu0 0.0
        %933 = vmatpush1.msra.mxu0 %v911
        %934 = vmatprep.subr.mxu0 0.0
        %935 = vmatpush1.msra.mxu0 0.0
        %936 = vmatprep.subr.mxu0 0.0
        %937 = vmatpush1.msra.mxu0 0.0
        %938 = vmatprep.subr.mxu0 0.0
        %939 = vmatpush1.msra.mxu0 0.0
        %940 = vmatprep.subr.mxu0 0.0
        %941 = vmatpush1.msra.mxu0 0.0
        %942 = vmatprep.subr.mxu0 0.0
        %943 = vmatpush1.msra.mxu0 0.0
        %944 = vmatprep.subr.mxu0 0.0
        %945 = vmatpush1.msra.mxu0 0.0
        %946 = vmatprep.subr.mxu0 0.0
        %947 = vmatpush1.msra.mxu0 0.0
        %948 = vmatprep.subr.mxu0 0.0
        %949 = vmatpush1.msra.mxu0 0.0
        %950 = vmatprep.subr.mxu0 0.0
        %951 = vmatpush1.msra.mxu0 0.0
        %952 = vmatprep.subr.mxu0 0.0
        %953 = vmatpush1.msra.mxu0 0.0
        %954 = vmatprep.subr.mxu0 0.0
        %955 = vmatpush1.msra.mxu0 0.0
        %956 = vmatprep.subr.mxu0 0.0
        %957 = vmatpush1.msra.mxu0 0.0
        %958 = vmatprep.subr.mxu0 0.0
        %959 = vmatpush1.msra.mxu0 0.0
        %960 = vmatprep.subr.mxu0 0.0
        %961 = vmatpush1.msra.mxu0 0.0
        %962 = vmatprep.subr.mxu0 0.0
        %963 = vmatpush1.msra.mxu0 0.0
        %964 = vmatprep.subr.mxu0 0.0
        %965 = vmatpush1.msra.mxu0 0.0
        %966 = vmatprep.subr.mxu0 0.0
        %967 = vmatpush1.msra.mxu0 0.0
        %968 = vmatprep.subr.mxu0 0.0
        %969 = vmatpush1.msra.mxu0 0.0
        %970 = vmatprep.subr.mxu0 0.0
        %971 = vmatpush1.msra.mxu0 0.0
        %972 = vmatprep.subr.mxu0 0.0
        %973 = vmatpush1.msra.mxu0 0.0
        %974 = vmatprep.subr.mxu0 0.0
        %975 = vmatpush1.msra.mxu0 0.0
        %976 = vmatprep.subr.mxu0 0.0
        %977 = vmatpush1.msra.mxu0 0.0
        %978 = vmatprep.subr.mxu0 0.0
        %979 = vmatpush1.msra.mxu0 0.0
        %980 = vmatprep.subr.mxu0 0.0
        %981 = vmatpush1.msra.mxu0 0.0
        %982 = vmatprep.subr.mxu0 0.0
        %983 = vmatpush1.msra.mxu0 0.0
        %984 = vmatprep.subr.mxu0 0.0
        %985 = vmatpush1.msra.mxu0 0.0
        %986 = vmatprep.subr.mxu0 0.0
        %987 = vmatpush1.msra.mxu0 0.0
        %988 = vmatprep.subr.mxu0 0.0
        %989 = vmatpush1.msra.mxu0 0.0
        %990 = vmatprep.mubr.f32.mxu0 0.0
        %991 = vmatmul.mubr.f32.gmra.mrb[0].mxu0 %v921
        %v992 = vpop.f32.mrb[0].mxu0
        %v993 = vadd.f32 %v917, %v992
        %v994 = vpop.f32.mrb[0].mxu0
        %995 = vmatprep.mubr.f32.mxu0 0.0
        %996 = vmatmul.mubr.f32.gmra.mrb[0].mxu0 %v924
        %v997 = vpop.f32.mrb[0].mxu0
        %v998 = vadd.f32 %v917, %v997
        %v999 = vpop.f32.mrb[0].mxu0
        %1000 = vdwg.mxu0
        %1003 = vrot.lane.b32.xlu0 %v993, 120
        %v1004 = vpop.permute.xlu0 %1003
        %1005 = vrot.lane.b32.xlu0 %v998, 120
        %v1006 = vpop.permute.xlu0 %1005
        %vm1007 = vcmask 64512
        %v1008 = vsel %vm1007, %v993, 0
        %v1010 = vsel %vm1007, %v998, 0
        %v1012 = vsel %vm1007, %v1004, 0
        %v1014 = vsel %vm1007, %v1006, 0
        %1016 = vmatprep.subr.mxu0 0.0
        %1017 = vmatpush1.xpose.msra.mxu0 %v1012
        %1018 = vmatprep.subr.mxu0 0.0
        %1019 = vmatpush1.xpose.msra.mxu0 %v1014
        %1020 = vmatprep.subr.mxu0 0.0
        %1021 = vmatpush1.xpose.msra.mxu0 0.0
        %1022 = vmatprep.subr.mxu0 0.0
        %1023 = vmatpush1.xpose.msra.mxu0 0.0
        %1024 = vmatprep.subr.mxu0 0.0
        %1025 = vmatpush1.xpose.msra.mxu0 0.0
        %1026 = vmatprep.subr.mxu0 0.0
        %1027 = vmatpush1.xpose.msra.mxu0 0.0
        %1028 = vmatprep.subr.mxu0 0.0
        %1029 = vmatpush1.xpose.msra.mxu0 0.0
        %1030 = vmatprep.subr.mxu0 0.0
        %1031 = vmatpush1.xpose.msra.mxu0 0.0
        %1032 = vmatprep.subr.mxu0 0.0
        %1033 = vmatpush1.xpose.msra.mxu0 0.0
        %1034 = vmatprep.subr.mxu0 0.0
        %1035 = vmatpush1.xpose.msra.mxu0 0.0
        %1036 = vmatprep.subr.mxu0 0.0
        %1037 = vmatpush1.xpose.msra.mxu0 0.0
        %1038 = vmatprep.subr.mxu0 0.0
        %1039 = vmatpush1.xpose.msra.mxu0 0.0
        %1040 = vmatprep.subr.mxu0 0.0
        %1041 = vmatpush1.xpose.msra.mxu0 0.0
        %1042 = vmatprep.subr.mxu0 0.0
        %1043 = vmatpush1.xpose.msra.mxu0 0.0
        %1044 = vmatprep.subr.mxu0 0.0
        %1045 = vmatpush1.xpose.msra.mxu0 0.0
        %1046 = vmatprep.subr.mxu0 0.0
        %1047 = vmatpush1.xpose.msra.mxu0 0.0
        %1048 = vmatprep.subr.mxu0 0.0
        %1049 = vmatpush1.xpose.msra.mxu0 0.0
        %1050 = vmatprep.subr.mxu0 0.0
        %1051 = vmatpush1.xpose.msra.mxu0 0.0
        %1052 = vmatprep.subr.mxu0 0.0
        %1053 = vmatpush1.xpose.msra.mxu0 0.0
        %1054 = vmatprep.subr.mxu0 0.0
        %1055 = vmatpush1.xpose.msra.mxu0 0.0
        %1056 = vmatprep.subr.mxu0 0.0
        %1057 = vmatpush1.xpose.msra.mxu0 0.0
        %1058 = vmatprep.subr.mxu0 0.0
        %1059 = vmatpush1.xpose.msra.mxu0 0.0
        %1060 = vmatprep.subr.mxu0 0.0
        %1061 = vmatpush1.xpose.msra.mxu0 0.0
        %1062 = vmatprep.subr.mxu0 0.0
        %1063 = vmatpush1.xpose.msra.mxu0 0.0
        %1064 = vmatprep.subr.mxu0 0.0
        %1065 = vmatpush1.xpose.msra.mxu0 0.0
        %1066 = vmatprep.subr.mxu0 0.0
        %1067 = vmatpush1.xpose.msra.mxu0 0.0
        %1068 = vmatprep.subr.mxu0 0.0
        %1069 = vmatpush1.xpose.msra.mxu0 0.0
        %1070 = vmatprep.subr.mxu0 0.0
        %1071 = vmatpush1.xpose.msra.mxu0 0.0
        %1072 = vmatprep.subr.mxu0 0.0
        %1073 = vmatpush1.xpose.msra.mxu0 0.0
        %1074 = vmatprep.subr.mxu0 0.0
        %1075 = vmatpush1.xpose.msra.mxu0 0.0
        %1076 = vmatprep.subr.mxu0 0.0
        %1077 = vmatpush1.xpose.msra.mxu0 0.0
        %1078 = vmatprep.subr.mxu0 0.0
        %1079 = vmatpush1.xpose.msra.mxu0 0.0
        %1080 = vmatprep.mubr.f32.mxu0 0.0
        %1081 = vmatmul.mubr.f32.gmra.mrb[0].mxu0 %v1008
        %v1082 = vpop.f32.mrb[0].mxu0
        %v1083 = vadd.f32 0.0, %v1082
        %v1084 = vpop.f32.mrb[0].mxu0
        %1085 = vmatprep.mubr.f32.mxu0 0.0
        %1086 = vmatmul.mubr.f32.gmra.mrb[0].mxu0 %v1010
        %v1087 = vpop.f32.mrb[0].mxu0
        %v1088 = vadd.f32 0.0, %v1087
        %v1089 = vpop.f32.mrb[0].mxu0
        %1090 = vdwg.mxu0
        %v1091 = vmul.f32 %v1083, 0.35355338
        %v1092 = vmul.f32 %v1088, 0.35355338
        %v1094 = vlaneseq
        %v1095 = vshrl.u32 %v1094, 7
        %v1096 = vsub.s32 0, %v1095
        %v1097 = vrot.slane %v903, %v1096
        %v1099 = vadd.f32 %v1091, %v1097
        %v1100 = vadd.f32 %v1092, %v1097
        %vm1101 = vcmask 130048
        %v1102 = vsel %vm1101, %v1099, -inf
        %1103 = vmax.xlane.f32.xlu0 %v1102
        %v1104 = vpop.xlane.xlu0 %1103
        %v1105 = vsel %vm1101, %v1100, -inf
        %1106 = vmax.xlane.f32.xlu0 %v1105
        %v1107 = vpop.xlane.xlu0 %1106
        %v1108 = vsub.f32 %v1099, %v1104
        %v1109 = vsub.f32 %v1100, %v1107
        %v1110 = vmul.f32 %v1108, 1.442695
        %v1111 = vpow.pop %v1110
        %v1112 = vmul.f32 %v1109, 1.442695
        %v1113 = vpow.pop %v1112
        %v1114 = vsel %vm1101, %v1111, 0.0
        %1115 = vadd.xlane.f32.xlu0 %v1114
        %v1116 = vpop.xlane.xlu0 %1115
        %v1117 = vsel %vm1101, %v1113, 0.0
        %1118 = vadd.xlane.f32.xlu0 %v1117
        %v1119 = vpop.xlane.xlu0 %1118
        %v1120 = vrcp.pop %v1116
        %v1121 = vrcp.pop %v1119
        %v1122 = vmul.f32 %v1111, %v1120
        %v1123 = vmul.f32 %v1113, %v1121
        %1124 = vrot.lane.b32.xlu0 %v993, 112
        %v1125 = vpop.permute.xlu0 %1124
        %1126 = vrot.lane.b32.xlu0 %v998, 112
        %v1127 = vpop.permute.xlu0 %1126
        %v1131 = vsel %vm1101, %v1122, 0
        %v1134 = vsel %vm1101, %v1123, 0
        %1136 = vmatprep.subr.mxu0 0.0
        %1137 = vmatpush1.msra.mxu0 %v1125
        %1138 = vmatprep.subr.mxu0 0.0
        %1139 = vmatpush1.msra.mxu0 %v1127
        %1140 = vmatprep.subr.mxu0 0.0
        %1141 = vmatpush1.msra.mxu0 0.0
        %1142 = vmatprep.subr.mxu0 0.0
        %1143 = vmatpush1.msra.mxu0 0.0
        %1144 = vmatprep.subr.mxu0 0.0
        %1145 = vmatpush1.msra.mxu0 0.0
        %1146 = vmatprep.subr.mxu0 0.0
        %1147 = vmatpush1.msra.mxu0 0.0
        %1148 = vmatprep.subr.mxu0 0.0
        %1149 = vmatpush1.msra.mxu0 0.0
        %1150 = vmatprep.subr.mxu0 0.0
        %1151 = vmatpush1.msra.mxu0 0.0
        %1152 = vmatprep.subr.mxu0 0.0
        %1153 = vmatpush1.msra.mxu0 0.0
        %1154 = vmatprep.subr.mxu0 0.0
        %1155 = vmatpush1.msra.mxu0 0.0
        %1156 = vmatprep.subr.mxu0 0.0
        %1157 = vmatpush1.msra.mxu0 0.0
        %1158 = vmatprep.subr.mxu0 0.0
        %1159 = vmatpush1.msra.mxu0 0.0
        %1160 = vmatprep.subr.mxu0 0.0
        %1161 = vmatpush1.msra.mxu0 0.0
        %1162 = vmatprep.subr.mxu0 0.0
        %1163 = vmatpush1.msra.mxu0 0.0
        %1164 = vmatprep.subr.mxu0 0.0
        %1165 = vmatpush1.msra.mxu0 0.0
        %1166 = vmatprep.subr.mxu0 0.0
        %1167 = vmatpush1.msra.mxu0 0.0
        %1168 = vmatprep.subr.mxu0 0.0
        %1169 = vmatpush1.msra.mxu0 0.0
        %1170 = vmatprep.subr.mxu0 0.0
        %1171 = vmatpush1.msra.mxu0 0.0
        %1172 = vmatprep.subr.mxu0 0.0
        %1173 = vmatpush1.msra.mxu0 0.0
        %1174 = vmatprep.subr.mxu0 0.0
        %1175 = vmatpush1.msra.mxu0 0.0
        %1176 = vmatprep.subr.mxu0 0.0
        %1177 = vmatpush1.msra.mxu0 0.0
        %1178 = vmatprep.subr.mxu0 0.0
        %1179 = vmatpush1.msra.mxu0 0.0
        %1180 = vmatprep.subr.mxu0 0.0
        %1181 = vmatpush1.msra.mxu0 0.0
        %1182 = vmatprep.subr.mxu0 0.0
        %1183 = vmatpush1.msra.mxu0 0.0
        %1184 = vmatprep.subr.mxu0 0.0
        %1185 = vmatpush1.msra.mxu0 0.0
        %1186 = vmatprep.subr.mxu0 0.0
        %1187 = vmatpush1.msra.mxu0 0.0
        %1188 = vmatprep.subr.mxu0 0.0
        %1189 = vmatpush1.msra.mxu0 0.0
        %1190 = vmatprep.subr.mxu0 0.0
        %1191 = vmatpush1.msra.mxu0 0.0
        %1192 = vmatprep.subr.mxu0 0.0
        %1193 = vmatpush1.msra.mxu0 0.0
        %1194 = vmatprep.subr.mxu0 0.0
        %1195 = vmatpush1.msra.mxu0 0.0
        %1196 = vmatprep.subr.mxu0 0.0
        %1197 = vmatpush1.msra.mxu0 0.0
        %1198 = vmatprep.subr.mxu0 0.0
        %1199 = vmatpush1.msra.mxu0 0.0
        %1200 = vmatprep.mubr.f32.mxu0 0.0
        %1201 = vmatmul.mubr.f32.gmra.mrb[0].mxu0 %v1131
        %v1202 = vpop.f32.mrb[0].mxu0
        %v1203 = vadd.f32 0.0, %v1202
        %v1204 = vpop.f32.mrb[0].mxu0
        %1205 = vmatprep.mubr.f32.mxu0 0.0
        %1206 = vmatmul.mubr.f32.gmra.mrb[0].mxu0 %v1134
        %v1207 = vpop.f32.mrb[0].mxu0
        %v1208 = vadd.f32 0.0, %v1207
        %v1209 = vpop.f32.mrb[0].mxu0
        %1210 = vdwg.mxu0
        %1211 = vrot.lane.b32.xlu0 %v993, 104
        %v1212 = vpop.permute.xlu0 %1211
        %1213 = vrot.lane.b32.xlu0 %v998, 104
        %v1214 = vpop.permute.xlu0 %1213
        %1215 = vrot.lane.b32.xlu0 %v993, 96
        %v1216 = vpop.permute.xlu0 %1215
        %1217 = vrot.lane.b32.xlu0 %v998, 96
        %v1218 = vpop.permute.xlu0 %1217
        %v1219 = vsel %vm1007, %v1212, 0
        %v1221 = vsel %vm1007, %v1214, 0
        %v1223 = vsel %vm1007, %v1216, 0
        %v1225 = vsel %vm1007, %v1218, 0
        %1227 = vmatprep.subr.mxu0 0.0
        %1228 = vmatpush1.xpose.msra.mxu0 %v1223
        %1229 = vmatprep.subr.mxu0 0.0
        %1230 = vmatpush1.xpose.msra.mxu0 %v1225
        %1231 = vmatprep.subr.mxu0 0.0
        %1232 = vmatpush1.xpose.msra.mxu0 0.0
        %1233 = vmatprep.subr.mxu0 0.0
        %1234 = vmatpush1.xpose.msra.mxu0 0.0
        %1235 = vmatprep.subr.mxu0 0.0
        %1236 = vmatpush1.xpose.msra.mxu0 0.0
        %1237 = vmatprep.subr.mxu0 0.0
        %1238 = vmatpush1.xpose.msra.mxu0 0.0
        %1239 = vmatprep.subr.mxu0 0.0
        %1240 = vmatpush1.xpose.msra.mxu0 0.0
        %1241 = vmatprep.subr.mxu0 0.0
        %1242 = vmatpush1.xpose.msra.mxu0 0.0
        %1243 = vmatprep.subr.mxu0 0.0
        %1244 = vmatpush1.xpose.msra.mxu0 0.0
        %1245 = vmatprep.subr.mxu0 0.0
        %1246 = vmatpush1.xpose.msra.mxu0 0.0
        %1247 = vmatprep.subr.mxu0 0.0
        %1248 = vmatpush1.xpose.msra.mxu0 0.0
        %1249 = vmatprep.subr.mxu0 0.0
        %1250 = vmatpush1.xpose.msra.mxu0 0.0
        %1251 = vmatprep.subr.mxu0 0.0
        %1252 = vmatpush1.xpose.msra.mxu0 0.0
        %1253 = vmatprep.subr.mxu0 0.0
        %1254 = vmatpush1.xpose.msra.mxu0 0.0
        %1255 = vmatprep.subr.mxu0 0.0
        %1256 = vmatpush1.xpose.msra.mxu0 0.0
        %1257 = vmatprep.subr.mxu0 0.0
        %1258 = vmatpush1.xpose.msra.mxu0 0.0
        %1259 = vmatprep.subr.mxu0 0.0
        %1260 = vmatpush1.xpose.msra.mxu0 0.0
        %1261 = vmatprep.subr.mxu0 0.0
        %1262 = vmatpush1.xpose.msra.mxu0 0.0
        %1263 = vmatprep.subr.mxu0 0.0
        %1264 = vmatpush1.xpose.msra.mxu0 0.0
        %1265 = vmatprep.subr.mxu0 0.0
        %1266 = vmatpush1.xpose.msra.mxu0 0.0
        %1267 = vmatprep.subr.mxu0 0.0
        %1268 = vmatpush1.xpose.msra.mxu0 0.0
        %1269 = vmatprep.subr.mxu0 0.0
        %1270 = vmatpush1.xpose.msra.mxu0 0.0
        %1271 = vmatprep.subr.mxu0 0.0
        %1272 = vmatpush1.xpose.msra.mxu0 0.0
        %1273 = vmatprep.subr.mxu0 0.0
        %1274 = vmatpush1.xpose.msra.mxu0 0.0
        %1275 = vmatprep.subr.mxu0 0.0
        %1276 = vmatpush1.xpose.msra.mxu0 0.0
        %1277 = vmatprep.subr.mxu0 0.0
        %1278 = vmatpush1.xpose.msra.mxu0 0.0
        %1279 = vmatprep.subr.mxu0 0.0
        %1280 = vmatpush1.xpose.msra.mxu0 0.0
        %1281 = vmatprep.subr.mxu0 0.0
        %1282 = vmatpush1.xpose.msra.mxu0 0.0
        %1283 = vmatprep.subr.mxu0 0.0
        %1284 = vmatpush1.xpose.msra.mxu0 0.0
        %1285 = vmatprep.subr.mxu0 0.0
        %1286 = vmatpush1.xpose.msra.mxu0 0.0
        %1287 = vmatprep.subr.mxu0 0.0
        %1288 = vmatpush1.xpose.msra.mxu0 0.0
        %1289 = vmatprep.subr.mxu0 0.0
        %1290 = vmatpush1.xpose.msra.mxu0 0.0
        %1291 = vmatprep.mubr.f32.mxu0 0.0
        %1292 = vmatmul.mubr.f32.gmra.mrb[0].mxu0 %v1219
        %v1293 = vpop.f32.mrb[0].mxu0
        %v1294 = vadd.f32 0.0, %v1293
        %v1295 = vpop.f32.mrb[0].mxu0
        %1296 = vmatprep.mubr.f32.mxu0 0.0
        %1297 = vmatmul.mubr.f32.gmra.mrb[0].mxu0 %v1221
        %v1298 = vpop.f32.mrb[0].mxu0
        %v1299 = vadd.f32 0.0, %v1298
        %v1300 = vpop.f32.mrb[0].mxu0
        %1301 = vdwg.mxu0
        %v1302 = vmul.f32 %v1294, 0.35355338
        %v1303 = vmul.f32 %v1299, 0.35355338
        %v1304 = vadd.f32 %v1302, %v1097
        %v1305 = vadd.f32 %v1303, %v1097
        %v1306 = vsel %vm1101, %v1304, -inf
        %1307 = vmax.xlane.f32.xlu0 %v1306
        %v1308 = vpop.xlane.xlu0 %1307
        %v1309 = vsel %vm1101, %v1305, -inf
        %1310 = vmax.xlane.f32.xlu0 %v1309
        %v1311 = vpop.xlane.xlu0 %1310
        %v1312 = vsub.f32 %v1304, %v1308
        %v1313 = vsub.f32 %v1305, %v1311
        %v1314 = vmul.f32 %v1312, 1.442695
        %v1315 = vpow.pop %v1314
        %v1316 = vmul.f32 %v1313, 1.442695
        %v1317 = vpow.pop %v1316
        %v1318 = vsel %vm1101, %v1315, 0.0
        %1319 = vadd.xlane.f32.xlu0 %v1318
        %v1320 = vpop.xlane.xlu0 %1319
        %v1321 = vsel %vm1101, %v1317, 0.0
        %1322 = vadd.xlane.f32.xlu0 %v1321
        %v1323 = vpop.xlane.xlu0 %1322
        %v1324 = vrcp.pop %v1320
        %v1325 = vrcp.pop %v1323
        %v1326 = vmul.f32 %v1315, %v1324
        %v1327 = vmul.f32 %v1317, %v1325
        %1328 = vrot.lane.b32.xlu0 %v993, 88
        %v1329 = vpop.permute.xlu0 %1328
        %1330 = vrot.lane.b32.xlu0 %v998, 88
        %v1331 = vpop.permute.xlu0 %1330
        %v1335 = vsel %vm1101, %v1326, 0
        %v1338 = vsel %vm1101, %v1327, 0
        %1340 = vmatprep.subr.mxu0 0.0
        %1341 = vmatpush1.msra.mxu0 %v1329
        %1342 = vmatprep.subr.mxu0 0.0
        %1343 = vmatpush1.msra.mxu0 %v1331
        %1344 = vmatprep.subr.mxu0 0.0
        %1345 = vmatpush1.msra.mxu0 0.0
        %1346 = vmatprep.subr.mxu0 0.0
        %1347 = vmatpush1.msra.mxu0 0.0
        %1348 = vmatprep.subr.mxu0 0.0
        %1349 = vmatpush1.msra.mxu0 0.0
        %1350 = vmatprep.subr.mxu0 0.0
        %1351 = vmatpush1.msra.mxu0 0.0
        %1352 = vmatprep.subr.mxu0 0.0
        %1353 = vmatpush1.msra.mxu0 0.0
        %1354 = vmatprep.subr.mxu0 0.0
        %1355 = vmatpush1.msra.mxu0 0.0
        %1356 = vmatprep.subr.mxu0 0.0
        %1357 = vmatpush1.msra.mxu0 0.0
        %1358 = vmatprep.subr.mxu0 0.0
        %1359 = vmatpush1.msra.mxu0 0.0
        %1360 = vmatprep.subr.mxu0 0.0
        %1361 = vmatpush1.msra.mxu0 0.0
        %1362 = vmatprep.subr.mxu0 0.0
        %1363 = vmatpush1.msra.mxu0 0.0
        %1364 = vmatprep.subr.mxu0 0.0
        %1365 = vmatpush1.msra.mxu0 0.0
        %1366 = vmatprep.subr.mxu0 0.0
        %1367 = vmatpush1.msra.mxu0 0.0
        %1368 = vmatprep.subr.mxu0 0.0
        %1369 = vmatpush1.msra.mxu0 0.0
        %1370 = vmatprep.subr.mxu0 0.0
        %1371 = vmatpush1.msra.mxu0 0.0
        %1372 = vmatprep.subr.mxu0 0.0
        %1373 = vmatpush1.msra.mxu0 0.0
        %1374 = vmatprep.subr.mxu0 0.0
        %1375 = vmatpush1.msra.mxu0 0.0
        %1376 = vmatprep.subr.mxu0 0.0
        %1377 = vmatpush1.msra.mxu0 0.0
        %1378 = vmatprep.subr.mxu0 0.0
        %1379 = vmatpush1.msra.mxu0 0.0
        %1380 = vmatprep.subr.mxu0 0.0
        %1381 = vmatpush1.msra.mxu0 0.0
        %1382 = vmatprep.subr.mxu0 0.0
        %1383 = vmatpush1.msra.mxu0 0.0
        %1384 = vmatprep.subr.mxu0 0.0
        %1385 = vmatpush1.msra.mxu0 0.0
        %1386 = vmatprep.subr.mxu0 0.0
        %1387 = vmatpush1.msra.mxu0 0.0
        %1388 = vmatprep.subr.mxu0 0.0
        %1389 = vmatpush1.msra.mxu0 0.0
        %1390 = vmatprep.subr.mxu0 0.0
        %1391 = vmatpush1.msra.mxu0 0.0
        %1392 = vmatprep.subr.mxu0 0.0
        %1393 = vmatpush1.msra.mxu0 0.0
        %1394 = vmatprep.subr.mxu0 0.0
        %1395 = vmatpush1.msra.mxu0 0.0
        %1396 = vmatprep.subr.mxu0 0.0
        %1397 = vmatpush1.msra.mxu0 0.0
        %1398 = vmatprep.subr.mxu0 0.0
        %1399 = vmatpush1.msra.mxu0 0.0
        %1400 = vmatprep.subr.mxu0 0.0
        %1401 = vmatpush1.msra.mxu0 0.0
        %1402 = vmatprep.subr.mxu0 0.0
        %1403 = vmatpush1.msra.mxu0 0.0
        %1404 = vmatprep.mubr.f32.mxu0 0.0
        %1405 = vmatmul.mubr.f32.gmra.mrb[0].mxu0 %v1335
        %v1406 = vpop.f32.mrb[0].mxu0
        %v1407 = vadd.f32 0.0, %v1406
        %v1408 = vpop.f32.mrb[0].mxu0
        %1409 = vmatprep.mubr.f32.mxu0 0.0
        %1410 = vmatmul.mubr.f32.gmra.mrb[0].mxu0 %v1338
        %v1411 = vpop.f32.mrb[0].mxu0
        %v1412 = vadd.f32 0.0, %v1411
        %v1413 = vpop.f32.mrb[0].mxu0
        %1414 = vdwg.mxu0
        %1415 = vrot.lane.b32.xlu0 %v993, 80
        %v1416 = vpop.permute.xlu0 %1415
        %1417 = vrot.lane.b32.xlu0 %v998, 80
        %v1418 = vpop.permute.xlu0 %1417
        %1419 = vrot.lane.b32.xlu0 %v993, 72
        %v1420 = vpop.permute.xlu0 %1419
        %1421 = vrot.lane.b32.xlu0 %v998, 72
        %v1422 = vpop.permute.xlu0 %1421
        %v1423 = vsel %vm1007, %v1416, 0
        %v1425 = vsel %vm1007, %v1418, 0
        %v1427 = vsel %vm1007, %v1420, 0
        %v1429 = vsel %vm1007, %v1422, 0
        %1431 = vmatprep.subr.mxu0 0.0
        %1432 = vmatpush1.xpose.msra.mxu0 %v1427
        %1433 = vmatprep.subr.mxu0 0.0
        %1434 = vmatpush1.xpose.msra.mxu0 %v1429
        %1435 = vmatprep.subr.mxu0 0.0
        %1436 = vmatpush1.xpose.msra.mxu0 0.0
        %1437 = vmatprep.subr.mxu0 0.0
        %1438 = vmatpush1.xpose.msra.mxu0 0.0
        %1439 = vmatprep.subr.mxu0 0.0
        %1440 = vmatpush1.xpose.msra.mxu0 0.0
        %1441 = vmatprep.subr.mxu0 0.0
        %1442 = vmatpush1.xpose.msra.mxu0 0.0
        %1443 = vmatprep.subr.mxu0 0.0
        %1444 = vmatpush1.xpose.msra.mxu0 0.0
        %1445 = vmatprep.subr.mxu0 0.0
        %1446 = vmatpush1.xpose.msra.mxu0 0.0
        %1447 = vmatprep.subr.mxu0 0.0
        %1448 = vmatpush1.xpose.msra.mxu0 0.0
        %1449 = vmatprep.subr.mxu0 0.0
        %1450 = vmatpush1.xpose.msra.mxu0 0.0
        %1451 = vmatprep.subr.mxu0 0.0
        %1452 = vmatpush1.xpose.msra.mxu0 0.0
        %1453 = vmatprep.subr.mxu0 0.0
        %1454 = vmatpush1.xpose.msra.mxu0 0.0
        %1455 = vmatprep.subr.mxu0 0.0
        %1456 = vmatpush1.xpose.msra.mxu0 0.0
        %1457 = vmatprep.subr.mxu0 0.0
        %1458 = vmatpush1.xpose.msra.mxu0 0.0
        %1459 = vmatprep.subr.mxu0 0.0
        %1460 = vmatpush1.xpose.msra.mxu0 0.0
        %1461 = vmatprep.subr.mxu0 0.0
        %1462 = vmatpush1.xpose.msra.mxu0 0.0
        %1463 = vmatprep.subr.mxu0 0.0
        %1464 = vmatpush1.xpose.msra.mxu0 0.0
        %1465 = vmatprep.subr.mxu0 0.0
        %1466 = vmatpush1.xpose.msra.mxu0 0.0
        %1467 = vmatprep.subr.mxu0 0.0
        %1468 = vmatpush1.xpose.msra.mxu0 0.0
        %1469 = vmatprep.subr.mxu0 0.0
        %1470 = vmatpush1.xpose.msra.mxu0 0.0
        %1471 = vmatprep.subr.mxu0 0.0
        %1472 = vmatpush1.xpose.msra.mxu0 0.0
        %1473 = vmatprep.subr.mxu0 0.0
        %1474 = vmatpush1.xpose.msra.mxu0 0.0
        %1475 = vmatprep.subr.mxu0 0.0
        %1476 = vmatpush1.xpose.msra.mxu0 0.0
        %1477 = vmatprep.subr.mxu0 0.0
        %1478 = vmatpush1.xpose.msra.mxu0 0.0
        %1479 = vmatprep.subr.mxu0 0.0
        %1480 = vmatpush1.xpose.msra.mxu0 0.0
        %1481 = vmatprep.subr.mxu0 0.0
        %1482 = vmatpush1.xpose.msra.mxu0 0.0
        %1483 = vmatprep.subr.mxu0 0.0
        %1484 = vmatpush1.xpose.msra.mxu0 0.0
        %1485 = vmatprep.subr.mxu0 0.0
        %1486 = vmatpush1.xpose.msra.mxu0 0.0
        %1487 = vmatprep.subr.mxu0 0.0
        %1488 = vmatpush1.xpose.msra.mxu0 0.0
        %1489 = vmatprep.subr.mxu0 0.0
        %1490 = vmatpush1.xpose.msra.mxu0 0.0
        %1491 = vmatprep.subr.mxu0 0.0
        %1492 = vmatpush1.xpose.msra.mxu0 0.0
        %1493 = vmatprep.subr.mxu0 0.0
        %1494 = vmatpush1.xpose.msra.mxu0 0.0
        %1495 = vmatprep.mubr.f32.mxu0 0.0
        %1496 = vmatmul.mubr.f32.gmra.mrb[0].mxu0 %v1423
        %v1497 = vpop.f32.mrb[0].mxu0
        %v1498 = vadd.f32 0.0, %v1497
        %v1499 = vpop.f32.mrb[0].mxu0
        %1500 = vmatprep.mubr.f32.mxu0 0.0
        %1501 = vmatmul.mubr.f32.gmra.mrb[0].mxu0 %v1425
        %v1502 = vpop.f32.mrb[0].mxu0
        %v1503 = vadd.f32 0.0, %v1502
        %v1504 = vpop.f32.mrb[0].mxu0
        %1505 = vdwg.mxu0
        %v1506 = vmul.f32 %v1498, 0.35355338
        %v1507 = vmul.f32 %v1503, 0.35355338
        %v1508 = vadd.f32 %v1506, %v1097
        %v1509 = vadd.f32 %v1507, %v1097
        %v1510 = vsel %vm1101, %v1508, -inf
        %1511 = vmax.xlane.f32.xlu0 %v1510
        %v1512 = vpop.xlane.xlu0 %1511
        %v1513 = vsel %vm1101, %v1509, -inf
        %1514 = vmax.xlane.f32.xlu0 %v1513
        %v1515 = vpop.xlane.xlu0 %1514
        %v1516 = vsub.f32 %v1508, %v1512
        %v1517 = vsub.f32 %v1509, %v1515
        %v1518 = vmul.f32 %v1516, 1.442695
        %v1519 = vpow.pop %v1518
        %v1520 = vmul.f32 %v1517, 1.442695
        %v1521 = vpow.pop %v1520
        %v1522 = vsel %vm1101, %v1519, 0.0
        %1523 = vadd.xlane.f32.xlu0 %v1522
        %v1524 = vpop.xlane.xlu0 %1523
        %v1525 = vsel %vm1101, %v1521, 0.0
        %1526 = vadd.xlane.f32.xlu0 %v1525
        %v1527 = vpop.xlane.xlu0 %1526
        %v1528 = vrcp.pop %v1524
        %v1529 = vrcp.pop %v1527
        %v1530 = vmul.f32 %v1519, %v1528
        %v1531 = vmul.f32 %v1521, %v1529
        %1532 = vrot.lane.b32.xlu0 %v993, 64
        %v1533 = vpop.permute.xlu0 %1532
        %1534 = vrot.lane.b32.xlu0 %v998, 64
        %v1535 = vpop.permute.xlu0 %1534
        %v1539 = vsel %vm1101, %v1530, 0
        %v1542 = vsel %vm1101, %v1531, 0
        %1544 = vmatprep.subr.mxu0 0.0
        %1545 = vmatpush1.msra.mxu0 %v1533
        %1546 = vmatprep.subr.mxu0 0.0
        %1547 = vmatpush1.msra.mxu0 %v1535
        %1548 = vmatprep.subr.mxu0 0.0
        %1549 = vmatpush1.msra.mxu0 0.0
        %1550 = vmatprep.subr.mxu0 0.0
        %1551 = vmatpush1.msra.mxu0 0.0
        %1552 = vmatprep.subr.mxu0 0.0
        %1553 = vmatpush1.msra.mxu0 0.0
        %1554 = vmatprep.subr.mxu0 0.0
        %1555 = vmatpush1.msra.mxu0 0.0
        %1556 = vmatprep.subr.mxu0 0.0
        %1557 = vmatpush1.msra.mxu0 0.0
        %1558 = vmatprep.subr.mxu0 0.0
        %1559 = vmatpush1.msra.mxu0 0.0
        %1560 = vmatprep.subr.mxu0 0.0
        %1561 = vmatpush1.msra.mxu0 0.0
        %1562 = vmatprep.subr.mxu0 0.0
        %1563 = vmatpush1.msra.mxu0 0.0
        %1564 = vmatprep.subr.mxu0 0.0
        %1565 = vmatpush1.msra.mxu0 0.0
        %1566 = vmatprep.subr.mxu0 0.0
        %1567 = vmatpush1.msra.mxu0 0.0
        %1568 = vmatprep.subr.mxu0 0.0
        %1569 = vmatpush1.msra.mxu0 0.0
        %1570 = vmatprep.subr.mxu0 0.0
        %1571 = vmatpush1.msra.mxu0 0.0
        %1572 = vmatprep.subr.mxu0 0.0
        %1573 = vmatpush1.msra.mxu0 0.0
        %1574 = vmatprep.subr.mxu0 0.0
        %1575 = vmatpush1.msra.mxu0 0.0
        %1576 = vmatprep.subr.mxu0 0.0
        %1577 = vmatpush1.msra.mxu0 0.0
        %1578 = vmatprep.subr.mxu0 0.0
        %1579 = vmatpush1.msra.mxu0 0.0
        %1580 = vmatprep.subr.mxu0 0.0
        %1581 = vmatpush1.msra.mxu0 0.0
        %1582 = vmatprep.subr.mxu0 0.0
        %1583 = vmatpush1.msra.mxu0 0.0
        %1584 = vmatprep.subr.mxu0 0.0
        %1585 = vmatpush1.msra.mxu0 0.0
        %1586 = vmatprep.subr.mxu0 0.0
        %1587 = vmatpush1.msra.mxu0 0.0
        %1588 = vmatprep.subr.mxu0 0.0
        %1589 = vmatpush1.msra.mxu0 0.0
        %1590 = vmatprep.subr.mxu0 0.0
        %1591 = vmatpush1.msra.mxu0 0.0
        %1592 = vmatprep.subr.mxu0 0.0
        %1593 = vmatpush1.msra.mxu0 0.0
        %1594 = vmatprep.subr.mxu0 0.0
        %1595 = vmatpush1.msra.mxu0 0.0
        %1596 = vmatprep.subr.mxu0 0.0
        %1597 = vmatpush1.msra.mxu0 0.0
        %1598 = vmatprep.subr.mxu0 0.0
        %1599 = vmatpush1.msra.mxu0 0.0
        %1600 = vmatprep.subr.mxu0 0.0
        %1601 = vmatpush1.msra.mxu0 0.0
        %1602 = vmatprep.subr.mxu0 0.0
        %1603 = vmatpush1.msra.mxu0 0.0
        %1604 = vmatprep.subr.mxu0 0.0
        %1605 = vmatpush1.msra.mxu0 0.0
        %1606 = vmatprep.subr.mxu0 0.0
        %1607 = vmatpush1.msra.mxu0 0.0
        %1608 = vmatprep.mubr.f32.mxu0 0.0
        %1609 = vmatmul.mubr.f32.gmra.mrb[0].mxu0 %v1539
        %v1610 = vpop.f32.mrb[0].mxu0
        %v1611 = vadd.f32 0.0, %v1610
        %v1612 = vpop.f32.mrb[0].mxu0
        %1613 = vmatprep.mubr.f32.mxu0 0.0
        %1614 = vmatmul.mubr.f32.gmra.mrb[0].mxu0 %v1542
        %v1615 = vpop.f32.mrb[0].mxu0
        %v1616 = vadd.f32 0.0, %v1615
        %v1617 = vpop.f32.mrb[0].mxu0
        %1618 = vdwg.mxu0
        %1619 = vrot.lane.b32.xlu0 %v993, 56
        %v1620 = vpop.permute.xlu0 %1619
        %1621 = vrot.lane.b32.xlu0 %v998, 56
        %v1622 = vpop.permute.xlu0 %1621
        %1623 = vrot.lane.b32.xlu0 %v993, 48
        %v1624 = vpop.permute.xlu0 %1623
        %1625 = vrot.lane.b32.xlu0 %v998, 48
        %v1626 = vpop.permute.xlu0 %1625
        %v1627 = vsel %vm1007, %v1620, 0
        %v1629 = vsel %vm1007, %v1622, 0
        %v1631 = vsel %vm1007, %v1624, 0
        %v1633 = vsel %vm1007, %v1626, 0
        %1635 = vmatprep.subr.mxu0 0.0
        %1636 = vmatpush1.xpose.msra.mxu0 %v1631
        %1637 = vmatprep.subr.mxu0 0.0
        %1638 = vmatpush1.xpose.msra.mxu0 %v1633
        %1639 = vmatprep.subr.mxu0 0.0
        %1640 = vmatpush1.xpose.msra.mxu0 0.0
        %1641 = vmatprep.subr.mxu0 0.0
        %1642 = vmatpush1.xpose.msra.mxu0 0.0
        %1643 = vmatprep.subr.mxu0 0.0
        %1644 = vmatpush1.xpose.msra.mxu0 0.0
        %1645 = vmatprep.subr.mxu0 0.0
        %1646 = vmatpush1.xpose.msra.mxu0 0.0
        %1647 = vmatprep.subr.mxu0 0.0
        %1648 = vmatpush1.xpose.msra.mxu0 0.0
        %1649 = vmatprep.subr.mxu0 0.0
        %1650 = vmatpush1.xpose.msra.mxu0 0.0
        %1651 = vmatprep.subr.mxu0 0.0
        %1652 = vmatpush1.xpose.msra.mxu0 0.0
        %1653 = vmatprep.subr.mxu0 0.0
        %1654 = vmatpush1.xpose.msra.mxu0 0.0
        %1655 = vmatprep.subr.mxu0 0.0
        %1656 = vmatpush1.xpose.msra.mxu0 0.0
        %1657 = vmatprep.subr.mxu0 0.0
        %1658 = vmatpush1.xpose.msra.mxu0 0.0
        %1659 = vmatprep.subr.mxu0 0.0
        %1660 = vmatpush1.xpose.msra.mxu0 0.0
        %1661 = vmatprep.subr.mxu0 0.0
        %1662 = vmatpush1.xpose.msra.mxu0 0.0
        %1663 = vmatprep.subr.mxu0 0.0
        %1664 = vmatpush1.xpose.msra.mxu0 0.0
        %1665 = vmatprep.subr.mxu0 0.0
        %1666 = vmatpush1.xpose.msra.mxu0 0.0
        %1667 = vmatprep.subr.mxu0 0.0
        %1668 = vmatpush1.xpose.msra.mxu0 0.0
        %1669 = vmatprep.subr.mxu0 0.0
        %1670 = vmatpush1.xpose.msra.mxu0 0.0
        %1671 = vmatprep.subr.mxu0 0.0
        %1672 = vmatpush1.xpose.msra.mxu0 0.0
        %1673 = vmatprep.subr.mxu0 0.0
        %1674 = vmatpush1.xpose.msra.mxu0 0.0
        %1675 = vmatprep.subr.mxu0 0.0
        %1676 = vmatpush1.xpose.msra.mxu0 0.0
        %1677 = vmatprep.subr.mxu0 0.0
        %1678 = vmatpush1.xpose.msra.mxu0 0.0
        %1679 = vmatprep.subr.mxu0 0.0
        %1680 = vmatpush1.xpose.msra.mxu0 0.0
        %1681 = vmatprep.subr.mxu0 0.0
        %1682 = vmatpush1.xpose.msra.mxu0 0.0
        %1683 = vmatprep.subr.mxu0 0.0
        %1684 = vmatpush1.xpose.msra.mxu0 0.0
        %1685 = vmatprep.subr.mxu0 0.0
        %1686 = vmatpush1.xpose.msra.mxu0 0.0
        %1687 = vmatprep.subr.mxu0 0.0
        %1688 = vmatpush1.xpose.msra.mxu0 0.0
        %1689 = vmatprep.subr.mxu0 0.0
        %1690 = vmatpush1.xpose.msra.mxu0 0.0
        %1691 = vmatprep.subr.mxu0 0.0
        %1692 = vmatpush1.xpose.msra.mxu0 0.0
        %1693 = vmatprep.subr.mxu0 0.0
        %1694 = vmatpush1.xpose.msra.mxu0 0.0
        %1695 = vmatprep.subr.mxu0 0.0
        %1696 = vmatpush1.xpose.msra.mxu0 0.0
        %1697 = vmatprep.subr.mxu0 0.0
        %1698 = vmatpush1.xpose.msra.mxu0 0.0
        %1699 = vmatprep.mubr.f32.mxu0 0.0
        %1700 = vmatmul.mubr.f32.gmra.mrb[0].mxu0 %v1627
        %v1701 = vpop.f32.mrb[0].mxu0
        %v1702 = vadd.f32 0.0, %v1701
        %v1703 = vpop.f32.mrb[0].mxu0
        %1704 = vmatprep.mubr.f32.mxu0 0.0
        %1705 = vmatmul.mubr.f32.gmra.mrb[0].mxu0 %v1629
        %v1706 = vpop.f32.mrb[0].mxu0
        %v1707 = vadd.f32 0.0, %v1706
        %v1708 = vpop.f32.mrb[0].mxu0
        %1709 = vdwg.mxu0
        %v1710 = vmul.f32 %v1702, 0.35355338
        %v1711 = vmul.f32 %v1707, 0.35355338
        %v1712 = vadd.f32 %v1710, %v1097
        %v1713 = vadd.f32 %v1711, %v1097
        %v1714 = vsel %vm1101, %v1712, -inf
        %1715 = vmax.xlane.f32.xlu0 %v1714
        %v1716 = vpop.xlane.xlu0 %1715
        %v1717 = vsel %vm1101, %v1713, -inf
        %1718 = vmax.xlane.f32.xlu0 %v1717
        %v1719 = vpop.xlane.xlu0 %1718
        %v1720 = vsub.f32 %v1712, %v1716
        %v1721 = vsub.f32 %v1713, %v1719
        %v1722 = vmul.f32 %v1720, 1.442695
        %v1723 = vpow.pop %v1722
        %v1724 = vmul.f32 %v1721, 1.442695
        %v1725 = vpow.pop %v1724
        %v1726 = vsel %vm1101, %v1723, 0.0
        %1727 = vadd.xlane.f32.xlu0 %v1726
        %v1728 = vpop.xlane.xlu0 %1727
        %v1729 = vsel %vm1101, %v1725, 0.0
        %1730 = vadd.xlane.f32.xlu0 %v1729
        %v1731 = vpop.xlane.xlu0 %1730
        %v1732 = vrcp.pop %v1728
        %v1733 = vrcp.pop %v1731
        %v1734 = vmul.f32 %v1723, %v1732
        %v1735 = vmul.f32 %v1725, %v1733
        %1736 = vrot.lane.b32.xlu0 %v993, 40
        %v1737 = vpop.permute.xlu0 %1736
        %1738 = vrot.lane.b32.xlu0 %v998, 40
        %v1739 = vpop.permute.xlu0 %1738
        %v1743 = vsel %vm1101, %v1734, 0
        %v1746 = vsel %vm1101, %v1735, 0
        %1748 = vmatprep.subr.mxu0 0.0
        %1749 = vmatpush1.msra.mxu0 %v1737
        %1750 = vmatprep.subr.mxu0 0.0
        %1751 = vmatpush1.msra.mxu0 %v1739
        %1752 = vmatprep.subr.mxu0 0.0
        %1753 = vmatpush1.msra.mxu0 0.0
        %1754 = vmatprep.subr.mxu0 0.0
        %1755 = vmatpush1.msra.mxu0 0.0
        %1756 = vmatprep.subr.mxu0 0.0
        %1757 = vmatpush1.msra.mxu0 0.0
        %1758 = vmatprep.subr.mxu0 0.0
        %1759 = vmatpush1.msra.mxu0 0.0
        %1760 = vmatprep.subr.mxu0 0.0
        %1761 = vmatpush1.msra.mxu0 0.0
        %1762 = vmatprep.subr.mxu0 0.0
        %1763 = vmatpush1.msra.mxu0 0.0
        %1764 = vmatprep.subr.mxu0 0.0
        %1765 = vmatpush1.msra.mxu0 0.0
        %1766 = vmatprep.subr.mxu0 0.0
        %1767 = vmatpush1.msra.mxu0 0.0
        %1768 = vmatprep.subr.mxu0 0.0
        %1769 = vmatpush1.msra.mxu0 0.0
        %1770 = vmatprep.subr.mxu0 0.0
        %1771 = vmatpush1.msra.mxu0 0.0
        %1772 = vmatprep.subr.mxu0 0.0
        %1773 = vmatpush1.msra.mxu0 0.0
        %1774 = vmatprep.subr.mxu0 0.0
        %1775 = vmatpush1.msra.mxu0 0.0
        %1776 = vmatprep.subr.mxu0 0.0
        %1777 = vmatpush1.msra.mxu0 0.0
        %1778 = vmatprep.subr.mxu0 0.0
        %1779 = vmatpush1.msra.mxu0 0.0
        %1780 = vmatprep.subr.mxu0 0.0
        %1781 = vmatpush1.msra.mxu0 0.0
        %1782 = vmatprep.subr.mxu0 0.0
        %1783 = vmatpush1.msra.mxu0 0.0
        %1784 = vmatprep.subr.mxu0 0.0
        %1785 = vmatpush1.msra.mxu0 0.0
        %1786 = vmatprep.subr.mxu0 0.0
        %1787 = vmatpush1.msra.mxu0 0.0
        %1788 = vmatprep.subr.mxu0 0.0
        %1789 = vmatpush1.msra.mxu0 0.0
        %1790 = vmatprep.subr.mxu0 0.0
        %1791 = vmatpush1.msra.mxu0 0.0
        %1792 = vmatprep.subr.mxu0 0.0
        %1793 = vmatpush1.msra.mxu0 0.0
        %1794 = vmatprep.subr.mxu0 0.0
        %1795 = vmatpush1.msra.mxu0 0.0
        %1796 = vmatprep.subr.mxu0 0.0
        %1797 = vmatpush1.msra.mxu0 0.0
        %1798 = vmatprep.subr.mxu0 0.0
        %1799 = vmatpush1.msra.mxu0 0.0
        %1800 = vmatprep.subr.mxu0 0.0
        %1801 = vmatpush1.msra.mxu0 0.0
        %1802 = vmatprep.subr.mxu0 0.0
        %1803 = vmatpush1.msra.mxu0 0.0
        %1804 = vmatprep.subr.mxu0 0.0
        %1805 = vmatpush1.msra.mxu0 0.0
        %1806 = vmatprep.subr.mxu0 0.0
        %1807 = vmatpush1.msra.mxu0 0.0
        %1808 = vmatprep.subr.mxu0 0.0
        %1809 = vmatpush1.msra.mxu0 0.0
        %1810 = vmatprep.subr.mxu0 0.0
        %1811 = vmatpush1.msra.mxu0 0.0
        %1812 = vmatprep.mubr.f32.mxu0 0.0
        %1813 = vmatmul.mubr.f32.gmra.mrb[0].mxu0 %v1743
        %v1814 = vpop.f32.mrb[0].mxu0
        %v1815 = vadd.f32 0.0, %v1814
        %v1816 = vpop.f32.mrb[0].mxu0
        %1817 = vmatprep.mubr.f32.mxu0 0.0
        %1818 = vmatmul.mubr.f32.gmra.mrb[0].mxu0 %v1746
        %v1819 = vpop.f32.mrb[0].mxu0
        %v1820 = vadd.f32 0.0, %v1819
        %v1821 = vpop.f32.mrb[0].mxu0
        %1822 = vdwg.mxu0
        %1825 = vrot.lane.b32.xlu0 %v1407, 8
        %v1826 = vpop.permute.xlu0 %1825
        %1827 = vrot.lane.b32.xlu0 %v1412, 8
        %v1828 = vpop.permute.xlu0 %1827
        %1833 = vrot.lane.b32.xlu0 %v1611, 16
        %v1834 = vpop.permute.xlu0 %1833
        %1835 = vrot.lane.b32.xlu0 %v1616, 16
        %v1836 = vpop.permute.xlu0 %1835
        %1841 = vrot.lane.b32.xlu0 %v1815, 24
        %v1842 = vpop.permute.xlu0 %1841
        %1843 = vrot.lane.b32.xlu0 %v1820, 24
        %v1844 = vpop.permute.xlu0 %1843
        %v1847 = vsel %vm1007, %v1203, %v1826
        %v1848 = vsel %vm1007, %v1208, %v1828
        %v1849 = vsel %vm1101, %v1847, %v1834
        %v1850 = vsel %vm1101, %v1848, %v1836
        %vm1851 = vcmask 195584
        %v1852 = vsel %vm1851, %v1849, %v1842
        %v1853 = vsel %vm1851, %v1850, %v1844
        %v1854 = vld [vmem:[#allocation11] sm:$0xff]
        %v1855 = vld [vmem:[#allocation11 + $0x8] sm:$0xff]
        %v1856 = vld [vmem:[#allocation11 + $0x10] sm:$0xff]
        %v1857 = vld [vmem:[#allocation11 + $0x18] sm:$0xff]
        %v1858 = vld [vmem:[#allocation13] sm:$0x1]
        %v1860 = vlaneseq
        %v1861 = vshrl.u32 %v1860, 7
        %v1862 = vsub.s32 0, %v1861
        %v1863 = vrot.slane %v1858, %v1862
        %v1866 = vsel %vm919, %v1852, 0
        %v1869 = vsel %vm919, %v1853, 0
        %1871 = vmatprep.subr.mxu0 0.0
        %1872 = vmatpush1.msra.mxu0 %v1854
        %1873 = vmatprep.subr.mxu0 0.0
        %1874 = vmatpush1.msra.mxu0 %v1855
        %1875 = vmatprep.subr.mxu0 0.0
        %1876 = vmatpush1.msra.mxu0 %v1856
        %1877 = vmatprep.subr.mxu0 0.0
        %1878 = vmatpush1.msra.mxu0 %v1857
        %1879 = vmatprep.subr.mxu0 0.0
        %1880 = vmatpush1.msra.mxu0 0.0
        %1881 = vmatprep.subr.mxu0 0.0
        %1882 = vmatpush1.msra.mxu0 0.0
        %1883 = vmatprep.subr.mxu0 0.0
        %1884 = vmatpush1.msra.mxu0 0.0
        %1885 = vmatprep.subr.mxu0 0.0
        %1886 = vmatpush1.msra.mxu0 0.0
        %1887 = vmatprep.subr.mxu0 0.0
        %1888 = vmatpush1.msra.mxu0 0.0
        %1889 = vmatprep.subr.mxu0 0.0
        %1890 = vmatpush1.msra.mxu0 0.0
        %1891 = vmatprep.subr.mxu0 0.0
        %1892 = vmatpush1.msra.mxu0 0.0
        %1893 = vmatprep.subr.mxu0 0.0
        %1894 = vmatpush1.msra.mxu0 0.0
        %1895 = vmatprep.subr.mxu0 0.0
        %1896 = vmatpush1.msra.mxu0 0.0
        %1897 = vmatprep.subr.mxu0 0.0
        %1898 = vmatpush1.msra.mxu0 0.0
        %1899 = vmatprep.subr.mxu0 0.0
        %1900 = vmatpush1.msra.mxu0 0.0
        %1901 = vmatprep.subr.mxu0 0.0
        %1902 = vmatpush1.msra.mxu0 0.0
        %1903 = vmatprep.subr.mxu0 0.0
        %1904 = vmatpush1.msra.mxu0 0.0
        %1905 = vmatprep.subr.mxu0 0.0
        %1906 = vmatpush1.msra.mxu0 0.0
        %1907 = vmatprep.subr.mxu0 0.0
        %1908 = vmatpush1.msra.mxu0 0.0
        %1909 = vmatprep.subr.mxu0 0.0
        %1910 = vmatpush1.msra.mxu0 0.0
        %1911 = vmatprep.subr.mxu0 0.0
        %1912 = vmatpush1.msra.mxu0 0.0
        %1913 = vmatprep.subr.mxu0 0.0
        %1914 = vmatpush1.msra.mxu0 0.0
        %1915 = vmatprep.subr.mxu0 0.0
        %1916 = vmatpush1.msra.mxu0 0.0
        %1917 = vmatprep.subr.mxu0 0.0
        %1918 = vmatpush1.msra.mxu0 0.0
        %1919 = vmatprep.subr.mxu0 0.0
        %1920 = vmatpush1.msra.mxu0 0.0
        %1921 = vmatprep.subr.mxu0 0.0
        %1922 = vmatpush1.msra.mxu0 0.0
        %1923 = vmatprep.subr.mxu0 0.0
        %1924 = vmatpush1.msra.mxu0 0.0
        %1925 = vmatprep.subr.mxu0 0.0
        %1926 = vmatpush1.msra.mxu0 0.0
        %1927 = vmatprep.subr.mxu0 0.0
        %1928 = vmatpush1.msra.mxu0 0.0
        %1929 = vmatprep.subr.mxu0 0.0
        %1930 = vmatpush1.msra.mxu0 0.0
        %1931 = vmatprep.subr.mxu0 0.0
        %1932 = vmatpush1.msra.mxu0 0.0
        %1933 = vmatprep.subr.mxu0 0.0
        %1934 = vmatpush1.msra.mxu0 0.0
        %1935 = vmatprep.mubr.f32.mxu0 0.0
        %1936 = vmatmul.mubr.f32.gmra.mrb[0].mxu0 %v1866
        %v1937 = vpop.f32.mrb[0].mxu0
        %v1938 = vadd.f32 %v1863, %v1937
        %v1939 = vpop.f32.mrb[0].mxu0
        %1940 = vmatprep.mubr.f32.mxu0 0.0
        %1941 = vmatmul.mubr.f32.gmra.mrb[0].mxu0 %v1869
        %v1942 = vpop.f32.mrb[0].mxu0
        %v1943 = vadd.f32 %v1863, %v1942
        %v1944 = vpop.f32.mrb[0].mxu0
        %1945 = vdwg.mxu0
        %v1946 = vadd.f32 %v900, %v1938
        %v1947 = vadd.f32 %v901, %v1943
        %v1948 = vld [vmem:[#allocation14] sm:$0x1]
        %v1949 = vld [vmem:[#allocation16] sm:$0x1]
        %v1950 = vsel %vm919, %v1946, 0.0
        %1951 = vadd.xlane.f32.xlu0 %v1950
        %v1952 = vpop.xlane.xlu0 %1951
        %v1953 = vsel %vm919, %v1947, 0.0
        %1954 = vadd.xlane.f32.xlu0 %v1953
        %v1955 = vpop.xlane.xlu0 %1954
        %v1956 = vrcp.pop 32.0
        %v1957 = vmul.f32 %v1952, %v1956
        %v1958 = vmul.f32 %v1955, %v1956
        %v1959 = vsub.f32 %v1946, %v1957
        %v1960 = vsub.f32 %v1947, %v1958
        %v1961 = vmul.f32 %v1959, %v1959
        %v1962 = vmul.f32 %v1960, %v1960
        %v1963 = vsel %vm919, %v1961, 0.0
        %1964 = vadd.xlane.f32.xlu0 %v1963
        %v1965 = vpop.xlane.xlu0 %1964
        %v1966 = vsel %vm919, %v1962, 0.0
        %1967 = vadd.xlane.f32.xlu0 %v1966
        %v1968 = vpop.xlane.xlu0 %1967
        %v1969 = vmul.f32 %v1965, %v1956
        %v1970 = vmul.f32 %v1968, %v1956
        %v1971 = vadd.f32 %v1969, 1e-05
        %v1972 = vadd.f32 %v1970, 1e-05
        %v1973 = vrsqrt.pop %v1971
        %v1974 = vrsqrt.pop %v1972
        %v1975 = vmul.f32 %v1959, %v1973
        %v1976 = vmul.f32 %v1960, %v1974
        %v1978 = vlaneseq
        %v1979 = vshrl.u32 %v1978, 7
        %v1980 = vsub.s32 0, %v1979
        %v1981 = vrot.slane %v1948, %v1980
        %v1983 = vmul.f32 %v1975, %v1981
        %v1984 = vmul.f32 %v1976, %v1981
        %v1986 = vlaneseq
        %v1987 = vshrl.u32 %v1986, 7
        %v1988 = vsub.s32 0, %v1987
        %v1989 = vrot.slane %v1949, %v1988
        %v1991 = vadd.f32 %v1983, %v1989
        %v1992 = vadd.f32 %v1984, %v1989
        %v1993 = vsel %vm906, 1, 0
        %v1994 = vsel %vm907, 1, 0
        %1995 = vset.pattern.permute.xlu0 0
        %1996 = vperm.xlu0 %1995, %v1993
        %v1997 = vpop.permute.xlu0 %1996
        %1998 = vset.pattern.permute.xlu0 0
        %1999 = vperm.xlu0 %1998, %v1994
        %v2000 = vpop.permute.xlu0 %1999
        %vm2001 = vcmp.eq.s32.totalorder %v1997, 1
        %vm2002 = vcmp.eq.s32.totalorder %v2000, 1
        %v2003 = vsel %vm2001, 0.0, %v1991
        %v2004 = vsel %vm2002, 0.0, %v1992
        %v2005 = vlaneseq
        %v2006 = vshrl.u32 %v2005, 7
        %v2007 = vadd.s32 %v2006, 8
        %vm2008 = vcmp.ge.s32.totalorder %v2006, 4294967295
        %vm2009 = vcmp.ge.s32.totalorder %v2007, 4294967295
        %vm2010 = vcmp.lt.s32.totalorder %v2006, 15
        %vm2011 = vcmp.lt.s32.totalorder %v2007, 15
        %vm2012 = vmand %vm2008, %vm2010
        %vm2013 = vmand %vm2009, %vm2011
        %vm2014 = vcmp.ge.s32.totalorder %v2006, 1
        %vm2015 = vcmp.ge.s32.totalorder %v2007, 1
        %vm2016 = vcmp.lt.s32.totalorder %v2006, 17
        %vm2017 = vcmp.lt.s32.totalorder %v2007, 17
        %vm2018 = vmand %vm2014, %vm2016
        %vm2019 = vmand %vm2015, %vm2017
        %v2020 = vrot.slane %v2003, 7
        %v2021 = vrot.slane %v2004, 7
        %vm2022 = vcmp.lt.s32.totalorder %v2006, 1
        %v2023 = vsel %vm2022, %v2020, %v2021
        %v2024 = vsel %vm2022, %v2021, %v2020
        %v2025 = vsel %vm2018, 1, 0
        %v2026 = vsel %vm2019, 1, 0
        %vm2027 = vcmp.eq.s32.totalorder %v2025, 1
        %vm2028 = vcmp.eq.s32.totalorder %v2026, 1
        %v2029 = vsel %vm2027, %v2024, 0.0
        %v2030 = vsel %vm2028, %v2023, 0.0
        %v2031 = vld [vmem:[#allocation17] sm:$0x1]
        %v2032 = vlaneseq
        %v2033 = vshrl.u32 %v2032, 7
        %v2034 = vsub.s32 0, %v2033
        %v2035 = vrot.slane %v2031, %v2034
        %v2036 = vmul.f32 %v2029, %v2035
        %v2037 = vmul.f32 %v2030, %v2035
        %v2038 = vld [vmem:[#allocation17 + $0x1] sm:$0x1]
        %v2039 = vlaneseq
        %v2040 = vshrl.u32 %v2039, 7
        %v2041 = vsub.s32 0, %v2040
        %v2042 = vrot.slane %v2038, %v2041
        %v2043 = vmul.f32 %v2003, %v2042
        %v2044 = vmul.f32 %v2004, %v2042
        %v2045 = vadd.f32 %v2036, %v2043
        %v2046 = vadd.f32 %v2037, %v2044
        %v2047 = vrot.slane %v2003, 1
        %v2048 = vrot.slane %v2004, 1
        %vm2049 = vcmp.lt.s32.totalorder %v2006, 7
        %v2050 = vsel %vm2049, %v2047, %v2048
        %v2051 = vsel %vm2049, %v2048, %v2047
        %v2052 = vsel %vm2012, 1, 0
        %v2053 = vsel %vm2013, 1, 0
        %vm2054 = vcmp.eq.s32.totalorder %v2052, 1
        %vm2055 = vcmp.eq.s32.totalorder %v2053, 1
        %v2056 = vsel %vm2054, %v2050, 0.0
        %v2057 = vsel %vm2055, %v2051, 0.0
        %v2058 = vld [vmem:[#allocation17 + $0x2] sm:$0x1]
        %v2059 = vlaneseq
        %v2060 = vshrl.u32 %v2059, 7
        %v2061 = vsub.s32 0, %v2060
        %v2062 = vrot.slane %v2058, %v2061
        %v2063 = vmul.f32 %v2056, %v2062
        %v2064 = vmul.f32 %v2057, %v2062
        %v2065 = vadd.f32 %v2045, %v2063
        %v2066 = vadd.f32 %v2046, %v2064
        %v2067 = vld [vmem:[#allocation19] sm:$0x1]
        %v2069 = vlaneseq
        %v2070 = vshrl.u32 %v2069, 7
        %v2071 = vsub.s32 0, %v2070
        %v2072 = vrot.slane %v2067, %v2071
        %v2074 = vadd.f32 %v2065, %v2072
        %v2075 = vadd.f32 %v2066, %v2072
        %v2076 = vld [vmem:[#allocation20] sm:$0xff]
        %v2077 = vld [vmem:[#allocation20 + $0x8] sm:$0xff]
        %v2078 = vld [vmem:[#allocation20 + $0x10] sm:$0xff]
        %v2079 = vld [vmem:[#allocation20 + $0x18] sm:$0xff]
        %v2080 = vld [vmem:[#allocation22] sm:$0x1]
        %v2082 = vlaneseq
        %v2083 = vshrl.u32 %v2082, 7
        %v2084 = vsub.s32 0, %v2083
        %v2085 = vrot.slane %v2080, %v2084
        %v2088 = vsel %vm919, %v2074, 0
        %v2091 = vsel %vm919, %v2075, 0
        %2093 = vmatprep.subr.mxu0 0.0
        %2094 = vmatpush1.msra.mxu0 %v2076
        %2095 = vmatprep.subr.mxu0 0.0
        %2096 = vmatpush1.msra.mxu0 %v2077
        %2097 = vmatprep.subr.mxu0 0.0
        %2098 = vmatpush1.msra.mxu0 %v2078
        %2099 = vmatprep.subr.mxu0 0.0
        %2100 = vmatpush1.msra.mxu0 %v2079
        %2101 = vmatprep.subr.mxu0 0.0
        %2102 = vmatpush1.msra.mxu0 0.0
        %2103 = vmatprep.subr.mxu0 0.0
        %2104 = vmatpush1.msra.mxu0 0.0
        %2105 = vmatprep.subr.mxu0 0.0
        %2106 = vmatpush1.msra.mxu0 0.0
        %2107 = vmatprep.subr.mxu0 0.0
        %2108 = vmatpush1.msra.mxu0 0.0
        %2109 = vmatprep.subr.mxu0 0.0
        %2110 = vmatpush1.msra.mxu0 0.0
        %2111 = vmatprep.subr.mxu0 0.0
        %2112 = vmatpush1.msra.mxu0 0.0
        %2113 = vmatprep.subr.mxu0 0.0
        %2114 = vmatpush1.msra.mxu0 0.0
        %2115 = vmatprep.subr.mxu0 0.0
        %2116 = vmatpush1.msra.mxu0 0.0
        %2117 = vmatprep.subr.mxu0 0.0
        %2118 = vmatpush1.msra.mxu0 0.0
        %2119 = vmatprep.subr.mxu0 0.0
        %2120 = vmatpush1.msra.mxu0 0.0
        %2121 = vmatprep.subr.mxu0 0.0
        %2122 = vmatpush1.msra.mxu0 0.0
        %2123 = vmatprep.subr.mxu0 0.0
        %2124 = vmatpush1.msra.mxu0 0.0
        %2125 = vmatprep.subr.mxu0 0.0
        %2126 = vmatpush1.msra.mxu0 0.0
        %2127 = vmatprep.subr.mxu0 0.0
        %2128 = vmatpush1.msra.mxu0 0.0
        %2129 = vmatprep.subr.mxu0 0.0
        %2130 = vmatpush1.msra.mxu0 0.0
        %2131 = vmatprep.subr.mxu0 0.0
        %2132 = vmatpush1.msra.mxu0 0.0
        %2133 = vmatprep.subr.mxu0 0.0
        %2134 = vmatpush1.msra.mxu0 0.0
        %2135 = vmatprep.subr.mxu0 0.0
        %2136 = vmatpush1.msra.mxu0 0.0
        %2137 = vmatprep.subr.mxu0 0.0
        %2138 = vmatpush1.msra.mxu0 0.0
        %2139 = vmatprep.subr.mxu0 0.0
        %2140 = vmatpush1.msra.mxu0 0.0
        %2141 = vmatprep.subr.mxu0 0.0
        %2142 = vmatpush1.msra.mxu0 0.0
        %2143 = vmatprep.subr.mxu0 0.0
        %2144 = vmatpush1.msra.mxu0 0.0
        %2145 = vmatprep.subr.mxu0 0.0
        %2146 = vmatpush1.msra.mxu0 0.0
        %2147 = vmatprep.subr.mxu0 0.0
        %2148 = vmatpush1.msra.mxu0 0.0
        %2149 = vmatprep.subr.mxu0 0.0
        %2150 = vmatpush1.msra.mxu0 0.0
        %2151 = vmatprep.subr.mxu0 0.0
        %2152 = vmatpush1.msra.mxu0 0.0
        %2153 = vmatprep.subr.mxu0 0.0
        %2154 = vmatpush1.msra.mxu0 0.0
        %2155 = vmatprep.subr.mxu0 0.0
        %2156 = vmatpush1.msra.mxu0 0.0
        %2157 = vmatprep.mubr.f32.mxu0 0.0
        %2158 = vmatmul.mubr.f32.gmra.mrb[0].mxu0 %v2088
        %v2159 = vpop.f32.mrb[0].mxu0
        %v2160 = vadd.f32 %v2085, %v2159
        %v2161 = vpop.f32.mrb[0].mxu0
        %2162 = vmatprep.mubr.f32.mxu0 0.0
        %2163 = vmatmul.mubr.f32.gmra.mrb[0].mxu0 %v2091
        %v2164 = vpop.f32.mrb[0].mxu0
        %v2165 = vadd.f32 %v2085, %v2164
        %v2166 = vpop.f32.mrb[0].mxu0
        %2167 = vdwg.mxu0
        %v2168 = vmax.f32 %v2160, 0.0
        %v2169 = vmax.f32 %v2165, 0.0
        %v2170 = vrot.slane %v2168, 7
        %v2171 = vrot.slane %v2169, 7
        %v2172 = vsel %vm2022, %v2170, %v2171
        %v2173 = vsel %vm2022, %v2171, %v2170
        %v2174 = vsel %vm2027, %v2173, 0.0
        %v2175 = vsel %vm2028, %v2172, 0.0
        %v2176 = vld [vmem:[#allocation23] sm:$0x1]
        %v2177 = vlaneseq
        %v2178 = vshrl.u32 %v2177, 7
        %v2179 = vsub.s32 0, %v2178
        %v2180 = vrot.slane %v2176, %v2179
        %v2181 = vmul.f32 %v2174, %v2180
        %v2182 = vmul.f32 %v2175, %v2180
        %v2183 = vld [vmem:[#allocation23 + $0x1] sm:$0x1]
        %v2184 = vlaneseq
        %v2185 = vshrl.u32 %v2184, 7
        %v2186 = vsub.s32 0, %v2185
        %v2187 = vrot.slane %v2183, %v2186
        %v2188 = vmul.f32 %v2168, %v2187
        %v2189 = vmul.f32 %v2169, %v2187
        %v2190 = vadd.f32 %v2181, %v2188
        %v2191 = vadd.f32 %v2182, %v2189
        %v2192 = vrot.slane %v2168, 1
        %v2193 = vrot.slane %v2169, 1
        %v2194 = vsel %vm2049, %v2192, %v2193
        %v2195 = vsel %vm2049, %v2193, %v2192
        %v2196 = vsel %vm2054, %v2194, 0.0
        %v2197 = vsel %vm2055, %v2195, 0.0
        %v2198 = vld [vmem:[#allocation23 + $0x2] sm:$0x1]
        %v2199 = vlaneseq
        %v2200 = vshrl.u32 %v2199, 7
        %v2201 = vsub.s32 0, %v2200
        %v2202 = vrot.slane %v2198, %v2201
        %v2203 = vmul.f32 %v2196, %v2202
        %v2204 = vmul.f32 %v2197, %v2202
        %v2205 = vadd.f32 %v2190, %v2203
        %v2206 = vadd.f32 %v2191, %v2204
        %v2207 = vld [vmem:[#allocation25] sm:$0x1]
        %v2209 = vlaneseq
        %v2210 = vshrl.u32 %v2209, 7
        %v2211 = vsub.s32 0, %v2210
        %v2212 = vrot.slane %v2207, %v2211
        %v2214 = vadd.f32 %v2205, %v2212
        %v2215 = vadd.f32 %v2206, %v2212
        %v2216 = vld [vmem:[#allocation26] sm:$0xff]
        %v2217 = vld [vmem:[#allocation26 + $0x8] sm:$0xff]
        %v2218 = vld [vmem:[#allocation26 + $0x10] sm:$0xff]
        %v2219 = vld [vmem:[#allocation26 + $0x18] sm:$0xff]
        %v2220 = vld [vmem:[#allocation26 + $0x20] sm:$0xff]
        %v2221 = vld [vmem:[#allocation26 + $0x28] sm:$0xff]
        %v2222 = vld [vmem:[#allocation26 + $0x30] sm:$0xff]
        %v2223 = vld [vmem:[#allocation26 + $0x38] sm:$0xff]
        %v2224 = vld [vmem:[#allocation28] sm:$0x1]
        %v2226 = vlaneseq
        %v2227 = vshrl.u32 %v2226, 7
        %v2228 = vsub.s32 0, %v2227
        %v2229 = vrot.slane %v2224, %v2228
        %vm2231 = vcmask 523264
        %v2233 = vsel %vm2231, %v2214, 0
        %v2236 = vsel %vm2231, %v2215, 0
        %2238 = vmatprep.subr.mxu0 0.0
        %2239 = vmatpush1.msra.mxu0 %v2216
        %2240 = vmatprep.subr.mxu0 0.0
        %2241 = vmatpush1.msra.mxu0 %v2217
        %2242 = vmatprep.subr.mxu0 0.0
        %2243 = vmatpush1.msra.mxu0 %v2218
        %2244 = vmatprep.subr.mxu0 0.0
        %2245 = vmatpush1.msra.mxu0 %v2219
        %2246 = vmatprep.subr.mxu0 0.0
        %2247 = vmatpush1.msra.mxu0 %v2220
        %2248 = vmatprep.subr.mxu0 0.0
        %2249 = vmatpush1.msra.mxu0 %v2221
        %2250 = vmatprep.subr.mxu0 0.0
        %2251 = vmatpush1.msra.mxu0 %v2222
        %2252 = vmatprep.subr.mxu0 0.0
        %2253 = vmatpush1.msra.mxu0 %v2223
        %2254 = vmatprep.subr.mxu0 0.0
        %2255 = vmatpush1.msra.mxu0 0.0
        %2256 = vmatprep.subr.mxu0 0.0
        %2257 = vmatpush1.msra.mxu0 0.0
        %2258 = vmatprep.subr.mxu0 0.0
        %2259 = vmatpush1.msra.mxu0 0.0
        %2260 = vmatprep.subr.mxu0 0.0
        %2261 = vmatpush1.msra.mxu0 0.0
        %2262 = vmatprep.subr.mxu0 0.0
        %2263 = vmatpush1.msra.mxu0 0.0
        %2264 = vmatprep.subr.mxu0 0.0
        %2265 = vmatpush1.msra.mxu0 0.0
        %2266 = vmatprep.subr.mxu0 0.0
        %2267 = vmatpush1.msra.mxu0 0.0
        %2268 = vmatprep.subr.mxu0 0.0
        %2269 = vmatpush1.msra.mxu0 0.0
        %2270 = vmatprep.subr.mxu0 0.0
        %2271 = vmatpush1.msra.mxu0 0.0
        %2272 = vmatprep.subr.mxu0 0.0
        %2273 = vmatpush1.msra.mxu0 0.0
        %2274 = vmatprep.subr.mxu0 0.0
        %2275 = vmatpush1.msra.mxu0 0.0
        %2276 = vmatprep.subr.mxu0 0.0
        %2277 = vmatpush1.msra.mxu0 0.0
        %2278 = vmatprep.subr.mxu0 0.0
        %2279 = vmatpush1.msra.mxu0 0.0
        %2280 = vmatprep.subr.mxu0 0.0
        %2281 = vmatpush1.msra.mxu0 0.0
        %2282 = vmatprep.subr.mxu0 0.0
        %2283 = vmatpush1.msra.mxu0 0.0
        %2284 = vmatprep.subr.mxu0 0.0
        %2285 = vmatpush1.msra.mxu0 0.0
        %2286 = vmatprep.subr.mxu0 0.0
        %2287 = vmatpush1.msra.mxu0 0.0
        %2288 = vmatprep.subr.mxu0 0.0
        %2289 = vmatpush1.msra.mxu0 0.0
        %2290 = vmatprep.subr.mxu0 0.0
        %2291 = vmatpush1.msra.mxu0 0.0
        %2292 = vmatprep.subr.mxu0 0.0
        %2293 = vmatpush1.msra.mxu0 0.0
        %2294 = vmatprep.subr.mxu0 0.0
        %2295 = vmatpush1.msra.mxu0 0.0
        %2296 = vmatprep.subr.mxu0 0.0
        %2297 = vmatpush1.msra.mxu0 0.0
        %2298 = vmatprep.subr.mxu0 0.0
        %2299 = vmatpush1.msra.mxu0 0.0
        %2300 = vmatprep.subr.mxu0 0.0
        %2301 = vmatpush1.msra.mxu0 0.0
        %2302 = vmatprep.mubr.f32.mxu0 0.0
        %2303 = vmatmul.mubr.f32.gmra.mrb[0].mxu0 %v2233
        %v2304 = vpop.f32.mrb[0].mxu0
        %v2305 = vadd.f32 %v2229, %v2304
        %v2306 = vpop.f32.mrb[0].mxu0
        %2307 = vmatprep.mubr.f32.mxu0 0.0
        %2308 = vmatmul.mubr.f32.gmra.mrb[0].mxu0 %v2236
        %v2309 = vpop.f32.mrb[0].mxu0
        %v2310 = vadd.f32 %v2229, %v2309
        %v2311 = vpop.f32.mrb[0].mxu0
        %2312 = vdwg.mxu0
        %v2313 = vadd.f32 %v2305, %v2003
        %v2314 = vadd.f32 %v2310, %v2004
        %v2315 = vld [vmem:[#allocation29] sm:$0x1]
        %v2316 = vld [vmem:[#allocation31] sm:$0x1]
        %v2317 = vsel %vm919, %v2313, 0.0
        %2318 = vadd.xlane.f32.xlu0 %v2317
        %v2319 = vpop.xlane.xlu0 %2318
        %v2320 = vsel %vm919, %v2314, 0.0
        %2321 = vadd.xlane.f32.xlu0 %v2320
        %v2322 = vpop.xlane.xlu0 %2321
        %v2323 = vmul.f32 %v2319, %v1956
        %v2324 = vmul.f32 %v2322, %v1956
        %v2325 = vsub.f32 %v2313, %v2323
        %v2326 = vsub.f32 %v2314, %v2324
        %v2327 = vmul.f32 %v2325, %v2325
        %v2328 = vmul.f32 %v2326, %v2326
        %v2329 = vsel %vm919, %v2327, 0.0
        %2330 = vadd.xlane.f32.xlu0 %v2329
        %v2331 = vpop.xlane.xlu0 %2330
        %v2332 = vsel %vm919, %v2328, 0.0
        %2333 = vadd.xlane.f32.xlu0 %v2332
        %v2334 = vpop.xlane.xlu0 %2333
        %v2335 = vmul.f32 %v2331, %v1956
        %v2336 = vmul.f32 %v2334, %v1956
        %v2337 = vadd.f32 %v2335, 1e-05
        %v2338 = vadd.f32 %v2336, 1e-05
        %v2339 = vrsqrt.pop %v2337
        %v2340 = vrsqrt.pop %v2338
        %v2341 = vmul.f32 %v2325, %v2339
        %v2342 = vmul.f32 %v2326, %v2340
        %v2344 = vlaneseq
        %v2345 = vshrl.u32 %v2344, 7
        %v2346 = vsub.s32 0, %v2345
        %v2347 = vrot.slane %v2315, %v2346
        %v2349 = vmul.f32 %v2341, %v2347
        %v2350 = vmul.f32 %v2342, %v2347
        %v2352 = vlaneseq
        %v2353 = vshrl.u32 %v2352, 7
        %v2354 = vsub.s32 0, %v2353
        %v2355 = vrot.slane %v2316, %v2354
        %v2357 = vadd.f32 %v2349, %v2355
        %v2358 = vadd.f32 %v2350, %v2355
        %v2359 = vsel %vm2001, 0.0, %v2357
        %v2360 = vsel %vm2002, 0.0, %v2358
        %2361 = vst.msk [vmem:[%s899] sm:$0xff] %vm919, %v2359
        %2362 = vst.msk [vmem:[%s899 + $0x8] sm:$0xff] %vm919, %v2360
        %s2363 = sand.u32 %s469, 1
        %s2364 = scalar_lea.sflag [#allocation4], %s2363
        %s2365 = sand.u32 %s469, 1
        %s2366 = smul.addr %s2365, 16
        %s2367 = scalar_lea.vmem [#allocation32], %s2366
        // Predicated region
        $region173: #{tpu_custom_call.1} parent=95 // pred_check
          %p2368 = pneg %p479
        $region174: #{tpu_custom_call.1} parent=95 // pred_check_branch
          %2370 = sbr.rel (%p2368) target = $region176
        $region175: #{tpu_custom_call.1} parent=95 // pred_region
          %s2372 = ssub.s32 256, 256
          %2373 = vsyncadd %s2364, %s2372
          %s2374 = smul.addr %s47, 2
          %s2375 = smul.addr %s2374, 128
          %s2376 = scalar_lea.hbm %s19, %s2375
          %s2377 = sshll.u32 %s2367, 4
          %s2378 = int_to_ptr.vmem [resolvable:$true] %s2377
          %2383 = dma.vmem_to_hbm [thread:$0]  %s2378, 256, %s2376, %s2364, 128, 128, 8
        $region176: #{tpu_custom_call.1} parent=95 // pred_fallthru
          _
      $region96: #{tpu_custom_call.1} parent=5 // pred_fallthru
        _
      %p2384 = scmp.le.s32.totalorder 2, %s42
      // Predicated region
      $region177: #{tpu_custom_call.1} parent=5 // pred_check
        %p2385 = pneg %p2384
      $region178: #{tpu_custom_call.1} parent=5 // pred_check_branch
        %2387 = sbr.rel (%p2385) target = $region180
      $region179: #{tpu_custom_call.1} parent=5 // pred_region
        %s2388 = ssub.s32 %s42, 2
        // Predicated region
        $region181: #{tpu_custom_call.1} parent=179 // pred_check
          %p2389 = pneg %p485
        $region182: #{tpu_custom_call.1} parent=179 // pred_check_branch
          %2391 = sbr.rel (%p2389) target = $region184
        $region183: #{tpu_custom_call.1} parent=179 // pred_region
          %s2392 = sand.u32 %s470, 1
          %s2393 = scalar_lea.sflag [#allocation4], %s2392
          %s2394 = sand.u32 %s470, 1
          %s2395 = smul.addr %s2394, 16
          %s2396 = scalar_lea.vmem [#allocation32], %s2395
          %2397 = dma.done %s2393, 256
        $region184: #{tpu_custom_call.1} parent=179 // pred_fallthru
          _
      $region180: #{tpu_custom_call.1} parent=5 // pred_fallthru
        _
    $region6: #{tpu_custom_call.1} parent=1 // loop_footer
      %s46 = sadd.s32 1, %s42
    $region7: #{tpu_custom_call.1} parent=1 // loop_footer_branch
      %41 = sbr.rel target = $region3
    $region8: #{tpu_custom_call.1} parent=1 // loop_exit
      _
    %2398 = vsyncpa [#allocation3], 1
    %s2399 = scalar_lea.sflag [#allocation3], 1
    %2400 = vsyncpa %s2399, 1
    %2401 = vsyncpa [#allocation6], 1
    %s2402 = scalar_lea.sflag [#allocation6], 1
    %2403 = vsyncpa %s2402, 1
    %2404 = vsyncpa [#allocation9], 1
    %2405 = vsyncpa [#allocation12], 1
    %2406 = vsyncpa [#allocation15], 1
    %2407 = vsyncpa [#allocation18], 1
    %2408 = vsyncpa [#allocation21], 1
    %2409 = vsyncpa [#allocation24], 1
    %2410 = vsyncpa [#allocation27], 1
    %2411 = vsyncpa [#allocation30], 1
    %2412 = vsyncpa [#allocation4], 1
    %s2413 = scalar_lea.sflag [#allocation4], 1
    %2414 = vsyncpa %s2413, 1

</llo_original>
